<compile_context>
chip_gen: v7x
topology: tpu7x:2x2x1
jax: 0.10.0
libtpu: 0.0.40
codegen_flags: <defaults>
</compile_context>

<pallas_src>
import random

import jax
import jax.numpy as jnp
from jax.experimental import pallas as pl
from jax.experimental.pallas import tpu as pltpu

# ---------------- problem sizes (small, consistent with the module) ----------------
SRC_VOCAB = 32
TGT_VOCAB = 32
EMB = 32
HID = 32            # 4*HID = 128 -> the gate block is exactly one (8,128) vreg
BATCH = 8
SRC_LEN = 8
TGT_LEN = 8
VPAD = 128          # lane-padded vocab width for dense logits stores
TEACHER_FORCING_RATIO = 0.5
NEG_BIG = -1e30     # argmax pad value; assumes |real logits| << 1e30


def _vmem():
    return pl.BlockSpec(memory_space=pltpu.MemorySpace.VMEM)


def _smem():
    return pl.BlockSpec(memory_space=pltpu.MemorySpace.SMEM)


# ----------------------------- fused Pallas kernel ----------------------------------
def seq2seq_kernel(flags_ref,      # (TGT_LEN,) int32 in SMEM     teacher-forcing flags
                   src_proj_ref,   # (SRC_LEN, B, 4H) f32         emb[src]@Wih + b  (enc)
                   tgt_proj_ref,   # (TGT_LEN, B, 4H) f32         emb[tgt]@Wih      (dec)
                   enc_whh_ref,    # (HID, 4H) f32
                   dec_whh_ref,    # (HID, 4H) f32
                   dec_b_ref,      # (1, 4H) f32                  b_ih + b_hh (dec)
                   dec_in_w_ref,   # (TGT_VOCAB, 4H) f32          dec_emb @ Wih (greedy path)
                   wout_ref,       # (HID, VPAD) f32              zero-padded vocab proj
                   bout_ref,       # (1, VPAD) f32                -1e30-padded vocab bias
                   out_ref):       # (TGT_LEN, B, VPAD) f32       per-step logits
    _, B, G4 = src_proj_ref.shape          # G4 = 4*H
    H = G4 // 4
    TV = dec_in_w_ref.shape[0]
    vpad = out_ref.shape[-1]

    # outputs[0] is never written in the reference -> zero only that row.
    out_ref[0] = jnp.zeros((B, vpad), jnp.float32)

    # ----- loop-invariant vregs (hoisted: JAX does not CSE broadcast/iota) -----
    dec_b = dec_b_ref[...]                                               # (1, 4H)
    wout = wout_ref[...]                                                 # (H, VPAD)
    bout = bout_ref[...]                                                 # (1, VPAD)
    lane4h = jax.lax.broadcasted_iota(jnp.int32, (B, G4), 1)
    tanh_mask = (lane4h >= 2 * H) & (lane4h < 3 * H)                     # g-gate lanes
    lane_pad_f = jax.lax.broadcasted_iota(jnp.int32, (B, vpad), 1).astype(jnp.float32)
    lane_tv_f = jax.lax.broadcasted_iota(jnp.int32, (B, TV), 1).astype(jnp.float32)

    def lstm_activations(gates, c):
        # full-vreg activations + lane-mask select (gate order [i|f|g|o], PyTorch)
        sig = jax.nn.sigmoid(gates)
        tnh = jnp.tanh(gates)
        act = jnp.where(tanh_mask, tnh, sig)
        i_g = act[:, 0:H]
        f_g = act[:, H:2 * H]
        g_g = act[:, 2 * H:3 * H]
        o_g = act[:, 3 * H:4 * H]
        c_new = f_g * c + i_g * g_g
        h_new = o_g * jnp.tanh(c_new)
        return h_new, c_new

    h0 = jnp.zeros((B, H), jnp.float32)
    c0 = jnp.zeros((B, H), jnp.float32)

    # ---------------- encoder: gates = src_proj[t] + h @ Whh  (bias folded) ----------
    def enc_body(t, carry):
        h, c = carry
        gates = src_proj_ref[t] + jnp.dot(h, enc_whh_ref[...],
                                          preferred_element_type=jnp.float32)
        return lstm_activations(gates, c)

    h, c = jax.lax.fori_loop(0, SRC_LEN, enc_body, (h0, c0), unroll=True)

    # ---------------- decoder ----------------
    def dec_body(t, carry):
        h, c, x_proj = carry
        gates = x_proj + jnp.dot(h, dec_whh_ref[...],
                                 preferred_element_type=jnp.float32) + dec_b
        h, c = lstm_activations(gates, c)

        logits = jnp.dot(h, wout, preferred_element_type=jnp.float32) + bout  # (B, VPAD)
        out_ref[t] = logits                                   # lane-dense (B,128) store

        # greedy argmax (first-index tie-break, like torch); padded lanes hold
        # -1e30 from bout so no extra mask is needed.
        row_max = jnp.max(logits, axis=1, keepdims=True)
        cand = jnp.where(logits >= row_max, lane_pad_f, float(vpad))
        best_idx = jnp.min(cand, axis=1, keepdims=True)       # (B,1) f32, exact small int
        best_oh = (lane_tv_f == best_idx).astype(jnp.float32)  # (B, TV) one-hot greedy tok

        # greedy-token input projection (embedding folded into dec_in_w)
        greedy_proj = jnp.dot(best_oh, dec_in_w_ref[...],
                              preferred_element_type=jnp.float32)            # (B, 4H)

        # teacher forcing: linear mix of projections == mix of one-hots
        f = flags_ref[t].astype(jnp.float32)                  # scalar 0.0 / 1.0 from SMEM
        x_next = f * tgt_proj_ref[t] + (1.0 - f) * greedy_proj
        return h, c, x_next

    jax.lax.fori_loop(1, TGT_LEN, dec_body, (h, c, tgt_proj_ref[0]), unroll=True)


# ----------------------------- parameter init ---------------------------------------
def init_params(key):
    ks = jax.random.split(key, 10)
    s = 0.1
    return {
        # encoder: Embedding + single-layer LSTM
        "enc_emb":    jax.random.normal(ks[0], (SRC_VOCAB, EMB), jnp.float32) * s,
        "enc_wih_t":  jax.random.normal(ks[1], (EMB, 4 * HID), jnp.float32) * s,
        "enc_whh_t":  jax.random.normal(ks[2], (HID, 4 * HID), jnp.float32) * s,
        "enc_b":      jax.random.normal(ks[3], (1, 4 * HID), jnp.float32) * s,   # b_ih + b_hh
        # decoder: Embedding + single-layer LSTM + Linear(HID -> vocab)
        "dec_emb":    jax.random.normal(ks[4], (TGT_VOCAB, EMB), jnp.float32) * s,
        "dec_wih_t":  jax.random.normal(ks[5], (EMB, 4 * HID), jnp.float32) * s,
        "dec_whh_t":  jax.random.normal(ks[6], (HID, 4 * HID), jnp.float32) * s,
        "dec_b":      jax.random.normal(ks[7], (1, 4 * HID), jnp.float32) * s,   # b_ih + b_hh
        "dec_wout_t": jax.random.normal(ks[8], (HID, TGT_VOCAB), jnp.float32) * s,
        "dec_bout":   jax.random.normal(ks[9], (1, TGT_VOCAB), jnp.float32) * s,
    }


# ----------------------------- jitted forward ---------------------------------------
def _seq2seq_forward(source, target, params, teacher_force_flags):
    """Mirrors Seq2Seq.forward: returns (target_len, batch, vocab); outputs[0] stays 0."""
    # fold embedding into the input-to-gates weight (one matmul per module, off the
    # recurrence) and precompute ALL per-step input projections as gathers.
    enc_in_w = params["enc_emb"] @ params["enc_wih_t"]          # (SRC_VOCAB, 4H)
    dec_in_w = params["dec_emb"] @ params["dec_wih_t"]          # (TGT_VOCAB, 4H)

    src_proj = jnp.take(enc_in_w, source, axis=0) + params["enc_b"]   # (SRC_LEN, B, 4H)
    tgt_proj = jnp.take(dec_in_w, target, axis=0)                      # (TGT_LEN, B, 4H)

    # lane-pad the vocab projection to 128 lanes for dense logits stores.
    # wout pad = 0, bout pad = -1e30 so the in-kernel argmax needs no mask.
    wout = jnp.zeros((HID, VPAD), jnp.float32).at[:, :TGT_VOCAB].set(params["dec_wout_t"])
    bout = jnp.full((1, VPAD), NEG_BIG, jnp.float32).at[:, :TGT_VOCAB].set(params["dec_bout"])

    flags = teacher_force_flags.astype(jnp.int32)               # (TGT_LEN,)

    out_padded = pl.pallas_call(
        seq2seq_kernel,
        out_shape=jax.ShapeDtypeStruct((TGT_LEN, BATCH, VPAD), jnp.float32),
        in_specs=[
            _smem(),   # flags
            _vmem(),   # src_proj
            _vmem(),   # tgt_proj
            _vmem(),   # enc_whh
            _vmem(),   # dec_whh
            _vmem(),   # dec_b
            _vmem(),   # dec_in_w
            _vmem(),   # wout
            _vmem(),   # bout
        ],
        out_specs=_vmem(),
    )(flags, src_proj, tgt_proj,
      params["enc_whh_t"], params["dec_whh_t"], params["dec_b"],
      dec_in_w, wout, bout)

    return out_padded[:, :, :TGT_VOCAB]                         # (TGT_LEN, B, vocab)


seq2seq_forward = jax.jit(_seq2seq_forward)


# ----------------------------- driver -----------------------------------------------
if __name__ == "__main__":
    key = jax.random.PRNGKey(0)
    pkey, skey, tkey = jax.random.split(key, 3)
    params = init_params(pkey)

    # deterministic example inputs: (seq_len, batch) int32 tokens (PyTorch seq-first layout)
    source = jax.random.randint(skey, (SRC_LEN, BATCH), 0, SRC_VOCAB, dtype=jnp.int32)
    target = jax.random.randint(tkey, (TGT_LEN, BATCH), 0, TGT_VOCAB, dtype=jnp.int32)

    # deterministic stand-in for `random.random() < self.teacher_forcing_ratio`
    # (drawn once per call outside jit; the PyTorch reference re-draws per step)
    random.seed(0)
    teacher_force_flags = jnp.array(
        [1 if random.random() < TEACHER_FORCING_RATIO else 0 for _ in range(TGT_LEN)],
        dtype=jnp.int32)

    out = seq2seq_forward(source, target, params, teacher_force_flags)
    out = jax.block_until_ready(out)

    assert out.shape == (TGT_LEN, BATCH, TGT_VOCAB)
    assert bool(jnp.all(out[0] == 0.0))          # outputs[0] is never written, stays zero
    assert bool(jnp.all(jnp.isfinite(out)))
    print("KERNEL_OK")
</pallas_src>

<mosaic_0001>
module attributes {stable_mosaic.version = 11 : i64} {
  func.func @seq2seq_kernel(%arg0: memref<8xi32, #tpu.memory_space<smem>>, %arg1: memref<8x8x128xf32, #tpu.memory_space<vmem>>, %arg2: memref<8x8x128xf32, #tpu.memory_space<vmem>>, %arg3: memref<32x128xf32, #tpu.memory_space<vmem>>, %arg4: memref<32x128xf32, #tpu.memory_space<vmem>>, %arg5: memref<1x128xf32, #tpu.memory_space<vmem>>, %arg6: memref<32x128xf32, #tpu.memory_space<vmem>>, %arg7: memref<32x128xf32, #tpu.memory_space<vmem>>, %arg8: memref<1x128xf32, #tpu.memory_space<vmem>>, %arg9: memref<8x8x128xf32, #tpu.memory_space<vmem>>) attributes {dimension_semantics = [], scalar_prefetch = 0 : i64, scratch_operands = 0 : i64, tpu.core_type = #tpu.core_type<tc>} {
    %cst = arith.constant 0.000000e+00 : f32
    %0 = vector.broadcast %cst : f32 to vector<8x128xf32>
    %c0 = arith.constant 0 : index
    %c0_0 = arith.constant 0 : index
    %c0_1 = arith.constant 0 : index
    %1 = vector.load %arg9[%c0, %c0_0, %c0_1] : memref<8x8x128xf32, #tpu.memory_space<vmem>>, vector<1x8x128xf32>
    %2 = vector.shape_cast %1 : vector<1x8x128xf32> to vector<8x128xf32>
    %3 = vector.shape_cast %0 : vector<8x128xf32> to vector<1x8x128xf32>
    tpu.vector_store %arg9[%c0, %c0_0, %c0_1], %3 {strides = array<i32>} : memref<8x8x128xf32, #tpu.memory_space<vmem>>, vector<1x8x128xf32>,
    %c0_2 = arith.constant 0 : index
    %c0_3 = arith.constant 0 : index
    %4 = vector.load %arg5[%c0_2, %c0_3] : memref<1x128xf32, #tpu.memory_space<vmem>>, vector<1x128xf32>
    %c0_4 = arith.constant 0 : index
    %c0_5 = arith.constant 0 : index
    %5 = vector.load %arg7[%c0_4, %c0_5] : memref<32x128xf32, #tpu.memory_space<vmem>>, vector<32x128xf32>
    %c0_6 = arith.constant 0 : index
    %c0_7 = arith.constant 0 : index
    %6 = vector.load %arg8[%c0_6, %c0_7] : memref<1x128xf32, #tpu.memory_space<vmem>>, vector<1x128xf32>
    %7 = tpu.iota {dimensions = array<i32: 1>} : vector<8x128xi32>
    %c64_i32 = arith.constant 64 : i32
    %8 = vector.broadcast %c64_i32 : i32 to vector<8x128xi32>
    %9 = arith.cmpi sge, %7, %8 : vector<8x128xi32>
    %c96_i32 = arith.constant 96 : i32
    %10 = vector.broadcast %c96_i32 : i32 to vector<8x128xi32>
    %11 = arith.cmpi slt, %7, %10 : vector<8x128xi32>
    %12 = arith.andi %9, %11 : vector<8x128xi1>
    %13 = tpu.iota {dimensions = array<i32: 1>} : vector<8x128xi32>
    %14 = arith.sitofp %13 : vector<8x128xi32> to vector<8x128xf32>
    %15 = tpu.iota {dimensions = array<i32: 1>} : vector<8x32xi32>
    %16 = arith.sitofp %15 : vector<8x32xi32> to vector<8x32xf32>
    %cst_8 = arith.constant 0.000000e+00 : f32
    %17 = vector.broadcast %cst_8 : f32 to vector<8x32xf32>
    %cst_9 = arith.constant 0.000000e+00 : f32
    %18 = vector.broadcast %cst_9 : f32 to vector<8x32xf32>
    %c0_i32 = arith.constant 0 : i32
    %19 = arith.index_cast %c0_i32 : i32 to index
    %c0_10 = arith.constant 0 : index
    %c0_11 = arith.constant 0 : index
    %20 = vector.load %arg1[%19, %c0_10, %c0_11] : memref<8x8x128xf32, #tpu.memory_space<vmem>>, vector<1x8x128xf32>
    %21 = vector.shape_cast %20 : vector<1x8x128xf32> to vector<8x128xf32>
    %c0_12 = arith.constant 0 : index
    %c0_13 = arith.constant 0 : index
    %22 = vector.load %arg3[%c0_12, %c0_13] : memref<32x128xf32, #tpu.memory_space<vmem>>, vector<32x128xf32>
    %cst_14 = arith.constant dense<0.000000e+00> : vector<8x128xf32>
    %23 = tpu.matmul %17, %22, %cst_14 {dimension_numbers = #tpu.dot_dimension_numbers<[1], [0], [0], [1], [0, 0, 1, 1], [], []>} : vector<8x32xf32>, vector<32x128xf32>, vector<8x128xf32> -> vector<8x128xf32>
    %24 = arith.addf %21, %23 : vector<8x128xf32>
    %25 = arith.negf %24 : vector<8x128xf32>
    %26 = math.exp %25 : vector<8x128xf32>
    %cst_15 = arith.constant 1.000000e+00 : f32
    %27 = vector.broadcast %cst_15 : f32 to vector<8x128xf32>
    %28 = arith.addf %27, %26 : vector<8x128xf32>
    %29 = arith.divf %27, %28 : vector<8x128xf32>
    %30 = math.tanh %24 : vector<8x128xf32>
    %31 = arith.select %12, %30, %29 : vector<8x128xi1>, vector<8x128xf32>
    %32 = vector.extract_strided_slice %31 {offsets = [0, 0], sizes = [8, 32], strides = [1, 1]} : vector<8x128xf32> to vector<8x32xf32>
    %33 = vector.extract_strided_slice %31 {offsets = [0, 32], sizes = [8, 32], strides = [1, 1]} : vector<8x128xf32> to vector<8x32xf32>
    %34 = vector.extract_strided_slice %31 {offsets = [0, 64], sizes = [8, 32], strides = [1, 1]} : vector<8x128xf32> to vector<8x32xf32>
    %35 = vector.extract_strided_slice %31 {offsets = [0, 96], sizes = [8, 32], strides = [1, 1]} : vector<8x128xf32> to vector<8x32xf32>
    %36 = arith.mulf %33, %18 : vector<8x32xf32>
    %37 = arith.mulf %32, %34 : vector<8x32xf32>
    %38 = arith.addf %36, %37 : vector<8x32xf32>
    %39 = math.tanh %38 : vector<8x32xf32>
    %40 = arith.mulf %35, %39 : vector<8x32xf32>
    %c1_i32 = arith.constant 1 : i32
    %41 = arith.index_cast %c1_i32 : i32 to index
    %c0_16 = arith.constant 0 : index
    %c0_17 = arith.constant 0 : index
    %42 = vector.load %arg1[%41, %c0_16, %c0_17] : memref<8x8x128xf32, #tpu.memory_space<vmem>>, vector<1x8x128xf32>
    %43 = vector.shape_cast %42 : vector<1x8x128xf32> to vector<8x128xf32>
    %c0_18 = arith.constant 0 : index
    %c0_19 = arith.constant 0 : index
    %44 = vector.load %arg3[%c0_18, %c0_19] : memref<32x128xf32, #tpu.memory_space<vmem>>, vector<32x128xf32>
    %cst_20 = arith.constant dense<0.000000e+00> : vector<8x128xf32>
    %45 = tpu.matmul %40, %44, %cst_20 {dimension_numbers = #tpu.dot_dimension_numbers<[1], [0], [0], [1], [0, 0, 1, 1], [], []>} : vector<8x32xf32>, vector<32x128xf32>, vector<8x128xf32> -> vector<8x128xf32>
    %46 = arith.addf %43, %45 : vector<8x128xf32>
    %47 = arith.negf %46 : vector<8x128xf32>
    %48 = math.exp %47 : vector<8x128xf32>
    %cst_21 = arith.constant 1.000000e+00 : f32
    %49 = vector.broadcast %cst_21 : f32 to vector<8x128xf32>
    %50 = arith.addf %49, %48 : vector<8x128xf32>
    %51 = arith.divf %49, %50 : vector<8x128xf32>
    %52 = math.tanh %46 : vector<8x128xf32>
    %53 = arith.select %12, %52, %51 : vector<8x128xi1>, vector<8x128xf32>
    %54 = vector.extract_strided_slice %53 {offsets = [0, 0], sizes = [8, 32], strides = [1, 1]} : vector<8x128xf32> to vector<8x32xf32>
    %55 = vector.extract_strided_slice %53 {offsets = [0, 32], sizes = [8, 32], strides = [1, 1]} : vector<8x128xf32> to vector<8x32xf32>
    %56 = vector.extract_strided_slice %53 {offsets = [0, 64], sizes = [8, 32], strides = [1, 1]} : vector<8x128xf32> to vector<8x32xf32>
    %57 = vector.extract_strided_slice %53 {offsets = [0, 96], sizes = [8, 32], strides = [1, 1]} : vector<8x128xf32> to vector<8x32xf32>
    %58 = arith.mulf %55, %38 : vector<8x32xf32>
    %59 = arith.mulf %54, %56 : vector<8x32xf32>
    %60 = arith.addf %58, %59 : vector<8x32xf32>
    %61 = math.tanh %60 : vector<8x32xf32>
    %62 = arith.mulf %57, %61 : vector<8x32xf32>
    %c2_i32 = arith.constant 2 : i32
    %63 = arith.index_cast %c2_i32 : i32 to index
    %c0_22 = arith.constant 0 : index
    %c0_23 = arith.constant 0 : index
    %64 = vector.load %arg1[%63, %c0_22, %c0_23] : memref<8x8x128xf32, #tpu.memory_space<vmem>>, vector<1x8x128xf32>
    %65 = vector.shape_cast %64 : vector<1x8x128xf32> to vector<8x128xf32>
    %c0_24 = arith.constant 0 : index
    %c0_25 = arith.constant 0 : index
    %66 = vector.load %arg3[%c0_24, %c0_25] : memref<32x128xf32, #tpu.memory_space<vmem>>, vector<32x128xf32>
    %cst_26 = arith.constant dense<0.000000e+00> : vector<8x128xf32>
    %67 = tpu.matmul %62, %66, %cst_26 {dimension_numbers = #tpu.dot_dimension_numbers<[1], [0], [0], [1], [0, 0, 1, 1], [], []>} : vector<8x32xf32>, vector<32x128xf32>, vector<8x128xf32> -> vector<8x128xf32>
    %68 = arith.addf %65, %67 : vector<8x128xf32>
    %69 = arith.negf %68 : vector<8x128xf32>
    %70 = math.exp %69 : vector<8x128xf32>
    %cst_27 = arith.constant 1.000000e+00 : f32
    %71 = vector.broadcast %cst_27 : f32 to vector<8x128xf32>
    %72 = arith.addf %71, %70 : vector<8x128xf32>
    %73 = arith.divf %71, %72 : vector<8x128xf32>
    %74 = math.tanh %68 : vector<8x128xf32>
    %75 = arith.select %12, %74, %73 : vector<8x128xi1>, vector<8x128xf32>
    %76 = vector.extract_strided_slice %75 {offsets = [0, 0], sizes = [8, 32], strides = [1, 1]} : vector<8x128xf32> to vector<8x32xf32>
    %77 = vector.extract_strided_slice %75 {offsets = [0, 32], sizes = [8, 32], strides = [1, 1]} : vector<8x128xf32> to vector<8x32xf32>
    %78 = vector.extract_strided_slice %75 {offsets = [0, 64], sizes = [8, 32], strides = [1, 1]} : vector<8x128xf32> to vector<8x32xf32>
    %79 = vector.extract_strided_slice %75 {offsets = [0, 96], sizes = [8, 32], strides = [1, 1]} : vector<8x128xf32> to vector<8x32xf32>
    %80 = arith.mulf %77, %60 : vector<8x32xf32>
    %81 = arith.mulf %76, %78 : vector<8x32xf32>
    %82 = arith.addf %80, %81 : vector<8x32xf32>
    %83 = math.tanh %82 : vector<8x32xf32>
    %84 = arith.mulf %79, %83 : vector<8x32xf32>
    %c3_i32 = arith.constant 3 : i32
    %85 = arith.index_cast %c3_i32 : i32 to index
    %c0_28 = arith.constant 0 : index
    %c0_29 = arith.constant 0 : index
    %86 = vector.load %arg1[%85, %c0_28, %c0_29] : memref<8x8x128xf32, #tpu.memory_space<vmem>>, vector<1x8x128xf32>
    %87 = vector.shape_cast %86 : vector<1x8x128xf32> to vector<8x128xf32>
    %c0_30 = arith.constant 0 : index
    %c0_31 = arith.constant 0 : index
    %88 = vector.load %arg3[%c0_30, %c0_31] : memref<32x128xf32, #tpu.memory_space<vmem>>, vector<32x128xf32>
    %cst_32 = arith.constant dense<0.000000e+00> : vector<8x128xf32>
    %89 = tpu.matmul %84, %88, %cst_32 {dimension_numbers = #tpu.dot_dimension_numbers<[1], [0], [0], [1], [0, 0, 1, 1], [], []>} : vector<8x32xf32>, vector<32x128xf32>, vector<8x128xf32> -> vector<8x128xf32>
    %90 = arith.addf %87, %89 : vector<8x128xf32>
    %91 = arith.negf %90 : vector<8x128xf32>
    %92 = math.exp %91 : vector<8x128xf32>
    %cst_33 = arith.constant 1.000000e+00 : f32
    %93 = vector.broadcast %cst_33 : f32 to vector<8x128xf32>
    %94 = arith.addf %93, %92 : vector<8x128xf32>
    %95 = arith.divf %93, %94 : vector<8x128xf32>
    %96 = math.tanh %90 : vector<8x128xf32>
    %97 = arith.select %12, %96, %95 : vector<8x128xi1>, vector<8x128xf32>
    %98 = vector.extract_strided_slice %97 {offsets = [0, 0], sizes = [8, 32], strides = [1, 1]} : vector<8x128xf32> to vector<8x32xf32>
    %99 = vector.extract_strided_slice %97 {offsets = [0, 32], sizes = [8, 32], strides = [1, 1]} : vector<8x128xf32> to vector<8x32xf32>
    %100 = vector.extract_strided_slice %97 {offsets = [0, 64], sizes = [8, 32], strides = [1, 1]} : vector<8x128xf32> to vector<8x32xf32>
    %101 = vector.extract_strided_slice %97 {offsets = [0, 96], sizes = [8, 32], strides = [1, 1]} : vector<8x128xf32> to vector<8x32xf32>
    %102 = arith.mulf %99, %82 : vector<8x32xf32>
    %103 = arith.mulf %98, %100 : vector<8x32xf32>
    %104 = arith.addf %102, %103 : vector<8x32xf32>
    %105 = math.tanh %104 : vector<8x32xf32>
    %106 = arith.mulf %101, %105 : vector<8x32xf32>
    %c4_i32 = arith.constant 4 : i32
    %107 = arith.index_cast %c4_i32 : i32 to index
    %c0_34 = arith.constant 0 : index
    %c0_35 = arith.constant 0 : index
    %108 = vector.load %arg1[%107, %c0_34, %c0_35] : memref<8x8x128xf32, #tpu.memory_space<vmem>>, vector<1x8x128xf32>
    %109 = vector.shape_cast %108 : vector<1x8x128xf32> to vector<8x128xf32>
    %c0_36 = arith.constant 0 : index
    %c0_37 = arith.constant 0 : index
    %110 = vector.load %arg3[%c0_36, %c0_37] : memref<32x128xf32, #tpu.memory_space<vmem>>, vector<32x128xf32>
    %cst_38 = arith.constant dense<0.000000e+00> : vector<8x128xf32>
    %111 = tpu.matmul %106, %110, %cst_38 {dimension_numbers = #tpu.dot_dimension_numbers<[1], [0], [0], [1], [0, 0, 1, 1], [], []>} : vector<8x32xf32>, vector<32x128xf32>, vector<8x128xf32> -> vector<8x128xf32>
    %112 = arith.addf %109, %111 : vector<8x128xf32>
    %113 = arith.negf %112 : vector<8x128xf32>
    %114 = math.exp %113 : vector<8x128xf32>
    %cst_39 = arith.constant 1.000000e+00 : f32
    %115 = vector.broadcast %cst_39 : f32 to vector<8x128xf32>
    %116 = arith.addf %115, %114 : vector<8x128xf32>
    %117 = arith.divf %115, %116 : vector<8x128xf32>
    %118 = math.tanh %112 : vector<8x128xf32>
    %119 = arith.select %12, %118, %117 : vector<8x128xi1>, vector<8x128xf32>
    %120 = vector.extract_strided_slice %119 {offsets = [0, 0], sizes = [8, 32], strides = [1, 1]} : vector<8x128xf32> to vector<8x32xf32>
    %121 = vector.extract_strided_slice %119 {offsets = [0, 32], sizes = [8, 32], strides = [1, 1]} : vector<8x128xf32> to vector<8x32xf32>
    %122 = vector.extract_strided_slice %119 {offsets = [0, 64], sizes = [8, 32], strides = [1, 1]} : vector<8x128xf32> to vector<8x32xf32>
    %123 = vector.extract_strided_slice %119 {offsets = [0, 96], sizes = [8, 32], strides = [1, 1]} : vector<8x128xf32> to vector<8x32xf32>
    %124 = arith.mulf %121, %104 : vector<8x32xf32>
    %125 = arith.mulf %120, %122 : vector<8x32xf32>
    %126 = arith.addf %124, %125 : vector<8x32xf32>
    %127 = math.tanh %126 : vector<8x32xf32>
    %128 = arith.mulf %123, %127 : vector<8x32xf32>
    %c5_i32 = arith.constant 5 : i32
    %129 = arith.index_cast %c5_i32 : i32 to index
    %c0_40 = arith.constant 0 : index
    %c0_41 = arith.constant 0 : index
    %130 = vector.load %arg1[%129, %c0_40, %c0_41] : memref<8x8x128xf32, #tpu.memory_space<vmem>>, vector<1x8x128xf32>
    %131 = vector.shape_cast %130 : vector<1x8x128xf32> to vector<8x128xf32>
    %c0_42 = arith.constant 0 : index
    %c0_43 = arith.constant 0 : index
    %132 = vector.load %arg3[%c0_42, %c0_43] : memref<32x128xf32, #tpu.memory_space<vmem>>, vector<32x128xf32>
    %cst_44 = arith.constant dense<0.000000e+00> : vector<8x128xf32>
    %133 = tpu.matmul %128, %132, %cst_44 {dimension_numbers = #tpu.dot_dimension_numbers<[1], [0], [0], [1], [0, 0, 1, 1], [], []>} : vector<8x32xf32>, vector<32x128xf32>, vector<8x128xf32> -> vector<8x128xf32>
    %134 = arith.addf %131, %133 : vector<8x128xf32>
    %135 = arith.negf %134 : vector<8x128xf32>
    %136 = math.exp %135 : vector<8x128xf32>
    %cst_45 = arith.constant 1.000000e+00 : f32
    %137 = vector.broadcast %cst_45 : f32 to vector<8x128xf32>
    %138 = arith.addf %137, %136 : vector<8x128xf32>
    %139 = arith.divf %137, %138 : vector<8x128xf32>
    %140 = math.tanh %134 : vector<8x128xf32>
    %141 = arith.select %12, %140, %139 : vector<8x128xi1>, vector<8x128xf32>
    %142 = vector.extract_strided_slice %141 {offsets = [0, 0], sizes = [8, 32], strides = [1, 1]} : vector<8x128xf32> to vector<8x32xf32>
    %143 = vector.extract_strided_slice %141 {offsets = [0, 32], sizes = [8, 32], strides = [1, 1]} : vector<8x128xf32> to vector<8x32xf32>
    %144 = vector.extract_strided_slice %141 {offsets = [0, 64], sizes = [8, 32], strides = [1, 1]} : vector<8x128xf32> to vector<8x32xf32>
    %145 = vector.extract_strided_slice %141 {offsets = [0, 96], sizes = [8, 32], strides = [1, 1]} : vector<8x128xf32> to vector<8x32xf32>
    %146 = arith.mulf %143, %126 : vector<8x32xf32>
    %147 = arith.mulf %142, %144 : vector<8x32xf32>
    %148 = arith.addf %146, %147 : vector<8x32xf32>
    %149 = math.tanh %148 : vector<8x32xf32>
    %150 = arith.mulf %145, %149 : vector<8x32xf32>
    %c6_i32 = arith.constant 6 : i32
    %151 = arith.index_cast %c6_i32 : i32 to index
    %c0_46 = arith.constant 0 : index
    %c0_47 = arith.constant 0 : index
    %152 = vector.load %arg1[%151, %c0_46, %c0_47] : memref<8x8x128xf32, #tpu.memory_space<vmem>>, vector<1x8x128xf32>
    %153 = vector.shape_cast %152 : vector<1x8x128xf32> to vector<8x128xf32>
    %c0_48 = arith.constant 0 : index
    %c0_49 = arith.constant 0 : index
    %154 = vector.load %arg3[%c0_48, %c0_49] : memref<32x128xf32, #tpu.memory_space<vmem>>, vector<32x128xf32>
    %cst_50 = arith.constant dense<0.000000e+00> : vector<8x128xf32>
    %155 = tpu.matmul %150, %154, %cst_50 {dimension_numbers = #tpu.dot_dimension_numbers<[1], [0], [0], [1], [0, 0, 1, 1], [], []>} : vector<8x32xf32>, vector<32x128xf32>, vector<8x128xf32> -> vector<8x128xf32>
    %156 = arith.addf %153, %155 : vector<8x128xf32>
    %157 = arith.negf %156 : vector<8x128xf32>
    %158 = math.exp %157 : vector<8x128xf32>
    %cst_51 = arith.constant 1.000000e+00 : f32
    %159 = vector.broadcast %cst_51 : f32 to vector<8x128xf32>
    %160 = arith.addf %159, %158 : vector<8x128xf32>
    %161 = arith.divf %159, %160 : vector<8x128xf32>
    %162 = math.tanh %156 : vector<8x128xf32>
    %163 = arith.select %12, %162, %161 : vector<8x128xi1>, vector<8x128xf32>
    %164 = vector.extract_strided_slice %163 {offsets = [0, 0], sizes = [8, 32], strides = [1, 1]} : vector<8x128xf32> to vector<8x32xf32>
    %165 = vector.extract_strided_slice %163 {offsets = [0, 32], sizes = [8, 32], strides = [1, 1]} : vector<8x128xf32> to vector<8x32xf32>
    %166 = vector.extract_strided_slice %163 {offsets = [0, 64], sizes = [8, 32], strides = [1, 1]} : vector<8x128xf32> to vector<8x32xf32>
    %167 = vector.extract_strided_slice %163 {offsets = [0, 96], sizes = [8, 32], strides = [1, 1]} : vector<8x128xf32> to vector<8x32xf32>
    %168 = arith.mulf %165, %148 : vector<8x32xf32>
    %169 = arith.mulf %164, %166 : vector<8x32xf32>
    %170 = arith.addf %168, %169 : vector<8x32xf32>
    %171 = math.tanh %170 : vector<8x32xf32>
    %172 = arith.mulf %167, %171 : vector<8x32xf32>
    %c7_i32 = arith.constant 7 : i32
    %173 = arith.index_cast %c7_i32 : i32 to index
    %c0_52 = arith.constant 0 : index
    %c0_53 = arith.constant 0 : index
    %174 = vector.load %arg1[%173, %c0_52, %c0_53] : memref<8x8x128xf32, #tpu.memory_space<vmem>>, vector<1x8x128xf32>
    %175 = vector.shape_cast %174 : vector<1x8x128xf32> to vector<8x128xf32>
    %c0_54 = arith.constant 0 : index
    %c0_55 = arith.constant 0 : index
    %176 = vector.load %arg3[%c0_54, %c0_55] : memref<32x128xf32, #tpu.memory_space<vmem>>, vector<32x128xf32>
    %cst_56 = arith.constant dense<0.000000e+00> : vector<8x128xf32>
    %177 = tpu.matmul %172, %176, %cst_56 {dimension_numbers = #tpu.dot_dimension_numbers<[1], [0], [0], [1], [0, 0, 1, 1], [], []>} : vector<8x32xf32>, vector<32x128xf32>, vector<8x128xf32> -> vector<8x128xf32>
    %178 = arith.addf %175, %177 : vector<8x128xf32>
    %179 = arith.negf %178 : vector<8x128xf32>
    %180 = math.exp %179 : vector<8x128xf32>
    %cst_57 = arith.constant 1.000000e+00 : f32
    %181 = vector.broadcast %cst_57 : f32 to vector<8x128xf32>
    %182 = arith.addf %181, %180 : vector<8x128xf32>
    %183 = arith.divf %181, %182 : vector<8x128xf32>
    %184 = math.tanh %178 : vector<8x128xf32>
    %185 = arith.select %12, %184, %183 : vector<8x128xi1>, vector<8x128xf32>
    %186 = vector.extract_strided_slice %185 {offsets = [0, 0], sizes = [8, 32], strides = [1, 1]} : vector<8x128xf32> to vector<8x32xf32>
    %187 = vector.extract_strided_slice %185 {offsets = [0, 32], sizes = [8, 32], strides = [1, 1]} : vector<8x128xf32> to vector<8x32xf32>
    %188 = vector.extract_strided_slice %185 {offsets = [0, 64], sizes = [8, 32], strides = [1, 1]} : vector<8x128xf32> to vector<8x32xf32>
    %189 = vector.extract_strided_slice %185 {offsets = [0, 96], sizes = [8, 32], strides = [1, 1]} : vector<8x128xf32> to vector<8x32xf32>
    %190 = arith.mulf %187, %170 : vector<8x32xf32>
    %191 = arith.mulf %186, %188 : vector<8x32xf32>
    %192 = arith.addf %190, %191 : vector<8x32xf32>
    %193 = math.tanh %192 : vector<8x32xf32>
    %194 = arith.mulf %189, %193 : vector<8x32xf32>
    %c8_i32 = arith.constant 8 : i32
    %c0_58 = arith.constant 0 : index
    %c0_59 = arith.constant 0 : index
    %c0_60 = arith.constant 0 : index
    %195 = vector.load %arg2[%c0_58, %c0_59, %c0_60] : memref<8x8x128xf32, #tpu.memory_space<vmem>>, vector<1x8x128xf32>
    %196 = vector.shape_cast %195 : vector<1x8x128xf32> to vector<8x128xf32>
    %c1_i32_61 = arith.constant 1 : i32
    %c0_62 = arith.constant 0 : index
    %c0_63 = arith.constant 0 : index
    %197 = vector.load %arg4[%c0_62, %c0_63] : memref<32x128xf32, #tpu.memory_space<vmem>>, vector<32x128xf32>
    %cst_64 = arith.constant dense<0.000000e+00> : vector<8x128xf32>
    %198 = tpu.matmul %194, %197, %cst_64 {dimension_numbers = #tpu.dot_dimension_numbers<[1], [0], [0], [1], [0, 0, 1, 1], [], []>} : vector<8x32xf32>, vector<32x128xf32>, vector<8x128xf32> -> vector<8x128xf32>
    %199 = arith.addf %196, %198 : vector<8x128xf32>
    %200 = vector.broadcast %4 : vector<1x128xf32> to vector<8x128xf32>
    %201 = arith.addf %199, %200 : vector<8x128xf32>
    %202 = arith.negf %201 : vector<8x128xf32>
    %203 = math.exp %202 : vector<8x128xf32>
    %cst_65 = arith.constant 1.000000e+00 : f32
    %204 = vector.broadcast %cst_65 : f32 to vector<8x128xf32>
    %205 = arith.addf %204, %203 : vector<8x128xf32>
    %206 = arith.divf %204, %205 : vector<8x128xf32>
    %207 = math.tanh %201 : vector<8x128xf32>
    %208 = arith.select %12, %207, %206 : vector<8x128xi1>, vector<8x128xf32>
    %209 = vector.extract_strided_slice %208 {offsets = [0, 0], sizes = [8, 32], strides = [1, 1]} : vector<8x128xf32> to vector<8x32xf32>
    %210 = vector.extract_strided_slice %208 {offsets = [0, 32], sizes = [8, 32], strides = [1, 1]} : vector<8x128xf32> to vector<8x32xf32>
    %211 = vector.extract_strided_slice %208 {offsets = [0, 64], sizes = [8, 32], strides = [1, 1]} : vector<8x128xf32> to vector<8x32xf32>
    %212 = vector.extract_strided_slice %208 {offsets = [0, 96], sizes = [8, 32], strides = [1, 1]} : vector<8x128xf32> to vector<8x32xf32>
    %213 = arith.mulf %210, %192 : vector<8x32xf32>
    %214 = arith.mulf %209, %211 : vector<8x32xf32>
    %215 = arith.addf %213, %214 : vector<8x32xf32>
    %216 = math.tanh %215 : vector<8x32xf32>
    %217 = arith.mulf %212, %216 : vector<8x32xf32>
    %cst_66 = arith.constant dense<0.000000e+00> : vector<8x128xf32>
    %218 = tpu.matmul %217, %5, %cst_66 {dimension_numbers = #tpu.dot_dimension_numbers<[1], [0], [0], [1], [0, 0, 1, 1], [], []>} : vector<8x32xf32>, vector<32x128xf32>, vector<8x128xf32> -> vector<8x128xf32>
    %219 = vector.broadcast %6 : vector<1x128xf32> to vector<8x128xf32>
    %220 = arith.addf %218, %219 : vector<8x128xf32>
    %221 = arith.index_cast %c1_i32_61 : i32 to index
    %c0_67 = arith.constant 0 : index
    %c0_68 = arith.constant 0 : index
    %222 = vector.load %arg9[%221, %c0_67, %c0_68] : memref<8x8x128xf32, #tpu.memory_space<vmem>>, vector<1x8x128xf32>
    %223 = vector.shape_cast %222 : vector<1x8x128xf32> to vector<8x128xf32>
    %224 = vector.shape_cast %220 : vector<8x128xf32> to vector<1x8x128xf32>
    tpu.vector_store %arg9[%221, %c0_67, %c0_68], %224 {strides = array<i32>} : memref<8x8x128xf32, #tpu.memory_space<vmem>>, vector<1x8x128xf32>,
    %cst_69 = arith.constant dense<0xFF800000> : vector<8xf32>
    %225 = vector.multi_reduction <maximumf>, %220, %cst_69 [1] : vector<8x128xf32> to vector<8xf32>
    %226 = vector.shape_cast %225 : vector<8xf32> to vector<8x1xf32>
    %227 = vector.broadcast %226 : vector<8x1xf32> to vector<8x128xf32>
    %228 = arith.cmpf oge, %220, %227 : vector<8x128xf32>
    %cst_70 = arith.constant 1.280000e+02 : f32
    %229 = vector.broadcast %cst_70 : f32 to vector<8x128xf32>
    %230 = arith.select %228, %14, %229 : vector<8x128xi1>, vector<8x128xf32>
    %cst_71 = arith.constant dense<0x7F800000> : vector<8xf32>
    %231 = vector.multi_reduction <minimumf>, %230, %cst_71 [1] : vector<8x128xf32> to vector<8xf32>
    %232 = vector.shape_cast %231 : vector<8xf32> to vector<8x1xf32>
    %233 = vector.broadcast %232 : vector<8x1xf32> to vector<8x32xf32>
    %234 = arith.cmpf oeq, %16, %233 : vector<8x32xf32>
    %235 = arith.extui %234 : vector<8x32xi1> to vector<8x32xi32>
    %236 = arith.sitofp %235 : vector<8x32xi32> to vector<8x32xf32>
    %c0_72 = arith.constant 0 : index
    %c0_73 = arith.constant 0 : index
    %237 = vector.load %arg6[%c0_72, %c0_73] : memref<32x128xf32, #tpu.memory_space<vmem>>, vector<32x128xf32>
    %cst_74 = arith.constant dense<0.000000e+00> : vector<8x128xf32>
    %238 = tpu.matmul %236, %237, %cst_74 {dimension_numbers = #tpu.dot_dimension_numbers<[1], [0], [0], [1], [0, 0, 1, 1], [], []>} : vector<8x32xf32>, vector<32x128xf32>, vector<8x128xf32> -> vector<8x128xf32>
    %239 = arith.index_cast %c1_i32_61 : i32 to index
    %240 = memref.load %arg0[%239] : memref<8xi32, #tpu.memory_space<smem>>
    %241 = arith.sitofp %240 : i32 to f32
    %242 = arith.index_cast %c1_i32_61 : i32 to index
    %c0_75 = arith.constant 0 : index
    %c0_76 = arith.constant 0 : index
    %243 = vector.load %arg2[%242, %c0_75, %c0_76] : memref<8x8x128xf32, #tpu.memory_space<vmem>>, vector<1x8x128xf32>
    %244 = vector.shape_cast %243 : vector<1x8x128xf32> to vector<8x128xf32>
    %245 = vector.broadcast %241 : f32 to vector<8x128xf32>
    %246 = arith.mulf %245, %244 : vector<8x128xf32>
    %cst_77 = arith.constant 1.000000e+00 : f32
    %247 = arith.subf %cst_77, %241 : f32
    %248 = vector.broadcast %247 : f32 to vector<8x128xf32>
    %249 = arith.mulf %248, %238 : vector<8x128xf32>
    %250 = arith.addf %246, %249 : vector<8x128xf32>
    %c2_i32_78 = arith.constant 2 : i32
    %c0_79 = arith.constant 0 : index
    %c0_80 = arith.constant 0 : index
    %251 = vector.load %arg4[%c0_79, %c0_80] : memref<32x128xf32, #tpu.memory_space<vmem>>, vector<32x128xf32>
    %cst_81 = arith.constant dense<0.000000e+00> : vector<8x128xf32>
    %252 = tpu.matmul %217, %251, %cst_81 {dimension_numbers = #tpu.dot_dimension_numbers<[1], [0], [0], [1], [0, 0, 1, 1], [], []>} : vector<8x32xf32>, vector<32x128xf32>, vector<8x128xf32> -> vector<8x128xf32>
    %253 = arith.addf %250, %252 : vector<8x128xf32>
    %254 = vector.broadcast %4 : vector<1x128xf32> to vector<8x128xf32>
    %255 = arith.addf %253, %254 : vector<8x128xf32>
    %256 = arith.negf %255 : vector<8x128xf32>
    %257 = math.exp %256 : vector<8x128xf32>
    %cst_82 = arith.constant 1.000000e+00 : f32
    %258 = vector.broadcast %cst_82 : f32 to vector<8x128xf32>
    %259 = arith.addf %258, %257 : vector<8x128xf32>
    %260 = arith.divf %258, %259 : vector<8x128xf32>
    %261 = math.tanh %255 : vector<8x128xf32>
    %262 = arith.select %12, %261, %260 : vector<8x128xi1>, vector<8x128xf32>
    %263 = vector.extract_strided_slice %262 {offsets = [0, 0], sizes = [8, 32], strides = [1, 1]} : vector<8x128xf32> to vector<8x32xf32>
    %264 = vector.extract_strided_slice %262 {offsets = [0, 32], sizes = [8, 32], strides = [1, 1]} : vector<8x128xf32> to vector<8x32xf32>
    %265 = vector.extract_strided_slice %262 {offsets = [0, 64], sizes = [8, 32], strides = [1, 1]} : vector<8x128xf32> to vector<8x32xf32>
    %266 = vector.extract_strided_slice %262 {offsets = [0, 96], sizes = [8, 32], strides = [1, 1]} : vector<8x128xf32> to vector<8x32xf32>
    %267 = arith.mulf %264, %215 : vector<8x32xf32>
    %268 = arith.mulf %263, %265 : vector<8x32xf32>
    %269 = arith.addf %267, %268 : vector<8x32xf32>
    %270 = math.tanh %269 : vector<8x32xf32>
    %271 = arith.mulf %266, %270 : vector<8x32xf32>
    %cst_83 = arith.constant dense<0.000000e+00> : vector<8x128xf32>
    %272 = tpu.matmul %271, %5, %cst_83 {dimension_numbers = #tpu.dot_dimension_numbers<[1], [0], [0], [1], [0, 0, 1, 1], [], []>} : vector<8x32xf32>, vector<32x128xf32>, vector<8x128xf32> -> vector<8x128xf32>
    %273 = vector.broadcast %6 : vector<1x128xf32> to vector<8x128xf32>
    %274 = arith.addf %272, %273 : vector<8x128xf32>
    %275 = arith.index_cast %c2_i32_78 : i32 to index
    %c0_84 = arith.constant 0 : index
    %c0_85 = arith.constant 0 : index
    %276 = vector.load %arg9[%275, %c0_84, %c0_85] : memref<8x8x128xf32, #tpu.memory_space<vmem>>, vector<1x8x128xf32>
    %277 = vector.shape_cast %276 : vector<1x8x128xf32> to vector<8x128xf32>
    %278 = vector.shape_cast %274 : vector<8x128xf32> to vector<1x8x128xf32>
    tpu.vector_store %arg9[%275, %c0_84, %c0_85], %278 {strides = array<i32>} : memref<8x8x128xf32, #tpu.memory_space<vmem>>, vector<1x8x128xf32>,
    %cst_86 = arith.constant dense<0xFF800000> : vector<8xf32>
    %279 = vector.multi_reduction <maximumf>, %274, %cst_86 [1] : vector<8x128xf32> to vector<8xf32>
    %280 = vector.shape_cast %279 : vector<8xf32> to vector<8x1xf32>
    %281 = vector.broadcast %280 : vector<8x1xf32> to vector<8x128xf32>
    %282 = arith.cmpf oge, %274, %281 : vector<8x128xf32>
    %cst_87 = arith.constant 1.280000e+02 : f32
    %283 = vector.broadcast %cst_87 : f32 to vector<8x128xf32>
    %284 = arith.select %282, %14, %283 : vector<8x128xi1>, vector<8x128xf32>
    %cst_88 = arith.constant dense<0x7F800000> : vector<8xf32>
    %285 = vector.multi_reduction <minimumf>, %284, %cst_88 [1] : vector<8x128xf32> to vector<8xf32>
    %286 = vector.shape_cast %285 : vector<8xf32> to vector<8x1xf32>
    %287 = vector.broadcast %286 : vector<8x1xf32> to vector<8x32xf32>
    %288 = arith.cmpf oeq, %16, %287 : vector<8x32xf32>
    %289 = arith.extui %288 : vector<8x32xi1> to vector<8x32xi32>
    %290 = arith.sitofp %289 : vector<8x32xi32> to vector<8x32xf32>
    %c0_89 = arith.constant 0 : index
    %c0_90 = arith.constant 0 : index
    %291 = vector.load %arg6[%c0_89, %c0_90] : memref<32x128xf32, #tpu.memory_space<vmem>>, vector<32x128xf32>
    %cst_91 = arith.constant dense<0.000000e+00> : vector<8x128xf32>
    %292 = tpu.matmul %290, %291, %cst_91 {dimension_numbers = #tpu.dot_dimension_numbers<[1], [0], [0], [1], [0, 0, 1, 1], [], []>} : vector<8x32xf32>, vector<32x128xf32>, vector<8x128xf32> -> vector<8x128xf32>
    %293 = arith.index_cast %c2_i32_78 : i32 to index
    %294 = memref.load %arg0[%293] : memref<8xi32, #tpu.memory_space<smem>>
    %295 = arith.sitofp %294 : i32 to f32
    %296 = arith.index_cast %c2_i32_78 : i32 to index
    %c0_92 = arith.constant 0 : index
    %c0_93 = arith.constant 0 : index
    %297 = vector.load %arg2[%296, %c0_92, %c0_93] : memref<8x8x128xf32, #tpu.memory_space<vmem>>, vector<1x8x128xf32>
    %298 = vector.shape_cast %297 : vector<1x8x128xf32> to vector<8x128xf32>
    %299 = vector.broadcast %295 : f32 to vector<8x128xf32>
    %300 = arith.mulf %299, %298 : vector<8x128xf32>
    %cst_94 = arith.constant 1.000000e+00 : f32
    %301 = arith.subf %cst_94, %295 : f32
    %302 = vector.broadcast %301 : f32 to vector<8x128xf32>
    %303 = arith.mulf %302, %292 : vector<8x128xf32>
    %304 = arith.addf %300, %303 : vector<8x128xf32>
    %c3_i32_95 = arith.constant 3 : i32
    %c0_96 = arith.constant 0 : index
    %c0_97 = arith.constant 0 : index
    %305 = vector.load %arg4[%c0_96, %c0_97] : memref<32x128xf32, #tpu.memory_space<vmem>>, vector<32x128xf32>
    %cst_98 = arith.constant dense<0.000000e+00> : vector<8x128xf32>
    %306 = tpu.matmul %271, %305, %cst_98 {dimension_numbers = #tpu.dot_dimension_numbers<[1], [0], [0], [1], [0, 0, 1, 1], [], []>} : vector<8x32xf32>, vector<32x128xf32>, vector<8x128xf32> -> vector<8x128xf32>
    %307 = arith.addf %304, %306 : vector<8x128xf32>
    %308 = vector.broadcast %4 : vector<1x128xf32> to vector<8x128xf32>
    %309 = arith.addf %307, %308 : vector<8x128xf32>
    %310 = arith.negf %309 : vector<8x128xf32>
    %311 = math.exp %310 : vector<8x128xf32>
    %cst_99 = arith.constant 1.000000e+00 : f32
    %312 = vector.broadcast %cst_99 : f32 to vector<8x128xf32>
    %313 = arith.addf %312, %311 : vector<8x128xf32>
    %314 = arith.divf %312, %313 : vector<8x128xf32>
    %315 = math.tanh %309 : vector<8x128xf32>
    %316 = arith.select %12, %315, %314 : vector<8x128xi1>, vector<8x128xf32>
    %317 = vector.extract_strided_slice %316 {offsets = [0, 0], sizes = [8, 32], strides = [1, 1]} : vector<8x128xf32> to vector<8x32xf32>
    %318 = vector.extract_strided_slice %316 {offsets = [0, 32], sizes = [8, 32], strides = [1, 1]} : vector<8x128xf32> to vector<8x32xf32>
    %319 = vector.extract_strided_slice %316 {offsets = [0, 64], sizes = [8, 32], strides = [1, 1]} : vector<8x128xf32> to vector<8x32xf32>
    %320 = vector.extract_strided_slice %316 {offsets = [0, 96], sizes = [8, 32], strides = [1, 1]} : vector<8x128xf32> to vector<8x32xf32>
    %321 = arith.mulf %318, %269 : vector<8x32xf32>
    %322 = arith.mulf %317, %319 : vector<8x32xf32>
    %323 = arith.addf %321, %322 : vector<8x32xf32>
    %324 = math.tanh %323 : vector<8x32xf32>
    %325 = arith.mulf %320, %324 : vector<8x32xf32>
    %cst_100 = arith.constant dense<0.000000e+00> : vector<8x128xf32>
    %326 = tpu.matmul %325, %5, %cst_100 {dimension_numbers = #tpu.dot_dimension_numbers<[1], [0], [0], [1], [0, 0, 1, 1], [], []>} : vector<8x32xf32>, vector<32x128xf32>, vector<8x128xf32> -> vector<8x128xf32>
    %327 = vector.broadcast %6 : vector<1x128xf32> to vector<8x128xf32>
    %328 = arith.addf %326, %327 : vector<8x128xf32>
    %329 = arith.index_cast %c3_i32_95 : i32 to index
    %c0_101 = arith.constant 0 : index
    %c0_102 = arith.constant 0 : index
    %330 = vector.load %arg9[%329, %c0_101, %c0_102] : memref<8x8x128xf32, #tpu.memory_space<vmem>>, vector<1x8x128xf32>
    %331 = vector.shape_cast %330 : vector<1x8x128xf32> to vector<8x128xf32>
    %332 = vector.shape_cast %328 : vector<8x128xf32> to vector<1x8x128xf32>
    tpu.vector_store %arg9[%329, %c0_101, %c0_102], %332 {strides = array<i32>} : memref<8x8x128xf32, #tpu.memory_space<vmem>>, vector<1x8x128xf32>,
    %cst_103 = arith.constant dense<0xFF800000> : vector<8xf32>
    %333 = vector.multi_reduction <maximumf>, %328, %cst_103 [1] : vector<8x128xf32> to vector<8xf32>
    %334 = vector.shape_cast %333 : vector<8xf32> to vector<8x1xf32>
    %335 = vector.broadcast %334 : vector<8x1xf32> to vector<8x128xf32>
    %336 = arith.cmpf oge, %328, %335 : vector<8x128xf32>
    %cst_104 = arith.constant 1.280000e+02 : f32
    %337 = vector.broadcast %cst_104 : f32 to vector<8x128xf32>
    %338 = arith.select %336, %14, %337 : vector<8x128xi1>, vector<8x128xf32>
    %cst_105 = arith.constant dense<0x7F800000> : vector<8xf32>
    %339 = vector.multi_reduction <minimumf>, %338, %cst_105 [1] : vector<8x128xf32> to vector<8xf32>
    %340 = vector.shape_cast %339 : vector<8xf32> to vector<8x1xf32>
    %341 = vector.broadcast %340 : vector<8x1xf32> to vector<8x32xf32>
    %342 = arith.cmpf oeq, %16, %341 : vector<8x32xf32>
    %343 = arith.extui %342 : vector<8x32xi1> to vector<8x32xi32>
    %344 = arith.sitofp %343 : vector<8x32xi32> to vector<8x32xf32>
    %c0_106 = arith.constant 0 : index
    %c0_107 = arith.constant 0 : index
    %345 = vector.load %arg6[%c0_106, %c0_107] : memref<32x128xf32, #tpu.memory_space<vmem>>, vector<32x128xf32>
    %cst_108 = arith.constant dense<0.000000e+00> : vector<8x128xf32>
    %346 = tpu.matmul %344, %345, %cst_108 {dimension_numbers = #tpu.dot_dimension_numbers<[1], [0], [0], [1], [0, 0, 1, 1], [], []>} : vector<8x32xf32>, vector<32x128xf32>, vector<8x128xf32> -> vector<8x128xf32>
    %347 = arith.index_cast %c3_i32_95 : i32 to index
    %348 = memref.load %arg0[%347] : memref<8xi32, #tpu.memory_space<smem>>
    %349 = arith.sitofp %348 : i32 to f32
    %350 = arith.index_cast %c3_i32_95 : i32 to index
    %c0_109 = arith.constant 0 : index
    %c0_110 = arith.constant 0 : index
    %351 = vector.load %arg2[%350, %c0_109, %c0_110] : memref<8x8x128xf32, #tpu.memory_space<vmem>>, vector<1x8x128xf32>
    %352 = vector.shape_cast %351 : vector<1x8x128xf32> to vector<8x128xf32>
    %353 = vector.broadcast %349 : f32 to vector<8x128xf32>
    %354 = arith.mulf %353, %352 : vector<8x128xf32>
    %cst_111 = arith.constant 1.000000e+00 : f32
    %355 = arith.subf %cst_111, %349 : f32
    %356 = vector.broadcast %355 : f32 to vector<8x128xf32>
    %357 = arith.mulf %356, %346 : vector<8x128xf32>
    %358 = arith.addf %354, %357 : vector<8x128xf32>
    %c4_i32_112 = arith.constant 4 : i32
    %c0_113 = arith.constant 0 : index
    %c0_114 = arith.constant 0 : index
    %359 = vector.load %arg4[%c0_113, %c0_114] : memref<32x128xf32, #tpu.memory_space<vmem>>, vector<32x128xf32>
    %cst_115 = arith.constant dense<0.000000e+00> : vector<8x128xf32>
    %360 = tpu.matmul %325, %359, %cst_115 {dimension_numbers = #tpu.dot_dimension_numbers<[1], [0], [0], [1], [0, 0, 1, 1], [], []>} : vector<8x32xf32>, vector<32x128xf32>, vector<8x128xf32> -> vector<8x128xf32>
    %361 = arith.addf %358, %360 : vector<8x128xf32>
    %362 = vector.broadcast %4 : vector<1x128xf32> to vector<8x128xf32>
    %363 = arith.addf %361, %362 : vector<8x128xf32>
    %364 = arith.negf %363 : vector<8x128xf32>
    %365 = math.exp %364 : vector<8x128xf32>
    %cst_116 = arith.constant 1.000000e+00 : f32
    %366 = vector.broadcast %cst_116 : f32 to vector<8x128xf32>
    %367 = arith.addf %366, %365 : vector<8x128xf32>
    %368 = arith.divf %366, %367 : vector<8x128xf32>
    %369 = math.tanh %363 : vector<8x128xf32>
    %370 = arith.select %12, %369, %368 : vector<8x128xi1>, vector<8x128xf32>
    %371 = vector.extract_strided_slice %370 {offsets = [0, 0], sizes = [8, 32], strides = [1, 1]} : vector<8x128xf32> to vector<8x32xf32>
    %372 = vector.extract_strided_slice %370 {offsets = [0, 32], sizes = [8, 32], strides = [1, 1]} : vector<8x128xf32> to vector<8x32xf32>
    %373 = vector.extract_strided_slice %370 {offsets = [0, 64], sizes = [8, 32], strides = [1, 1]} : vector<8x128xf32> to vector<8x32xf32>
    %374 = vector.extract_strided_slice %370 {offsets = [0, 96], sizes = [8, 32], strides = [1, 1]} : vector<8x128xf32> to vector<8x32xf32>
    %375 = arith.mulf %372, %323 : vector<8x32xf32>
    %376 = arith.mulf %371, %373 : vector<8x32xf32>
    %377 = arith.addf %375, %376 : vector<8x32xf32>
    %378 = math.tanh %377 : vector<8x32xf32>
    %379 = arith.mulf %374, %378 : vector<8x32xf32>
    %cst_117 = arith.constant dense<0.000000e+00> : vector<8x128xf32>
    %380 = tpu.matmul %379, %5, %cst_117 {dimension_numbers = #tpu.dot_dimension_numbers<[1], [0], [0], [1], [0, 0, 1, 1], [], []>} : vector<8x32xf32>, vector<32x128xf32>, vector<8x128xf32> -> vector<8x128xf32>
    %381 = vector.broadcast %6 : vector<1x128xf32> to vector<8x128xf32>
    %382 = arith.addf %380, %381 : vector<8x128xf32>
    %383 = arith.index_cast %c4_i32_112 : i32 to index
    %c0_118 = arith.constant 0 : index
    %c0_119 = arith.constant 0 : index
    %384 = vector.load %arg9[%383, %c0_118, %c0_119] : memref<8x8x128xf32, #tpu.memory_space<vmem>>, vector<1x8x128xf32>
    %385 = vector.shape_cast %384 : vector<1x8x128xf32> to vector<8x128xf32>
    %386 = vector.shape_cast %382 : vector<8x128xf32> to vector<1x8x128xf32>
    tpu.vector_store %arg9[%383, %c0_118, %c0_119], %386 {strides = array<i32>} : memref<8x8x128xf32, #tpu.memory_space<vmem>>, vector<1x8x128xf32>,
    %cst_120 = arith.constant dense<0xFF800000> : vector<8xf32>
    %387 = vector.multi_reduction <maximumf>, %382, %cst_120 [1] : vector<8x128xf32> to vector<8xf32>
    %388 = vector.shape_cast %387 : vector<8xf32> to vector<8x1xf32>
    %389 = vector.broadcast %388 : vector<8x1xf32> to vector<8x128xf32>
    %390 = arith.cmpf oge, %382, %389 : vector<8x128xf32>
    %cst_121 = arith.constant 1.280000e+02 : f32
    %391 = vector.broadcast %cst_121 : f32 to vector<8x128xf32>
    %392 = arith.select %390, %14, %391 : vector<8x128xi1>, vector<8x128xf32>
    %cst_122 = arith.constant dense<0x7F800000> : vector<8xf32>
    %393 = vector.multi_reduction <minimumf>, %392, %cst_122 [1] : vector<8x128xf32> to vector<8xf32>
    %394 = vector.shape_cast %393 : vector<8xf32> to vector<8x1xf32>
    %395 = vector.broadcast %394 : vector<8x1xf32> to vector<8x32xf32>
    %396 = arith.cmpf oeq, %16, %395 : vector<8x32xf32>
    %397 = arith.extui %396 : vector<8x32xi1> to vector<8x32xi32>
    %398 = arith.sitofp %397 : vector<8x32xi32> to vector<8x32xf32>
    %c0_123 = arith.constant 0 : index
    %c0_124 = arith.constant 0 : index
    %399 = vector.load %arg6[%c0_123, %c0_124] : memref<32x128xf32, #tpu.memory_space<vmem>>, vector<32x128xf32>
    %cst_125 = arith.constant dense<0.000000e+00> : vector<8x128xf32>
    %400 = tpu.matmul %398, %399, %cst_125 {dimension_numbers = #tpu.dot_dimension_numbers<[1], [0], [0], [1], [0, 0, 1, 1], [], []>} : vector<8x32xf32>, vector<32x128xf32>, vector<8x128xf32> -> vector<8x128xf32>
    %401 = arith.index_cast %c4_i32_112 : i32 to index
    %402 = memref.load %arg0[%401] : memref<8xi32, #tpu.memory_space<smem>>
    %403 = arith.sitofp %402 : i32 to f32
    %404 = arith.index_cast %c4_i32_112 : i32 to index
    %c0_126 = arith.constant 0 : index
    %c0_127 = arith.constant 0 : index
    %405 = vector.load %arg2[%404, %c0_126, %c0_127] : memref<8x8x128xf32, #tpu.memory_space<vmem>>, vector<1x8x128xf32>
    %406 = vector.shape_cast %405 : vector<1x8x128xf32> to vector<8x128xf32>
    %407 = vector.broadcast %403 : f32 to vector<8x128xf32>
    %408 = arith.mulf %407, %406 : vector<8x128xf32>
    %cst_128 = arith.constant 1.000000e+00 : f32
    %409 = arith.subf %cst_128, %403 : f32
    %410 = vector.broadcast %409 : f32 to vector<8x128xf32>
    %411 = arith.mulf %410, %400 : vector<8x128xf32>
    %412 = arith.addf %408, %411 : vector<8x128xf32>
    %c5_i32_129 = arith.constant 5 : i32
    %c0_130 = arith.constant 0 : index
    %c0_131 = arith.constant 0 : index
    %413 = vector.load %arg4[%c0_130, %c0_131] : memref<32x128xf32, #tpu.memory_space<vmem>>, vector<32x128xf32>
    %cst_132 = arith.constant dense<0.000000e+00> : vector<8x128xf32>
    %414 = tpu.matmul %379, %413, %cst_132 {dimension_numbers = #tpu.dot_dimension_numbers<[1], [0], [0], [1], [0, 0, 1, 1], [], []>} : vector<8x32xf32>, vector<32x128xf32>, vector<8x128xf32> -> vector<8x128xf32>
    %415 = arith.addf %412, %414 : vector<8x128xf32>
    %416 = vector.broadcast %4 : vector<1x128xf32> to vector<8x128xf32>
    %417 = arith.addf %415, %416 : vector<8x128xf32>
    %418 = arith.negf %417 : vector<8x128xf32>
    %419 = math.exp %418 : vector<8x128xf32>
    %cst_133 = arith.constant 1.000000e+00 : f32
    %420 = vector.broadcast %cst_133 : f32 to vector<8x128xf32>
    %421 = arith.addf %420, %419 : vector<8x128xf32>
    %422 = arith.divf %420, %421 : vector<8x128xf32>
    %423 = math.tanh %417 : vector<8x128xf32>
    %424 = arith.select %12, %423, %422 : vector<8x128xi1>, vector<8x128xf32>
    %425 = vector.extract_strided_slice %424 {offsets = [0, 0], sizes = [8, 32], strides = [1, 1]} : vector<8x128xf32> to vector<8x32xf32>
    %426 = vector.extract_strided_slice %424 {offsets = [0, 32], sizes = [8, 32], strides = [1, 1]} : vector<8x128xf32> to vector<8x32xf32>
    %427 = vector.extract_strided_slice %424 {offsets = [0, 64], sizes = [8, 32], strides = [1, 1]} : vector<8x128xf32> to vector<8x32xf32>
    %428 = vector.extract_strided_slice %424 {offsets = [0, 96], sizes = [8, 32], strides = [1, 1]} : vector<8x128xf32> to vector<8x32xf32>
    %429 = arith.mulf %426, %377 : vector<8x32xf32>
    %430 = arith.mulf %425, %427 : vector<8x32xf32>
    %431 = arith.addf %429, %430 : vector<8x32xf32>
    %432 = math.tanh %431 : vector<8x32xf32>
    %433 = arith.mulf %428, %432 : vector<8x32xf32>
    %cst_134 = arith.constant dense<0.000000e+00> : vector<8x128xf32>
    %434 = tpu.matmul %433, %5, %cst_134 {dimension_numbers = #tpu.dot_dimension_numbers<[1], [0], [0], [1], [0, 0, 1, 1], [], []>} : vector<8x32xf32>, vector<32x128xf32>, vector<8x128xf32> -> vector<8x128xf32>
    %435 = vector.broadcast %6 : vector<1x128xf32> to vector<8x128xf32>
    %436 = arith.addf %434, %435 : vector<8x128xf32>
    %437 = arith.index_cast %c5_i32_129 : i32 to index
    %c0_135 = arith.constant 0 : index
    %c0_136 = arith.constant 0 : index
    %438 = vector.load %arg9[%437, %c0_135, %c0_136] : memref<8x8x128xf32, #tpu.memory_space<vmem>>, vector<1x8x128xf32>
    %439 = vector.shape_cast %438 : vector<1x8x128xf32> to vector<8x128xf32>
    %440 = vector.shape_cast %436 : vector<8x128xf32> to vector<1x8x128xf32>
    tpu.vector_store %arg9[%437, %c0_135, %c0_136], %440 {strides = array<i32>} : memref<8x8x128xf32, #tpu.memory_space<vmem>>, vector<1x8x128xf32>,
    %cst_137 = arith.constant dense<0xFF800000> : vector<8xf32>
    %441 = vector.multi_reduction <maximumf>, %436, %cst_137 [1] : vector<8x128xf32> to vector<8xf32>
    %442 = vector.shape_cast %441 : vector<8xf32> to vector<8x1xf32>
    %443 = vector.broadcast %442 : vector<8x1xf32> to vector<8x128xf32>
    %444 = arith.cmpf oge, %436, %443 : vector<8x128xf32>
    %cst_138 = arith.constant 1.280000e+02 : f32
    %445 = vector.broadcast %cst_138 : f32 to vector<8x128xf32>
    %446 = arith.select %444, %14, %445 : vector<8x128xi1>, vector<8x128xf32>
    %cst_139 = arith.constant dense<0x7F800000> : vector<8xf32>
    %447 = vector.multi_reduction <minimumf>, %446, %cst_139 [1] : vector<8x128xf32> to vector<8xf32>
    %448 = vector.shape_cast %447 : vector<8xf32> to vector<8x1xf32>
    %449 = vector.broadcast %448 : vector<8x1xf32> to vector<8x32xf32>
    %450 = arith.cmpf oeq, %16, %449 : vector<8x32xf32>
    %451 = arith.extui %450 : vector<8x32xi1> to vector<8x32xi32>
    %452 = arith.sitofp %451 : vector<8x32xi32> to vector<8x32xf32>
    %c0_140 = arith.constant 0 : index
    %c0_141 = arith.constant 0 : index
    %453 = vector.load %arg6[%c0_140, %c0_141] : memref<32x128xf32, #tpu.memory_space<vmem>>, vector<32x128xf32>
    %cst_142 = arith.constant dense<0.000000e+00> : vector<8x128xf32>
    %454 = tpu.matmul %452, %453, %cst_142 {dimension_numbers = #tpu.dot_dimension_numbers<[1], [0], [0], [1], [0, 0, 1, 1], [], []>} : vector<8x32xf32>, vector<32x128xf32>, vector<8x128xf32> -> vector<8x128xf32>
    %455 = arith.index_cast %c5_i32_129 : i32 to index
    %456 = memref.load %arg0[%455] : memref<8xi32, #tpu.memory_space<smem>>
    %457 = arith.sitofp %456 : i32 to f32
    %458 = arith.index_cast %c5_i32_129 : i32 to index
    %c0_143 = arith.constant 0 : index
    %c0_144 = arith.constant 0 : index
    %459 = vector.load %arg2[%458, %c0_143, %c0_144] : memref<8x8x128xf32, #tpu.memory_space<vmem>>, vector<1x8x128xf32>
    %460 = vector.shape_cast %459 : vector<1x8x128xf32> to vector<8x128xf32>
    %461 = vector.broadcast %457 : f32 to vector<8x128xf32>
    %462 = arith.mulf %461, %460 : vector<8x128xf32>
    %cst_145 = arith.constant 1.000000e+00 : f32
    %463 = arith.subf %cst_145, %457 : f32
    %464 = vector.broadcast %463 : f32 to vector<8x128xf32>
    %465 = arith.mulf %464, %454 : vector<8x128xf32>
    %466 = arith.addf %462, %465 : vector<8x128xf32>
    %c6_i32_146 = arith.constant 6 : i32
    %c0_147 = arith.constant 0 : index
    %c0_148 = arith.constant 0 : index
    %467 = vector.load %arg4[%c0_147, %c0_148] : memref<32x128xf32, #tpu.memory_space<vmem>>, vector<32x128xf32>
    %cst_149 = arith.constant dense<0.000000e+00> : vector<8x128xf32>
    %468 = tpu.matmul %433, %467, %cst_149 {dimension_numbers = #tpu.dot_dimension_numbers<[1], [0], [0], [1], [0, 0, 1, 1], [], []>} : vector<8x32xf32>, vector<32x128xf32>, vector<8x128xf32> -> vector<8x128xf32>
    %469 = arith.addf %466, %468 : vector<8x128xf32>
    %470 = vector.broadcast %4 : vector<1x128xf32> to vector<8x128xf32>
    %471 = arith.addf %469, %470 : vector<8x128xf32>
    %472 = arith.negf %471 : vector<8x128xf32>
    %473 = math.exp %472 : vector<8x128xf32>
    %cst_150 = arith.constant 1.000000e+00 : f32
    %474 = vector.broadcast %cst_150 : f32 to vector<8x128xf32>
    %475 = arith.addf %474, %473 : vector<8x128xf32>
    %476 = arith.divf %474, %475 : vector<8x128xf32>
    %477 = math.tanh %471 : vector<8x128xf32>
    %478 = arith.select %12, %477, %476 : vector<8x128xi1>, vector<8x128xf32>
    %479 = vector.extract_strided_slice %478 {offsets = [0, 0], sizes = [8, 32], strides = [1, 1]} : vector<8x128xf32> to vector<8x32xf32>
    %480 = vector.extract_strided_slice %478 {offsets = [0, 32], sizes = [8, 32], strides = [1, 1]} : vector<8x128xf32> to vector<8x32xf32>
    %481 = vector.extract_strided_slice %478 {offsets = [0, 64], sizes = [8, 32], strides = [1, 1]} : vector<8x128xf32> to vector<8x32xf32>
    %482 = vector.extract_strided_slice %478 {offsets = [0, 96], sizes = [8, 32], strides = [1, 1]} : vector<8x128xf32> to vector<8x32xf32>
    %483 = arith.mulf %480, %431 : vector<8x32xf32>
    %484 = arith.mulf %479, %481 : vector<8x32xf32>
    %485 = arith.addf %483, %484 : vector<8x32xf32>
    %486 = math.tanh %485 : vector<8x32xf32>
    %487 = arith.mulf %482, %486 : vector<8x32xf32>
    %cst_151 = arith.constant dense<0.000000e+00> : vector<8x128xf32>
    %488 = tpu.matmul %487, %5, %cst_151 {dimension_numbers = #tpu.dot_dimension_numbers<[1], [0], [0], [1], [0, 0, 1, 1], [], []>} : vector<8x32xf32>, vector<32x128xf32>, vector<8x128xf32> -> vector<8x128xf32>
    %489 = vector.broadcast %6 : vector<1x128xf32> to vector<8x128xf32>
    %490 = arith.addf %488, %489 : vector<8x128xf32>
    %491 = arith.index_cast %c6_i32_146 : i32 to index
    %c0_152 = arith.constant 0 : index
    %c0_153 = arith.constant 0 : index
    %492 = vector.load %arg9[%491, %c0_152, %c0_153] : memref<8x8x128xf32, #tpu.memory_space<vmem>>, vector<1x8x128xf32>
    %493 = vector.shape_cast %492 : vector<1x8x128xf32> to vector<8x128xf32>
    %494 = vector.shape_cast %490 : vector<8x128xf32> to vector<1x8x128xf32>
    tpu.vector_store %arg9[%491, %c0_152, %c0_153], %494 {strides = array<i32>} : memref<8x8x128xf32, #tpu.memory_space<vmem>>, vector<1x8x128xf32>,
    %cst_154 = arith.constant dense<0xFF800000> : vector<8xf32>
    %495 = vector.multi_reduction <maximumf>, %490, %cst_154 [1] : vector<8x128xf32> to vector<8xf32>
    %496 = vector.shape_cast %495 : vector<8xf32> to vector<8x1xf32>
    %497 = vector.broadcast %496 : vector<8x1xf32> to vector<8x128xf32>
    %498 = arith.cmpf oge, %490, %497 : vector<8x128xf32>
    %cst_155 = arith.constant 1.280000e+02 : f32
    %499 = vector.broadcast %cst_155 : f32 to vector<8x128xf32>
    %500 = arith.select %498, %14, %499 : vector<8x128xi1>, vector<8x128xf32>
    %cst_156 = arith.constant dense<0x7F800000> : vector<8xf32>
    %501 = vector.multi_reduction <minimumf>, %500, %cst_156 [1] : vector<8x128xf32> to vector<8xf32>
    %502 = vector.shape_cast %501 : vector<8xf32> to vector<8x1xf32>
    %503 = vector.broadcast %502 : vector<8x1xf32> to vector<8x32xf32>
    %504 = arith.cmpf oeq, %16, %503 : vector<8x32xf32>
    %505 = arith.extui %504 : vector<8x32xi1> to vector<8x32xi32>
    %506 = arith.sitofp %505 : vector<8x32xi32> to vector<8x32xf32>
    %c0_157 = arith.constant 0 : index
    %c0_158 = arith.constant 0 : index
    %507 = vector.load %arg6[%c0_157, %c0_158] : memref<32x128xf32, #tpu.memory_space<vmem>>, vector<32x128xf32>
    %cst_159 = arith.constant dense<0.000000e+00> : vector<8x128xf32>
    %508 = tpu.matmul %506, %507, %cst_159 {dimension_numbers = #tpu.dot_dimension_numbers<[1], [0], [0], [1], [0, 0, 1, 1], [], []>} : vector<8x32xf32>, vector<32x128xf32>, vector<8x128xf32> -> vector<8x128xf32>
    %509 = arith.index_cast %c6_i32_146 : i32 to index
    %510 = memref.load %arg0[%509] : memref<8xi32, #tpu.memory_space<smem>>
    %511 = arith.sitofp %510 : i32 to f32
    %512 = arith.index_cast %c6_i32_146 : i32 to index
    %c0_160 = arith.constant 0 : index
    %c0_161 = arith.constant 0 : index
    %513 = vector.load %arg2[%512, %c0_160, %c0_161] : memref<8x8x128xf32, #tpu.memory_space<vmem>>, vector<1x8x128xf32>
    %514 = vector.shape_cast %513 : vector<1x8x128xf32> to vector<8x128xf32>
    %515 = vector.broadcast %511 : f32 to vector<8x128xf32>
    %516 = arith.mulf %515, %514 : vector<8x128xf32>
    %cst_162 = arith.constant 1.000000e+00 : f32
    %517 = arith.subf %cst_162, %511 : f32
    %518 = vector.broadcast %517 : f32 to vector<8x128xf32>
    %519 = arith.mulf %518, %508 : vector<8x128xf32>
    %520 = arith.addf %516, %519 : vector<8x128xf32>
    %c7_i32_163 = arith.constant 7 : i32
    %c0_164 = arith.constant 0 : index
    %c0_165 = arith.constant 0 : index
    %521 = vector.load %arg4[%c0_164, %c0_165] : memref<32x128xf32, #tpu.memory_space<vmem>>, vector<32x128xf32>
    %cst_166 = arith.constant dense<0.000000e+00> : vector<8x128xf32>
    %522 = tpu.matmul %487, %521, %cst_166 {dimension_numbers = #tpu.dot_dimension_numbers<[1], [0], [0], [1], [0, 0, 1, 1], [], []>} : vector<8x32xf32>, vector<32x128xf32>, vector<8x128xf32> -> vector<8x128xf32>
    %523 = arith.addf %520, %522 : vector<8x128xf32>
    %524 = vector.broadcast %4 : vector<1x128xf32> to vector<8x128xf32>
    %525 = arith.addf %523, %524 : vector<8x128xf32>
    %526 = arith.negf %525 : vector<8x128xf32>
    %527 = math.exp %526 : vector<8x128xf32>
    %cst_167 = arith.constant 1.000000e+00 : f32
    %528 = vector.broadcast %cst_167 : f32 to vector<8x128xf32>
    %529 = arith.addf %528, %527 : vector<8x128xf32>
    %530 = arith.divf %528, %529 : vector<8x128xf32>
    %531 = math.tanh %525 : vector<8x128xf32>
    %532 = arith.select %12, %531, %530 : vector<8x128xi1>, vector<8x128xf32>
    %533 = vector.extract_strided_slice %532 {offsets = [0, 0], sizes = [8, 32], strides = [1, 1]} : vector<8x128xf32> to vector<8x32xf32>
    %534 = vector.extract_strided_slice %532 {offsets = [0, 32], sizes = [8, 32], strides = [1, 1]} : vector<8x128xf32> to vector<8x32xf32>
    %535 = vector.extract_strided_slice %532 {offsets = [0, 64], sizes = [8, 32], strides = [1, 1]} : vector<8x128xf32> to vector<8x32xf32>
    %536 = vector.extract_strided_slice %532 {offsets = [0, 96], sizes = [8, 32], strides = [1, 1]} : vector<8x128xf32> to vector<8x32xf32>
    %537 = arith.mulf %534, %485 : vector<8x32xf32>
    %538 = arith.mulf %533, %535 : vector<8x32xf32>
    %539 = arith.addf %537, %538 : vector<8x32xf32>
    %540 = math.tanh %539 : vector<8x32xf32>
    %541 = arith.mulf %536, %540 : vector<8x32xf32>
    %cst_168 = arith.constant dense<0.000000e+00> : vector<8x128xf32>
    %542 = tpu.matmul %541, %5, %cst_168 {dimension_numbers = #tpu.dot_dimension_numbers<[1], [0], [0], [1], [0, 0, 1, 1], [], []>} : vector<8x32xf32>, vector<32x128xf32>, vector<8x128xf32> -> vector<8x128xf32>
    %543 = vector.broadcast %6 : vector<1x128xf32> to vector<8x128xf32>
    %544 = arith.addf %542, %543 : vector<8x128xf32>
    %545 = arith.index_cast %c7_i32_163 : i32 to index
    %c0_169 = arith.constant 0 : index
    %c0_170 = arith.constant 0 : index
    %546 = vector.load %arg9[%545, %c0_169, %c0_170] : memref<8x8x128xf32, #tpu.memory_space<vmem>>, vector<1x8x128xf32>
    %547 = vector.shape_cast %546 : vector<1x8x128xf32> to vector<8x128xf32>
    %548 = vector.shape_cast %544 : vector<8x128xf32> to vector<1x8x128xf32>
    tpu.vector_store %arg9[%545, %c0_169, %c0_170], %548 {strides = array<i32>} : memref<8x8x128xf32, #tpu.memory_space<vmem>>, vector<1x8x128xf32>,
    %cst_171 = arith.constant dense<0xFF800000> : vector<8xf32>
    %549 = vector.multi_reduction <maximumf>, %544, %cst_171 [1] : vector<8x128xf32> to vector<8xf32>
    %550 = vector.shape_cast %549 : vector<8xf32> to vector<8x1xf32>
    %551 = vector.broadcast %550 : vector<8x1xf32> to vector<8x128xf32>
    %552 = arith.cmpf oge, %544, %551 : vector<8x128xf32>
    %cst_172 = arith.constant 1.280000e+02 : f32
    %553 = vector.broadcast %cst_172 : f32 to vector<8x128xf32>
    %554 = arith.select %552, %14, %553 : vector<8x128xi1>, vector<8x128xf32>
    %cst_173 = arith.constant dense<0x7F800000> : vector<8xf32>
    %555 = vector.multi_reduction <minimumf>, %554, %cst_173 [1] : vector<8x128xf32> to vector<8xf32>
    %556 = vector.shape_cast %555 : vector<8xf32> to vector<8x1xf32>
    %557 = vector.broadcast %556 : vector<8x1xf32> to vector<8x32xf32>
    %558 = arith.cmpf oeq, %16, %557 : vector<8x32xf32>
    %559 = arith.extui %558 : vector<8x32xi1> to vector<8x32xi32>
    %560 = arith.sitofp %559 : vector<8x32xi32> to vector<8x32xf32>
    %c0_174 = arith.constant 0 : index
    %c0_175 = arith.constant 0 : index
    %561 = vector.load %arg6[%c0_174, %c0_175] : memref<32x128xf32, #tpu.memory_space<vmem>>, vector<32x128xf32>
    %cst_176 = arith.constant dense<0.000000e+00> : vector<8x128xf32>
    %562 = tpu.matmul %560, %561, %cst_176 {dimension_numbers = #tpu.dot_dimension_numbers<[1], [0], [0], [1], [0, 0, 1, 1], [], []>} : vector<8x32xf32>, vector<32x128xf32>, vector<8x128xf32> -> vector<8x128xf32>
    %563 = arith.index_cast %c7_i32_163 : i32 to index
    %564 = memref.load %arg0[%563] : memref<8xi32, #tpu.memory_space<smem>>
    %565 = arith.sitofp %564 : i32 to f32
    %566 = arith.index_cast %c7_i32_163 : i32 to index
    %c0_177 = arith.constant 0 : index
    %c0_178 = arith.constant 0 : index
    %567 = vector.load %arg2[%566, %c0_177, %c0_178] : memref<8x8x128xf32, #tpu.memory_space<vmem>>, vector<1x8x128xf32>
    %568 = vector.shape_cast %567 : vector<1x8x128xf32> to vector<8x128xf32>
    %569 = vector.broadcast %565 : f32 to vector<8x128xf32>
    %570 = arith.mulf %569, %568 : vector<8x128xf32>
    %cst_179 = arith.constant 1.000000e+00 : f32
    %571 = arith.subf %cst_179, %565 : f32
    %572 = vector.broadcast %571 : f32 to vector<8x128xf32>
    %573 = arith.mulf %572, %562 : vector<8x128xf32>
    %574 = arith.addf %570, %573 : vector<8x128xf32>
    %c7_i32_180 = arith.constant 7 : i32
    return
  }
}

</mosaic_0001>

<llo_original>
// kernel: _seq2seq_forward.1
$region0: #{_seq2seq_forward.1}
  #allocation0 [shape = 'u32[]', space=smem, size = 0x4, offset = 0x4, fixed_abs, tag = 'smem constant byte address 0x4 - core index']
  #allocation1 [shape = 'u32[144,128]{1,0:T(1,128)}', space=vmem, size = 0x12000, scoped, tag = 'internal scratch']
  %s0 = inlined_call_operand.vmem [shape: s32[8], index: 0, kind: input, shape index: {}]
  %s1 = inlined_call_operand.vmem [shape: f32[8,8,128], index: 1, kind: input, shape index: {}]
  %s2 = inlined_call_operand.vmem [shape: f32[8,8,128], index: 2, kind: input, shape index: {}]
  %s3 = inlined_call_operand.vmem [shape: f32[32,128], index: 3, kind: input, shape index: {}]
  %s4 = inlined_call_operand.vmem [shape: f32[32,128], index: 4, kind: input, shape index: {}]
  %s5 = inlined_call_operand.vmem [shape: f32[1,128], index: 5, kind: input, shape index: {}]
  %s6 = inlined_call_operand.vmem [shape: f32[32,128], index: 6, kind: input, shape index: {}]
  %s7 = inlined_call_operand.vmem [shape: f32[32,128], index: 7, kind: input, shape index: {}]
  %s8 = inlined_call_operand.vmem [shape: f32[1,128], index: 8, kind: input, shape index: {}]
  %s9 = inlined_call_operand.hbm [shape: f32[8,8,128], index: 9, kind: output, shape index: {}]
  %s10 = sld [smem:[#allocation0]]
  $region50: #{_seq2seq_forward.1} parent=0
    _
  %s12 = ssub.s32 1, %s10
  %s13 = scalar_select 0, %s12, %s10
  $region1: #{_seq2seq_forward.1} parent=0
    #allocation2 [shape = 'u8[512]{0}', space=smem, size = 0x200, scoped, tag = 'input window, operand 0, single buffered']
    #allocation3 [shape = 's32[1]{0}', space=sflag, size = 0x4, scoped, tag = 'scoped memory for _seq2seq_forward.1']
    #allocation4 [shape = 's32[1]{0}', space=sflag, size = 0x4, scoped, tag = 'scoped memory for _seq2seq_forward.1']
    #allocation5 [shape = 'u8[32768]{0}', space=vmem, size = 0x8000, scoped, tag = 'output window, operand 0, single buffered']
    %14 = vsyncpa [#allocation4], 0
    %15 = vsyncpa [#allocation3], 0
    // Predicated region
    $region2: #{_seq2seq_forward.1} parent=1 // pred_check
      _
    $region3: #{_seq2seq_forward.1} parent=1 // pred_check_branch
      %17 = sbr.rel (0) target = $region5
    $region4: #{_seq2seq_forward.1} parent=1 // pred_region
      %s19 = ssub.s32 16, 16
      %20 = vsyncadd [#allocation4], %s19
      %s22 = sshll.u32 %s0, 4
      %s23 = int_to_ptr.vmem [resolvable:$true] %s22
      %25 = dma.vmem_to_smem %s23, 16, [#allocation2], [#allocation4]
    $region5: #{_seq2seq_forward.1} parent=1 // pred_fallthru
      _
    // Predicated region
    $region6: #{_seq2seq_forward.1} parent=1 // pred_check
      _
    $region7: #{_seq2seq_forward.1} parent=1 // pred_check_branch
      %27 = sbr.rel (0) target = $region9
    $region8: #{_seq2seq_forward.1} parent=1 // pred_region
      _
    $region9: #{_seq2seq_forward.1} parent=1 // pred_fallthru
      _
    // Predicated region
    $region10: #{_seq2seq_forward.1} parent=1 // pred_check
      _
    $region11: #{_seq2seq_forward.1} parent=1 // pred_check_branch
      %29 = sbr.rel (0) target = $region13
    $region12: #{_seq2seq_forward.1} parent=1 // pred_region
      _
    $region13: #{_seq2seq_forward.1} parent=1 // pred_fallthru
      _
    // Predicated region
    $region14: #{_seq2seq_forward.1} parent=1 // pred_check
      _
    $region15: #{_seq2seq_forward.1} parent=1 // pred_check_branch
      %31 = sbr.rel (0) target = $region17
    $region16: #{_seq2seq_forward.1} parent=1 // pred_region
      _
    $region17: #{_seq2seq_forward.1} parent=1 // pred_fallthru
      _
    // Predicated region
    $region18: #{_seq2seq_forward.1} parent=1 // pred_check
      _
    $region19: #{_seq2seq_forward.1} parent=1 // pred_check_branch
      %33 = sbr.rel (0) target = $region21
    $region20: #{_seq2seq_forward.1} parent=1 // pred_region
      _
    $region21: #{_seq2seq_forward.1} parent=1 // pred_fallthru
      _
    // Predicated region
    $region22: #{_seq2seq_forward.1} parent=1 // pred_check
      _
    $region23: #{_seq2seq_forward.1} parent=1 // pred_check_branch
      %35 = sbr.rel (0) target = $region25
    $region24: #{_seq2seq_forward.1} parent=1 // pred_region
      _
    $region25: #{_seq2seq_forward.1} parent=1 // pred_fallthru
      _
    // Predicated region
    $region26: #{_seq2seq_forward.1} parent=1 // pred_check
      _
    $region27: #{_seq2seq_forward.1} parent=1 // pred_check_branch
      %37 = sbr.rel (0) target = $region29
    $region28: #{_seq2seq_forward.1} parent=1 // pred_region
      _
    $region29: #{_seq2seq_forward.1} parent=1 // pred_fallthru
      _
    // Predicated region
    $region30: #{_seq2seq_forward.1} parent=1 // pred_check
      _
    $region31: #{_seq2seq_forward.1} parent=1 // pred_check_branch
      %39 = sbr.rel (0) target = $region33
    $region32: #{_seq2seq_forward.1} parent=1 // pred_region
      _
    $region33: #{_seq2seq_forward.1} parent=1 // pred_fallthru
      _
    // Predicated region
    $region34: #{_seq2seq_forward.1} parent=1 // pred_check
      _
    $region35: #{_seq2seq_forward.1} parent=1 // pred_check_branch
      %41 = sbr.rel (0) target = $region37
    $region36: #{_seq2seq_forward.1} parent=1 // pred_region
      _
    $region37: #{_seq2seq_forward.1} parent=1 // pred_fallthru
      _
    // Predicated region
    $region38: #{_seq2seq_forward.1} parent=1 // pred_check
      _
    $region39: #{_seq2seq_forward.1} parent=1 // pred_check_branch
      %43 = sbr.rel (0) target = $region41
    $region40: #{_seq2seq_forward.1} parent=1 // pred_region
      %44 = dma.done [#allocation4], 16
    $region41: #{_seq2seq_forward.1} parent=1 // pred_fallthru
      _
    %45 = sfence
    %46 = vst [vmem:[#allocation5] sm:$0xff] 0.0
    %v47 = vld [vmem:[%s5] sm:$0x1]
    %v48 = vld [vmem:[%s7] sm:$0xff]
    %v49 = vld [vmem:[%s7 + $0x8] sm:$0xff]
    %v50 = vld [vmem:[%s7 + $0x10] sm:$0xff]
    %v51 = vld [vmem:[%s7 + $0x18] sm:$0xff]
    %v52 = vld [vmem:[%s8] sm:$0x1]
    %v53 = vlaneseq
    %v54 = vand.u32 %v53, 127
    %vm55 = vcmp.ge.s32.totalorder %v54, 64
    %vm56 = vcmp.lt.s32.totalorder %v54, 96
    %vm57 = vmand %vm55, %vm56
    %v58 = vcvt.s32.f32 %v54
    %v59 = vld [vmem:[%s1] sm:$0xff]
    %v60 = vld [vmem:[%s3] sm:$0xff]
    %v61 = vld [vmem:[%s3 + $0x8] sm:$0xff]
    %v62 = vld [vmem:[%s3 + $0x10] sm:$0xff]
    %v63 = vld [vmem:[%s3 + $0x18] sm:$0xff]
    %vm64 = vcmask 261120
    %v66 = vsel %vm64, 0.0, 0
    %68 = vmatprep.subr.mxu0 0.0
    %69 = vmatpush1.msra.mxu0 %v60
    %70 = vmatprep.subr.mxu0 0.0
    %71 = vmatpush1.msra.mxu0 %v61
    %72 = vmatprep.subr.mxu0 0.0
    %73 = vmatpush1.msra.mxu0 %v62
    %74 = vmatprep.subr.mxu0 0.0
    %75 = vmatpush1.msra.mxu0 %v63
    %76 = vmatprep.subr.mxu0 0.0
    %77 = vmatpush1.msra.mxu0 0.0
    %78 = vmatprep.subr.mxu0 0.0
    %79 = vmatpush1.msra.mxu0 0.0
    %80 = vmatprep.subr.mxu0 0.0
    %81 = vmatpush1.msra.mxu0 0.0
    %82 = vmatprep.subr.mxu0 0.0
    %83 = vmatpush1.msra.mxu0 0.0
    %84 = vmatprep.subr.mxu0 0.0
    %85 = vmatpush1.msra.mxu0 0.0
    %86 = vmatprep.subr.mxu0 0.0
    %87 = vmatpush1.msra.mxu0 0.0
    %88 = vmatprep.subr.mxu0 0.0
    %89 = vmatpush1.msra.mxu0 0.0
    %90 = vmatprep.subr.mxu0 0.0
    %91 = vmatpush1.msra.mxu0 0.0
    %92 = vmatprep.subr.mxu0 0.0
    %93 = vmatpush1.msra.mxu0 0.0
    %94 = vmatprep.subr.mxu0 0.0
    %95 = vmatpush1.msra.mxu0 0.0
    %96 = vmatprep.subr.mxu0 0.0
    %97 = vmatpush1.msra.mxu0 0.0
    %98 = vmatprep.subr.mxu0 0.0
    %99 = vmatpush1.msra.mxu0 0.0
    %100 = vmatprep.subr.mxu0 0.0
    %101 = vmatpush1.msra.mxu0 0.0
    %102 = vmatprep.subr.mxu0 0.0
    %103 = vmatpush1.msra.mxu0 0.0
    %104 = vmatprep.subr.mxu0 0.0
    %105 = vmatpush1.msra.mxu0 0.0
    %106 = vmatprep.subr.mxu0 0.0
    %107 = vmatpush1.msra.mxu0 0.0
    %108 = vmatprep.subr.mxu0 0.0
    %109 = vmatpush1.msra.mxu0 0.0
    %110 = vmatprep.subr.mxu0 0.0
    %111 = vmatpush1.msra.mxu0 0.0
    %112 = vmatprep.subr.mxu0 0.0
    %113 = vmatpush1.msra.mxu0 0.0
    %114 = vmatprep.subr.mxu0 0.0
    %115 = vmatpush1.msra.mxu0 0.0
    %116 = vmatprep.subr.mxu0 0.0
    %117 = vmatpush1.msra.mxu0 0.0
    %118 = vmatprep.subr.mxu0 0.0
    %119 = vmatpush1.msra.mxu0 0.0
    %120 = vmatprep.subr.mxu0 0.0
    %121 = vmatpush1.msra.mxu0 0.0
    %122 = vmatprep.subr.mxu0 0.0
    %123 = vmatpush1.msra.mxu0 0.0
    %124 = vmatprep.subr.mxu0 0.0
    %125 = vmatpush1.msra.mxu0 0.0
    %126 = vmatprep.subr.mxu0 0.0
    %127 = vmatpush1.msra.mxu0 0.0
    %128 = vmatprep.subr.mxu0 0.0
    %129 = vmatpush1.msra.mxu0 0.0
    %130 = vmatprep.subr.mxu0 0.0
    %131 = vmatpush1.msra.mxu0 0.0
    %132 = vmatprep.mubr.f32.mxu0 0.0
    %133 = vmatmul.mubr.f32.gmra.mrb[0].mxu0 %v66
    %v134 = vpop.f32.mrb[0].mxu0
    %v135 = vadd.f32 0.0, %v134
    %v136 = vpop.f32.mrb[0].mxu0
    %137 = vdwg.mxu0
    %v138 = vadd.f32 %v59, %v135
    %v139 = vxor.u32 %v138, 2147483648
    %v140 = vmul.f32 %v139, 1.442695
    %v141 = vpow.pop %v140
    %v142 = vadd.f32 %v141, 1.0
    %v143 = vrcp.pop %v142
    %v144 = vmul.f32 1.0, %v143
    %v145 = vtanh.pop %v138
    %v146 = vsel %vm57, %v145, %v144
    %v147 = vmul.f32 %v146, 0.0
    %149 = vrot.lane.b32.xlu0 %v146, 64
    %v150 = vpop.permute.xlu0 %149
    %v152 = vmul.f32 %v146, %v150
    %154 = vrot.lane.b32.xlu0 %v152, 32
    %v155 = vpop.permute.xlu0 %154
    %v157 = vadd.f32 %v147, %v155
    %v158 = vtanh.pop %v157
    %160 = vrot.lane.b32.xlu0 %v158, 64
    %v161 = vpop.permute.xlu0 %160
    %v163 = vmul.f32 %v146, %v161
    %s164 = scalar_lea.vmem %s1, 8
    %v165 = vld [vmem:[%s164] sm:$0xff]
    %167 = vrot.lane.b32.xlu0 %v163, 32
    %v168 = vpop.permute.xlu0 %167
    %v169 = vsel %vm64, %v168, 0
    %171 = vmatprep.subr.mxu0 0.0
    %172 = vmatpush1.msra.mxu0 %v60
    %173 = vmatprep.subr.mxu0 0.0
    %174 = vmatpush1.msra.mxu0 %v61
    %175 = vmatprep.subr.mxu0 0.0
    %176 = vmatpush1.msra.mxu0 %v62
    %177 = vmatprep.subr.mxu0 0.0
    %178 = vmatpush1.msra.mxu0 %v63
    %179 = vmatprep.subr.mxu0 0.0
    %180 = vmatpush1.msra.mxu0 0.0
    %181 = vmatprep.subr.mxu0 0.0
    %182 = vmatpush1.msra.mxu0 0.0
    %183 = vmatprep.subr.mxu0 0.0
    %184 = vmatpush1.msra.mxu0 0.0
    %185 = vmatprep.subr.mxu0 0.0
    %186 = vmatpush1.msra.mxu0 0.0
    %187 = vmatprep.subr.mxu0 0.0
    %188 = vmatpush1.msra.mxu0 0.0
    %189 = vmatprep.subr.mxu0 0.0
    %190 = vmatpush1.msra.mxu0 0.0
    %191 = vmatprep.subr.mxu0 0.0
    %192 = vmatpush1.msra.mxu0 0.0
    %193 = vmatprep.subr.mxu0 0.0
    %194 = vmatpush1.msra.mxu0 0.0
    %195 = vmatprep.subr.mxu0 0.0
    %196 = vmatpush1.msra.mxu0 0.0
    %197 = vmatprep.subr.mxu0 0.0
    %198 = vmatpush1.msra.mxu0 0.0
    %199 = vmatprep.subr.mxu0 0.0
    %200 = vmatpush1.msra.mxu0 0.0
    %201 = vmatprep.subr.mxu0 0.0
    %202 = vmatpush1.msra.mxu0 0.0
    %203 = vmatprep.subr.mxu0 0.0
    %204 = vmatpush1.msra.mxu0 0.0
    %205 = vmatprep.subr.mxu0 0.0
    %206 = vmatpush1.msra.mxu0 0.0
    %207 = vmatprep.subr.mxu0 0.0
    %208 = vmatpush1.msra.mxu0 0.0
    %209 = vmatprep.subr.mxu0 0.0
    %210 = vmatpush1.msra.mxu0 0.0
    %211 = vmatprep.subr.mxu0 0.0
    %212 = vmatpush1.msra.mxu0 0.0
    %213 = vmatprep.subr.mxu0 0.0
    %214 = vmatpush1.msra.mxu0 0.0
    %215 = vmatprep.subr.mxu0 0.0
    %216 = vmatpush1.msra.mxu0 0.0
    %217 = vmatprep.subr.mxu0 0.0
    %218 = vmatpush1.msra.mxu0 0.0
    %219 = vmatprep.subr.mxu0 0.0
    %220 = vmatpush1.msra.mxu0 0.0
    %221 = vmatprep.subr.mxu0 0.0
    %222 = vmatpush1.msra.mxu0 0.0
    %223 = vmatprep.subr.mxu0 0.0
    %224 = vmatpush1.msra.mxu0 0.0
    %225 = vmatprep.subr.mxu0 0.0
    %226 = vmatpush1.msra.mxu0 0.0
    %227 = vmatprep.subr.mxu0 0.0
    %228 = vmatpush1.msra.mxu0 0.0
    %229 = vmatprep.subr.mxu0 0.0
    %230 = vmatpush1.msra.mxu0 0.0
    %231 = vmatprep.subr.mxu0 0.0
    %232 = vmatpush1.msra.mxu0 0.0
    %233 = vmatprep.subr.mxu0 0.0
    %234 = vmatpush1.msra.mxu0 0.0
    %235 = vmatprep.mubr.f32.mxu0 0.0
    %236 = vmatmul.mubr.f32.gmra.mrb[0].mxu0 %v169
    %v237 = vpop.f32.mrb[0].mxu0
    %v238 = vadd.f32 0.0, %v237
    %v239 = vpop.f32.mrb[0].mxu0
    %240 = vdwg.mxu0
    %v241 = vadd.f32 %v165, %v238
    %v242 = vxor.u32 %v241, 2147483648
    %v243 = vmul.f32 %v242, 1.442695
    %v244 = vpow.pop %v243
    %v245 = vadd.f32 %v244, 1.0
    %v246 = vrcp.pop %v245
    %v247 = vmul.f32 1.0, %v246
    %v248 = vtanh.pop %v241
    %v249 = vsel %vm57, %v248, %v247
    %v250 = vmul.f32 %v249, %v157
    %252 = vrot.lane.b32.xlu0 %v249, 64
    %v253 = vpop.permute.xlu0 %252
    %v255 = vmul.f32 %v249, %v253
    %257 = vrot.lane.b32.xlu0 %v255, 32
    %v258 = vpop.permute.xlu0 %257
    %v260 = vadd.f32 %v250, %v258
    %v261 = vtanh.pop %v260
    %263 = vrot.lane.b32.xlu0 %v261, 64
    %v264 = vpop.permute.xlu0 %263
    %v266 = vmul.f32 %v249, %v264
    %s267 = scalar_lea.vmem %s1, 16
    %v268 = vld [vmem:[%s267] sm:$0xff]
    %270 = vrot.lane.b32.xlu0 %v266, 32
    %v271 = vpop.permute.xlu0 %270
    %v272 = vsel %vm64, %v271, 0
    %274 = vmatprep.subr.mxu0 0.0
    %275 = vmatpush1.msra.mxu0 %v60
    %276 = vmatprep.subr.mxu0 0.0
    %277 = vmatpush1.msra.mxu0 %v61
    %278 = vmatprep.subr.mxu0 0.0
    %279 = vmatpush1.msra.mxu0 %v62
    %280 = vmatprep.subr.mxu0 0.0
    %281 = vmatpush1.msra.mxu0 %v63
    %282 = vmatprep.subr.mxu0 0.0
    %283 = vmatpush1.msra.mxu0 0.0
    %284 = vmatprep.subr.mxu0 0.0
    %285 = vmatpush1.msra.mxu0 0.0
    %286 = vmatprep.subr.mxu0 0.0
    %287 = vmatpush1.msra.mxu0 0.0
    %288 = vmatprep.subr.mxu0 0.0
    %289 = vmatpush1.msra.mxu0 0.0
    %290 = vmatprep.subr.mxu0 0.0
    %291 = vmatpush1.msra.mxu0 0.0
    %292 = vmatprep.subr.mxu0 0.0
    %293 = vmatpush1.msra.mxu0 0.0
    %294 = vmatprep.subr.mxu0 0.0
    %295 = vmatpush1.msra.mxu0 0.0
    %296 = vmatprep.subr.mxu0 0.0
    %297 = vmatpush1.msra.mxu0 0.0
    %298 = vmatprep.subr.mxu0 0.0
    %299 = vmatpush1.msra.mxu0 0.0
    %300 = vmatprep.subr.mxu0 0.0
    %301 = vmatpush1.msra.mxu0 0.0
    %302 = vmatprep.subr.mxu0 0.0
    %303 = vmatpush1.msra.mxu0 0.0
    %304 = vmatprep.subr.mxu0 0.0
    %305 = vmatpush1.msra.mxu0 0.0
    %306 = vmatprep.subr.mxu0 0.0
    %307 = vmatpush1.msra.mxu0 0.0
    %308 = vmatprep.subr.mxu0 0.0
    %309 = vmatpush1.msra.mxu0 0.0
    %310 = vmatprep.subr.mxu0 0.0
    %311 = vmatpush1.msra.mxu0 0.0
    %312 = vmatprep.subr.mxu0 0.0
    %313 = vmatpush1.msra.mxu0 0.0
    %314 = vmatprep.subr.mxu0 0.0
    %315 = vmatpush1.msra.mxu0 0.0
    %316 = vmatprep.subr.mxu0 0.0
    %317 = vmatpush1.msra.mxu0 0.0
    %318 = vmatprep.subr.mxu0 0.0
    %319 = vmatpush1.msra.mxu0 0.0
    %320 = vmatprep.subr.mxu0 0.0
    %321 = vmatpush1.msra.mxu0 0.0
    %322 = vmatprep.subr.mxu0 0.0
    %323 = vmatpush1.msra.mxu0 0.0
    %324 = vmatprep.subr.mxu0 0.0
    %325 = vmatpush1.msra.mxu0 0.0
    %326 = vmatprep.subr.mxu0 0.0
    %327 = vmatpush1.msra.mxu0 0.0
    %328 = vmatprep.subr.mxu0 0.0
    %329 = vmatpush1.msra.mxu0 0.0
    %330 = vmatprep.subr.mxu0 0.0
    %331 = vmatpush1.msra.mxu0 0.0
    %332 = vmatprep.subr.mxu0 0.0
    %333 = vmatpush1.msra.mxu0 0.0
    %334 = vmatprep.subr.mxu0 0.0
    %335 = vmatpush1.msra.mxu0 0.0
    %336 = vmatprep.subr.mxu0 0.0
    %337 = vmatpush1.msra.mxu0 0.0
    %338 = vmatprep.mubr.f32.mxu0 0.0
    %339 = vmatmul.mubr.f32.gmra.mrb[0].mxu0 %v272
    %v340 = vpop.f32.mrb[0].mxu0
    %v341 = vadd.f32 0.0, %v340
    %v342 = vpop.f32.mrb[0].mxu0
    %343 = vdwg.mxu0
    %v344 = vadd.f32 %v268, %v341
    %v345 = vxor.u32 %v344, 2147483648
    %v346 = vmul.f32 %v345, 1.442695
    %v347 = vpow.pop %v346
    %v348 = vadd.f32 %v347, 1.0
    %v349 = vrcp.pop %v348
    %v350 = vmul.f32 1.0, %v349
    %v351 = vtanh.pop %v344
    %v352 = vsel %vm57, %v351, %v350
    %v353 = vmul.f32 %v352, %v260
    %355 = vrot.lane.b32.xlu0 %v352, 64
    %v356 = vpop.permute.xlu0 %355
    %v358 = vmul.f32 %v352, %v356
    %360 = vrot.lane.b32.xlu0 %v358, 32
    %v361 = vpop.permute.xlu0 %360
    %v363 = vadd.f32 %v353, %v361
    %v364 = vtanh.pop %v363
    %366 = vrot.lane.b32.xlu0 %v364, 64
    %v367 = vpop.permute.xlu0 %366
    %v369 = vmul.f32 %v352, %v367
    %s370 = scalar_lea.vmem %s1, 24
    %v371 = vld [vmem:[%s370] sm:$0xff]
    %373 = vrot.lane.b32.xlu0 %v369, 32
    %v374 = vpop.permute.xlu0 %373
    %v375 = vsel %vm64, %v374, 0
    %377 = vmatprep.subr.mxu0 0.0
    %378 = vmatpush1.msra.mxu0 %v60
    %379 = vmatprep.subr.mxu0 0.0
    %380 = vmatpush1.msra.mxu0 %v61
    %381 = vmatprep.subr.mxu0 0.0
    %382 = vmatpush1.msra.mxu0 %v62
    %383 = vmatprep.subr.mxu0 0.0
    %384 = vmatpush1.msra.mxu0 %v63
    %385 = vmatprep.subr.mxu0 0.0
    %386 = vmatpush1.msra.mxu0 0.0
    %387 = vmatprep.subr.mxu0 0.0
    %388 = vmatpush1.msra.mxu0 0.0
    %389 = vmatprep.subr.mxu0 0.0
    %390 = vmatpush1.msra.mxu0 0.0
    %391 = vmatprep.subr.mxu0 0.0
    %392 = vmatpush1.msra.mxu0 0.0
    %393 = vmatprep.subr.mxu0 0.0
    %394 = vmatpush1.msra.mxu0 0.0
    %395 = vmatprep.subr.mxu0 0.0
    %396 = vmatpush1.msra.mxu0 0.0
    %397 = vmatprep.subr.mxu0 0.0
    %398 = vmatpush1.msra.mxu0 0.0
    %399 = vmatprep.subr.mxu0 0.0
    %400 = vmatpush1.msra.mxu0 0.0
    %401 = vmatprep.subr.mxu0 0.0
    %402 = vmatpush1.msra.mxu0 0.0
    %403 = vmatprep.subr.mxu0 0.0
    %404 = vmatpush1.msra.mxu0 0.0
    %405 = vmatprep.subr.mxu0 0.0
    %406 = vmatpush1.msra.mxu0 0.0
    %407 = vmatprep.subr.mxu0 0.0
    %408 = vmatpush1.msra.mxu0 0.0
    %409 = vmatprep.subr.mxu0 0.0
    %410 = vmatpush1.msra.mxu0 0.0
    %411 = vmatprep.subr.mxu0 0.0
    %412 = vmatpush1.msra.mxu0 0.0
    %413 = vmatprep.subr.mxu0 0.0
    %414 = vmatpush1.msra.mxu0 0.0
    %415 = vmatprep.subr.mxu0 0.0
    %416 = vmatpush1.msra.mxu0 0.0
    %417 = vmatprep.subr.mxu0 0.0
    %418 = vmatpush1.msra.mxu0 0.0
    %419 = vmatprep.subr.mxu0 0.0
    %420 = vmatpush1.msra.mxu0 0.0
    %421 = vmatprep.subr.mxu0 0.0
    %422 = vmatpush1.msra.mxu0 0.0
    %423 = vmatprep.subr.mxu0 0.0
    %424 = vmatpush1.msra.mxu0 0.0
    %425 = vmatprep.subr.mxu0 0.0
    %426 = vmatpush1.msra.mxu0 0.0
    %427 = vmatprep.subr.mxu0 0.0
    %428 = vmatpush1.msra.mxu0 0.0
    %429 = vmatprep.subr.mxu0 0.0
    %430 = vmatpush1.msra.mxu0 0.0
    %431 = vmatprep.subr.mxu0 0.0
    %432 = vmatpush1.msra.mxu0 0.0
    %433 = vmatprep.subr.mxu0 0.0
    %434 = vmatpush1.msra.mxu0 0.0
    %435 = vmatprep.subr.mxu0 0.0
    %436 = vmatpush1.msra.mxu0 0.0
    %437 = vmatprep.subr.mxu0 0.0
    %438 = vmatpush1.msra.mxu0 0.0
    %439 = vmatprep.subr.mxu0 0.0
    %440 = vmatpush1.msra.mxu0 0.0
    %441 = vmatprep.mubr.f32.mxu0 0.0
    %442 = vmatmul.mubr.f32.gmra.mrb[0].mxu0 %v375
    %v443 = vpop.f32.mrb[0].mxu0
    %v444 = vadd.f32 0.0, %v443
    %v445 = vpop.f32.mrb[0].mxu0
    %446 = vdwg.mxu0
    %v447 = vadd.f32 %v371, %v444
    %v448 = vxor.u32 %v447, 2147483648
    %v449 = vmul.f32 %v448, 1.442695
    %v450 = vpow.pop %v449
    %v451 = vadd.f32 %v450, 1.0
    %v452 = vrcp.pop %v451
    %v453 = vmul.f32 1.0, %v452
    %v454 = vtanh.pop %v447
    %v455 = vsel %vm57, %v454, %v453
    %v456 = vmul.f32 %v455, %v363
    %458 = vrot.lane.b32.xlu0 %v455, 64
    %v459 = vpop.permute.xlu0 %458
    %v461 = vmul.f32 %v455, %v459
    %463 = vrot.lane.b32.xlu0 %v461, 32
    %v464 = vpop.permute.xlu0 %463
    %v466 = vadd.f32 %v456, %v464
    %v467 = vtanh.pop %v466
    %469 = vrot.lane.b32.xlu0 %v467, 64
    %v470 = vpop.permute.xlu0 %469
    %v472 = vmul.f32 %v455, %v470
    %s473 = scalar_lea.vmem %s1, 32
    %v474 = vld [vmem:[%s473] sm:$0xff]
    %476 = vrot.lane.b32.xlu0 %v472, 32
    %v477 = vpop.permute.xlu0 %476
    %v478 = vsel %vm64, %v477, 0
    %480 = vmatprep.subr.mxu0 0.0
    %481 = vmatpush1.msra.mxu0 %v60
    %482 = vmatprep.subr.mxu0 0.0
    %483 = vmatpush1.msra.mxu0 %v61
    %484 = vmatprep.subr.mxu0 0.0
    %485 = vmatpush1.msra.mxu0 %v62
    %486 = vmatprep.subr.mxu0 0.0
    %487 = vmatpush1.msra.mxu0 %v63
    %488 = vmatprep.subr.mxu0 0.0
    %489 = vmatpush1.msra.mxu0 0.0
    %490 = vmatprep.subr.mxu0 0.0
    %491 = vmatpush1.msra.mxu0 0.0
    %492 = vmatprep.subr.mxu0 0.0
    %493 = vmatpush1.msra.mxu0 0.0
    %494 = vmatprep.subr.mxu0 0.0
    %495 = vmatpush1.msra.mxu0 0.0
    %496 = vmatprep.subr.mxu0 0.0
    %497 = vmatpush1.msra.mxu0 0.0
    %498 = vmatprep.subr.mxu0 0.0
    %499 = vmatpush1.msra.mxu0 0.0
    %500 = vmatprep.subr.mxu0 0.0
    %501 = vmatpush1.msra.mxu0 0.0
    %502 = vmatprep.subr.mxu0 0.0
    %503 = vmatpush1.msra.mxu0 0.0
    %504 = vmatprep.subr.mxu0 0.0
    %505 = vmatpush1.msra.mxu0 0.0
    %506 = vmatprep.subr.mxu0 0.0
    %507 = vmatpush1.msra.mxu0 0.0
    %508 = vmatprep.subr.mxu0 0.0
    %509 = vmatpush1.msra.mxu0 0.0
    %510 = vmatprep.subr.mxu0 0.0
    %511 = vmatpush1.msra.mxu0 0.0
    %512 = vmatprep.subr.mxu0 0.0
    %513 = vmatpush1.msra.mxu0 0.0
    %514 = vmatprep.subr.mxu0 0.0
    %515 = vmatpush1.msra.mxu0 0.0
    %516 = vmatprep.subr.mxu0 0.0
    %517 = vmatpush1.msra.mxu0 0.0
    %518 = vmatprep.subr.mxu0 0.0
    %519 = vmatpush1.msra.mxu0 0.0
    %520 = vmatprep.subr.mxu0 0.0
    %521 = vmatpush1.msra.mxu0 0.0
    %522 = vmatprep.subr.mxu0 0.0
    %523 = vmatpush1.msra.mxu0 0.0
    %524 = vmatprep.subr.mxu0 0.0
    %525 = vmatpush1.msra.mxu0 0.0
    %526 = vmatprep.subr.mxu0 0.0
    %527 = vmatpush1.msra.mxu0 0.0
    %528 = vmatprep.subr.mxu0 0.0
    %529 = vmatpush1.msra.mxu0 0.0
    %530 = vmatprep.subr.mxu0 0.0
    %531 = vmatpush1.msra.mxu0 0.0
    %532 = vmatprep.subr.mxu0 0.0
    %533 = vmatpush1.msra.mxu0 0.0
    %534 = vmatprep.subr.mxu0 0.0
    %535 = vmatpush1.msra.mxu0 0.0
    %536 = vmatprep.subr.mxu0 0.0
    %537 = vmatpush1.msra.mxu0 0.0
    %538 = vmatprep.subr.mxu0 0.0
    %539 = vmatpush1.msra.mxu0 0.0
    %540 = vmatprep.subr.mxu0 0.0
    %541 = vmatpush1.msra.mxu0 0.0
    %542 = vmatprep.subr.mxu0 0.0
    %543 = vmatpush1.msra.mxu0 0.0
    %544 = vmatprep.mubr.f32.mxu0 0.0
    %545 = vmatmul.mubr.f32.gmra.mrb[0].mxu0 %v478
    %v546 = vpop.f32.mrb[0].mxu0
    %v547 = vadd.f32 0.0, %v546
    %v548 = vpop.f32.mrb[0].mxu0
    %549 = vdwg.mxu0
    %v550 = vadd.f32 %v474, %v547
    %v551 = vxor.u32 %v550, 2147483648
    %v552 = vmul.f32 %v551, 1.442695
    %v553 = vpow.pop %v552
    %v554 = vadd.f32 %v553, 1.0
    %v555 = vrcp.pop %v554
    %v556 = vmul.f32 1.0, %v555
    %v557 = vtanh.pop %v550
    %v558 = vsel %vm57, %v557, %v556
    %v559 = vmul.f32 %v558, %v466
    %561 = vrot.lane.b32.xlu0 %v558, 64
    %v562 = vpop.permute.xlu0 %561
    %v564 = vmul.f32 %v558, %v562
    %566 = vrot.lane.b32.xlu0 %v564, 32
    %v567 = vpop.permute.xlu0 %566
    %v569 = vadd.f32 %v559, %v567
    %v570 = vtanh.pop %v569
    %572 = vrot.lane.b32.xlu0 %v570, 64
    %v573 = vpop.permute.xlu0 %572
    %v575 = vmul.f32 %v558, %v573
    %s576 = scalar_lea.vmem %s1, 40
    %v577 = vld [vmem:[%s576] sm:$0xff]
    %579 = vrot.lane.b32.xlu0 %v575, 32
    %v580 = vpop.permute.xlu0 %579
    %v581 = vsel %vm64, %v580, 0
    %583 = vmatprep.subr.mxu0 0.0
    %584 = vmatpush1.msra.mxu0 %v60
    %585 = vmatprep.subr.mxu0 0.0
    %586 = vmatpush1.msra.mxu0 %v61
    %587 = vmatprep.subr.mxu0 0.0
    %588 = vmatpush1.msra.mxu0 %v62
    %589 = vmatprep.subr.mxu0 0.0
    %590 = vmatpush1.msra.mxu0 %v63
    %591 = vmatprep.subr.mxu0 0.0
    %592 = vmatpush1.msra.mxu0 0.0
    %593 = vmatprep.subr.mxu0 0.0
    %594 = vmatpush1.msra.mxu0 0.0
    %595 = vmatprep.subr.mxu0 0.0
    %596 = vmatpush1.msra.mxu0 0.0
    %597 = vmatprep.subr.mxu0 0.0
    %598 = vmatpush1.msra.mxu0 0.0
    %599 = vmatprep.subr.mxu0 0.0
    %600 = vmatpush1.msra.mxu0 0.0
    %601 = vmatprep.subr.mxu0 0.0
    %602 = vmatpush1.msra.mxu0 0.0
    %603 = vmatprep.subr.mxu0 0.0
    %604 = vmatpush1.msra.mxu0 0.0
    %605 = vmatprep.subr.mxu0 0.0
    %606 = vmatpush1.msra.mxu0 0.0
    %607 = vmatprep.subr.mxu0 0.0
    %608 = vmatpush1.msra.mxu0 0.0
    %609 = vmatprep.subr.mxu0 0.0
    %610 = vmatpush1.msra.mxu0 0.0
    %611 = vmatprep.subr.mxu0 0.0
    %612 = vmatpush1.msra.mxu0 0.0
    %613 = vmatprep.subr.mxu0 0.0
    %614 = vmatpush1.msra.mxu0 0.0
    %615 = vmatprep.subr.mxu0 0.0
    %616 = vmatpush1.msra.mxu0 0.0
    %617 = vmatprep.subr.mxu0 0.0
    %618 = vmatpush1.msra.mxu0 0.0
    %619 = vmatprep.subr.mxu0 0.0
    %620 = vmatpush1.msra.mxu0 0.0
    %621 = vmatprep.subr.mxu0 0.0
    %622 = vmatpush1.msra.mxu0 0.0
    %623 = vmatprep.subr.mxu0 0.0
    %624 = vmatpush1.msra.mxu0 0.0
    %625 = vmatprep.subr.mxu0 0.0
    %626 = vmatpush1.msra.mxu0 0.0
    %627 = vmatprep.subr.mxu0 0.0
    %628 = vmatpush1.msra.mxu0 0.0
    %629 = vmatprep.subr.mxu0 0.0
    %630 = vmatpush1.msra.mxu0 0.0
    %631 = vmatprep.subr.mxu0 0.0
    %632 = vmatpush1.msra.mxu0 0.0
    %633 = vmatprep.subr.mxu0 0.0
    %634 = vmatpush1.msra.mxu0 0.0
    %635 = vmatprep.subr.mxu0 0.0
    %636 = vmatpush1.msra.mxu0 0.0
    %637 = vmatprep.subr.mxu0 0.0
    %638 = vmatpush1.msra.mxu0 0.0
    %639 = vmatprep.subr.mxu0 0.0
    %640 = vmatpush1.msra.mxu0 0.0
    %641 = vmatprep.subr.mxu0 0.0
    %642 = vmatpush1.msra.mxu0 0.0
    %643 = vmatprep.subr.mxu0 0.0
    %644 = vmatpush1.msra.mxu0 0.0
    %645 = vmatprep.subr.mxu0 0.0
    %646 = vmatpush1.msra.mxu0 0.0
    %647 = vmatprep.mubr.f32.mxu0 0.0
    %648 = vmatmul.mubr.f32.gmra.mrb[0].mxu0 %v581
    %v649 = vpop.f32.mrb[0].mxu0
    %v650 = vadd.f32 0.0, %v649
    %v651 = vpop.f32.mrb[0].mxu0
    %652 = vdwg.mxu0
    %v653 = vadd.f32 %v577, %v650
    %v654 = vxor.u32 %v653, 2147483648
    %v655 = vmul.f32 %v654, 1.442695
    %v656 = vpow.pop %v655
    %v657 = vadd.f32 %v656, 1.0
    %v658 = vrcp.pop %v657
    %v659 = vmul.f32 1.0, %v658
    %v660 = vtanh.pop %v653
    %v661 = vsel %vm57, %v660, %v659
    %v662 = vmul.f32 %v661, %v569
    %664 = vrot.lane.b32.xlu0 %v661, 64
    %v665 = vpop.permute.xlu0 %664
    %v667 = vmul.f32 %v661, %v665
    %669 = vrot.lane.b32.xlu0 %v667, 32
    %v670 = vpop.permute.xlu0 %669
    %v672 = vadd.f32 %v662, %v670
    %v673 = vtanh.pop %v672
    %675 = vrot.lane.b32.xlu0 %v673, 64
    %v676 = vpop.permute.xlu0 %675
    %v678 = vmul.f32 %v661, %v676
    %s679 = scalar_lea.vmem %s1, 48
    %v680 = vld [vmem:[%s679] sm:$0xff]
    %682 = vrot.lane.b32.xlu0 %v678, 32
    %v683 = vpop.permute.xlu0 %682
    %v684 = vsel %vm64, %v683, 0
    %686 = vmatprep.subr.mxu0 0.0
    %687 = vmatpush1.msra.mxu0 %v60
    %688 = vmatprep.subr.mxu0 0.0
    %689 = vmatpush1.msra.mxu0 %v61
    %690 = vmatprep.subr.mxu0 0.0
    %691 = vmatpush1.msra.mxu0 %v62
    %692 = vmatprep.subr.mxu0 0.0
    %693 = vmatpush1.msra.mxu0 %v63
    %694 = vmatprep.subr.mxu0 0.0
    %695 = vmatpush1.msra.mxu0 0.0
    %696 = vmatprep.subr.mxu0 0.0
    %697 = vmatpush1.msra.mxu0 0.0
    %698 = vmatprep.subr.mxu0 0.0
    %699 = vmatpush1.msra.mxu0 0.0
    %700 = vmatprep.subr.mxu0 0.0
    %701 = vmatpush1.msra.mxu0 0.0
    %702 = vmatprep.subr.mxu0 0.0
    %703 = vmatpush1.msra.mxu0 0.0
    %704 = vmatprep.subr.mxu0 0.0
    %705 = vmatpush1.msra.mxu0 0.0
    %706 = vmatprep.subr.mxu0 0.0
    %707 = vmatpush1.msra.mxu0 0.0
    %708 = vmatprep.subr.mxu0 0.0
    %709 = vmatpush1.msra.mxu0 0.0
    %710 = vmatprep.subr.mxu0 0.0
    %711 = vmatpush1.msra.mxu0 0.0
    %712 = vmatprep.subr.mxu0 0.0
    %713 = vmatpush1.msra.mxu0 0.0
    %714 = vmatprep.subr.mxu0 0.0
    %715 = vmatpush1.msra.mxu0 0.0
    %716 = vmatprep.subr.mxu0 0.0
    %717 = vmatpush1.msra.mxu0 0.0
    %718 = vmatprep.subr.mxu0 0.0
    %719 = vmatpush1.msra.mxu0 0.0
    %720 = vmatprep.subr.mxu0 0.0
    %721 = vmatpush1.msra.mxu0 0.0
    %722 = vmatprep.subr.mxu0 0.0
    %723 = vmatpush1.msra.mxu0 0.0
    %724 = vmatprep.subr.mxu0 0.0
    %725 = vmatpush1.msra.mxu0 0.0
    %726 = vmatprep.subr.mxu0 0.0
    %727 = vmatpush1.msra.mxu0 0.0
    %728 = vmatprep.subr.mxu0 0.0
    %729 = vmatpush1.msra.mxu0 0.0
    %730 = vmatprep.subr.mxu0 0.0
    %731 = vmatpush1.msra.mxu0 0.0
    %732 = vmatprep.subr.mxu0 0.0
    %733 = vmatpush1.msra.mxu0 0.0
    %734 = vmatprep.subr.mxu0 0.0
    %735 = vmatpush1.msra.mxu0 0.0
    %736 = vmatprep.subr.mxu0 0.0
    %737 = vmatpush1.msra.mxu0 0.0
    %738 = vmatprep.subr.mxu0 0.0
    %739 = vmatpush1.msra.mxu0 0.0
    %740 = vmatprep.subr.mxu0 0.0
    %741 = vmatpush1.msra.mxu0 0.0
    %742 = vmatprep.subr.mxu0 0.0
    %743 = vmatpush1.msra.mxu0 0.0
    %744 = vmatprep.subr.mxu0 0.0
    %745 = vmatpush1.msra.mxu0 0.0
    %746 = vmatprep.subr.mxu0 0.0
    %747 = vmatpush1.msra.mxu0 0.0
    %748 = vmatprep.subr.mxu0 0.0
    %749 = vmatpush1.msra.mxu0 0.0
    %750 = vmatprep.mubr.f32.mxu0 0.0
    %751 = vmatmul.mubr.f32.gmra.mrb[0].mxu0 %v684
    %v752 = vpop.f32.mrb[0].mxu0
    %v753 = vadd.f32 0.0, %v752
    %v754 = vpop.f32.mrb[0].mxu0
    %755 = vdwg.mxu0
    %v756 = vadd.f32 %v680, %v753
    %v757 = vxor.u32 %v756, 2147483648
    %v758 = vmul.f32 %v757, 1.442695
    %v759 = vpow.pop %v758
    %v760 = vadd.f32 %v759, 1.0
    %v761 = vrcp.pop %v760
    %v762 = vmul.f32 1.0, %v761
    %v763 = vtanh.pop %v756
    %v764 = vsel %vm57, %v763, %v762
    %v765 = vmul.f32 %v764, %v672
    %767 = vrot.lane.b32.xlu0 %v764, 64
    %v768 = vpop.permute.xlu0 %767
    %v770 = vmul.f32 %v764, %v768
    %772 = vrot.lane.b32.xlu0 %v770, 32
    %v773 = vpop.permute.xlu0 %772
    %v775 = vadd.f32 %v765, %v773
    %v776 = vtanh.pop %v775
    %778 = vrot.lane.b32.xlu0 %v776, 64
    %v779 = vpop.permute.xlu0 %778
    %v781 = vmul.f32 %v764, %v779
    %s782 = scalar_lea.vmem %s1, 56
    %v783 = vld [vmem:[%s782] sm:$0xff]
    %785 = vrot.lane.b32.xlu0 %v781, 32
    %v786 = vpop.permute.xlu0 %785
    %v787 = vsel %vm64, %v786, 0
    %789 = vmatprep.subr.mxu0 0.0
    %790 = vmatpush1.msra.mxu0 %v60
    %791 = vmatprep.subr.mxu0 0.0
    %792 = vmatpush1.msra.mxu0 %v61
    %793 = vmatprep.subr.mxu0 0.0
    %794 = vmatpush1.msra.mxu0 %v62
    %795 = vmatprep.subr.mxu0 0.0
    %796 = vmatpush1.msra.mxu0 %v63
    %797 = vmatprep.subr.mxu0 0.0
    %798 = vmatpush1.msra.mxu0 0.0
    %799 = vmatprep.subr.mxu0 0.0
    %800 = vmatpush1.msra.mxu0 0.0
    %801 = vmatprep.subr.mxu0 0.0
    %802 = vmatpush1.msra.mxu0 0.0
    %803 = vmatprep.subr.mxu0 0.0
    %804 = vmatpush1.msra.mxu0 0.0
    %805 = vmatprep.subr.mxu0 0.0
    %806 = vmatpush1.msra.mxu0 0.0
    %807 = vmatprep.subr.mxu0 0.0
    %808 = vmatpush1.msra.mxu0 0.0
    %809 = vmatprep.subr.mxu0 0.0
    %810 = vmatpush1.msra.mxu0 0.0
    %811 = vmatprep.subr.mxu0 0.0
    %812 = vmatpush1.msra.mxu0 0.0
    %813 = vmatprep.subr.mxu0 0.0
    %814 = vmatpush1.msra.mxu0 0.0
    %815 = vmatprep.subr.mxu0 0.0
    %816 = vmatpush1.msra.mxu0 0.0
    %817 = vmatprep.subr.mxu0 0.0
    %818 = vmatpush1.msra.mxu0 0.0
    %819 = vmatprep.subr.mxu0 0.0
    %820 = vmatpush1.msra.mxu0 0.0
    %821 = vmatprep.subr.mxu0 0.0
    %822 = vmatpush1.msra.mxu0 0.0
    %823 = vmatprep.subr.mxu0 0.0
    %824 = vmatpush1.msra.mxu0 0.0
    %825 = vmatprep.subr.mxu0 0.0
    %826 = vmatpush1.msra.mxu0 0.0
    %827 = vmatprep.subr.mxu0 0.0
    %828 = vmatpush1.msra.mxu0 0.0
    %829 = vmatprep.subr.mxu0 0.0
    %830 = vmatpush1.msra.mxu0 0.0
    %831 = vmatprep.subr.mxu0 0.0
    %832 = vmatpush1.msra.mxu0 0.0
    %833 = vmatprep.subr.mxu0 0.0
    %834 = vmatpush1.msra.mxu0 0.0
    %835 = vmatprep.subr.mxu0 0.0
    %836 = vmatpush1.msra.mxu0 0.0
    %837 = vmatprep.subr.mxu0 0.0
    %838 = vmatpush1.msra.mxu0 0.0
    %839 = vmatprep.subr.mxu0 0.0
    %840 = vmatpush1.msra.mxu0 0.0
    %841 = vmatprep.subr.mxu0 0.0
    %842 = vmatpush1.msra.mxu0 0.0
    %843 = vmatprep.subr.mxu0 0.0
    %844 = vmatpush1.msra.mxu0 0.0
    %845 = vmatprep.subr.mxu0 0.0
    %846 = vmatpush1.msra.mxu0 0.0
    %847 = vmatprep.subr.mxu0 0.0
    %848 = vmatpush1.msra.mxu0 0.0
    %849 = vmatprep.subr.mxu0 0.0
    %850 = vmatpush1.msra.mxu0 0.0
    %851 = vmatprep.subr.mxu0 0.0
    %852 = vmatpush1.msra.mxu0 0.0
    %853 = vmatprep.mubr.f32.mxu0 0.0
    %854 = vmatmul.mubr.f32.gmra.mrb[0].mxu0 %v787
    %v855 = vpop.f32.mrb[0].mxu0
    %v856 = vadd.f32 0.0, %v855
    %v857 = vpop.f32.mrb[0].mxu0
    %858 = vdwg.mxu0
    %v859 = vadd.f32 %v783, %v856
    %v860 = vxor.u32 %v859, 2147483648
    %v861 = vmul.f32 %v860, 1.442695
    %v862 = vpow.pop %v861
    %v863 = vadd.f32 %v862, 1.0
    %v864 = vrcp.pop %v863
    %v865 = vmul.f32 1.0, %v864
    %v866 = vtanh.pop %v859
    %v867 = vsel %vm57, %v866, %v865
    %v868 = vmul.f32 %v867, %v775
    %870 = vrot.lane.b32.xlu0 %v867, 64
    %v871 = vpop.permute.xlu0 %870
    %v873 = vmul.f32 %v867, %v871
    %875 = vrot.lane.b32.xlu0 %v873, 32
    %v876 = vpop.permute.xlu0 %875
    %v878 = vadd.f32 %v868, %v876
    %v879 = vtanh.pop %v878
    %881 = vrot.lane.b32.xlu0 %v879, 64
    %v882 = vpop.permute.xlu0 %881
    %v884 = vmul.f32 %v867, %v882
    %v885 = vld [vmem:[%s2] sm:$0xff]
    %v886 = vld [vmem:[%s4] sm:$0xff]
    %v887 = vld [vmem:[%s4 + $0x8] sm:$0xff]
    %v888 = vld [vmem:[%s4 + $0x10] sm:$0xff]
    %v889 = vld [vmem:[%s4 + $0x18] sm:$0xff]
    %891 = vrot.lane.b32.xlu0 %v884, 32
    %v892 = vpop.permute.xlu0 %891
    %v893 = vsel %vm64, %v892, 0
    %895 = vmatprep.subr.mxu0 0.0
    %896 = vmatpush1.msra.mxu0 %v886
    %897 = vmatprep.subr.mxu0 0.0
    %898 = vmatpush1.msra.mxu0 %v887
    %899 = vmatprep.subr.mxu0 0.0
    %900 = vmatpush1.msra.mxu0 %v888
    %901 = vmatprep.subr.mxu0 0.0
    %902 = vmatpush1.msra.mxu0 %v889
    %903 = vmatprep.subr.mxu0 0.0
    %904 = vmatpush1.msra.mxu0 0.0
    %905 = vmatprep.subr.mxu0 0.0
    %906 = vmatpush1.msra.mxu0 0.0
    %907 = vmatprep.subr.mxu0 0.0
    %908 = vmatpush1.msra.mxu0 0.0
    %909 = vmatprep.subr.mxu0 0.0
    %910 = vmatpush1.msra.mxu0 0.0
    %911 = vmatprep.subr.mxu0 0.0
    %912 = vmatpush1.msra.mxu0 0.0
    %913 = vmatprep.subr.mxu0 0.0
    %914 = vmatpush1.msra.mxu0 0.0
    %915 = vmatprep.subr.mxu0 0.0
    %916 = vmatpush1.msra.mxu0 0.0
    %917 = vmatprep.subr.mxu0 0.0
    %918 = vmatpush1.msra.mxu0 0.0
    %919 = vmatprep.subr.mxu0 0.0
    %920 = vmatpush1.msra.mxu0 0.0
    %921 = vmatprep.subr.mxu0 0.0
    %922 = vmatpush1.msra.mxu0 0.0
    %923 = vmatprep.subr.mxu0 0.0
    %924 = vmatpush1.msra.mxu0 0.0
    %925 = vmatprep.subr.mxu0 0.0
    %926 = vmatpush1.msra.mxu0 0.0
    %927 = vmatprep.subr.mxu0 0.0
    %928 = vmatpush1.msra.mxu0 0.0
    %929 = vmatprep.subr.mxu0 0.0
    %930 = vmatpush1.msra.mxu0 0.0
    %931 = vmatprep.subr.mxu0 0.0
    %932 = vmatpush1.msra.mxu0 0.0
    %933 = vmatprep.subr.mxu0 0.0
    %934 = vmatpush1.msra.mxu0 0.0
    %935 = vmatprep.subr.mxu0 0.0
    %936 = vmatpush1.msra.mxu0 0.0
    %937 = vmatprep.subr.mxu0 0.0
    %938 = vmatpush1.msra.mxu0 0.0
    %939 = vmatprep.subr.mxu0 0.0
    %940 = vmatpush1.msra.mxu0 0.0
    %941 = vmatprep.subr.mxu0 0.0
    %942 = vmatpush1.msra.mxu0 0.0
    %943 = vmatprep.subr.mxu0 0.0
    %944 = vmatpush1.msra.mxu0 0.0
    %945 = vmatprep.subr.mxu0 0.0
    %946 = vmatpush1.msra.mxu0 0.0
    %947 = vmatprep.subr.mxu0 0.0
    %948 = vmatpush1.msra.mxu0 0.0
    %949 = vmatprep.subr.mxu0 0.0
    %950 = vmatpush1.msra.mxu0 0.0
    %951 = vmatprep.subr.mxu0 0.0
    %952 = vmatpush1.msra.mxu0 0.0
    %953 = vmatprep.subr.mxu0 0.0
    %954 = vmatpush1.msra.mxu0 0.0
    %955 = vmatprep.subr.mxu0 0.0
    %956 = vmatpush1.msra.mxu0 0.0
    %957 = vmatprep.subr.mxu0 0.0
    %958 = vmatpush1.msra.mxu0 0.0
    %959 = vmatprep.mubr.f32.mxu0 0.0
    %960 = vmatmul.mubr.f32.gmra.mrb[0].mxu0 %v893
    %v961 = vpop.f32.mrb[0].mxu0
    %v962 = vadd.f32 0.0, %v961
    %v963 = vpop.f32.mrb[0].mxu0
    %964 = vdwg.mxu0
    %v965 = vadd.f32 %v885, %v962
    %v967 = vlaneseq
    %v968 = vshrl.u32 %v967, 7
    %v969 = vsub.s32 0, %v968
    %v970 = vrot.slane %v47, %v969
    %v972 = vadd.f32 %v965, %v970
    %v973 = vxor.u32 %v972, 2147483648
    %v974 = vmul.f32 %v973, 1.442695
    %v975 = vpow.pop %v974
    %v976 = vadd.f32 %v975, 1.0
    %v977 = vrcp.pop %v976
    %v978 = vmul.f32 1.0, %v977
    %v979 = vtanh.pop %v972
    %v980 = vsel %vm57, %v979, %v978
    %v981 = vmul.f32 %v980, %v878
    %983 = vrot.lane.b32.xlu0 %v980, 64
    %v984 = vpop.permute.xlu0 %983
    %v986 = vmul.f32 %v980, %v984
    %988 = vrot.lane.b32.xlu0 %v986, 32
    %v989 = vpop.permute.xlu0 %988
    %v991 = vadd.f32 %v981, %v989
    %v992 = vtanh.pop %v991
    %994 = vrot.lane.b32.xlu0 %v992, 64
    %v995 = vpop.permute.xlu0 %994
    %v997 = vmul.f32 %v980, %v995
    %v999 = vlaneseq
    %v1000 = vshrl.u32 %v999, 7
    %v1001 = vsub.s32 0, %v1000
    %v1002 = vrot.slane %v52, %v1001
    %1005 = vrot.lane.b32.xlu0 %v997, 32
    %v1006 = vpop.permute.xlu0 %1005
    %v1007 = vsel %vm64, %v1006, 0
    %1009 = vmatprep.subr.mxu0 0.0
    %1010 = vmatpush1.msra.mxu0 %v48
    %1011 = vmatprep.subr.mxu0 0.0
    %1012 = vmatpush1.msra.mxu0 %v49
    %1013 = vmatprep.subr.mxu0 0.0
    %1014 = vmatpush1.msra.mxu0 %v50
    %1015 = vmatprep.subr.mxu0 0.0
    %1016 = vmatpush1.msra.mxu0 %v51
    %1017 = vmatprep.subr.mxu0 0.0
    %1018 = vmatpush1.msra.mxu0 0.0
    %1019 = vmatprep.subr.mxu0 0.0
    %1020 = vmatpush1.msra.mxu0 0.0
    %1021 = vmatprep.subr.mxu0 0.0
    %1022 = vmatpush1.msra.mxu0 0.0
    %1023 = vmatprep.subr.mxu0 0.0
    %1024 = vmatpush1.msra.mxu0 0.0
    %1025 = vmatprep.subr.mxu0 0.0
    %1026 = vmatpush1.msra.mxu0 0.0
    %1027 = vmatprep.subr.mxu0 0.0
    %1028 = vmatpush1.msra.mxu0 0.0
    %1029 = vmatprep.subr.mxu0 0.0
    %1030 = vmatpush1.msra.mxu0 0.0
    %1031 = vmatprep.subr.mxu0 0.0
    %1032 = vmatpush1.msra.mxu0 0.0
    %1033 = vmatprep.subr.mxu0 0.0
    %1034 = vmatpush1.msra.mxu0 0.0
    %1035 = vmatprep.subr.mxu0 0.0
    %1036 = vmatpush1.msra.mxu0 0.0
    %1037 = vmatprep.subr.mxu0 0.0
    %1038 = vmatpush1.msra.mxu0 0.0
    %1039 = vmatprep.subr.mxu0 0.0
    %1040 = vmatpush1.msra.mxu0 0.0
    %1041 = vmatprep.subr.mxu0 0.0
    %1042 = vmatpush1.msra.mxu0 0.0
    %1043 = vmatprep.subr.mxu0 0.0
    %1044 = vmatpush1.msra.mxu0 0.0
    %1045 = vmatprep.subr.mxu0 0.0
    %1046 = vmatpush1.msra.mxu0 0.0
    %1047 = vmatprep.subr.mxu0 0.0
    %1048 = vmatpush1.msra.mxu0 0.0
    %1049 = vmatprep.subr.mxu0 0.0
    %1050 = vmatpush1.msra.mxu0 0.0
    %1051 = vmatprep.subr.mxu0 0.0
    %1052 = vmatpush1.msra.mxu0 0.0
    %1053 = vmatprep.subr.mxu0 0.0
    %1054 = vmatpush1.msra.mxu0 0.0
    %1055 = vmatprep.subr.mxu0 0.0
    %1056 = vmatpush1.msra.mxu0 0.0
    %1057 = vmatprep.subr.mxu0 0.0
    %1058 = vmatpush1.msra.mxu0 0.0
    %1059 = vmatprep.subr.mxu0 0.0
    %1060 = vmatpush1.msra.mxu0 0.0
    %1061 = vmatprep.subr.mxu0 0.0
    %1062 = vmatpush1.msra.mxu0 0.0
    %1063 = vmatprep.subr.mxu0 0.0
    %1064 = vmatpush1.msra.mxu0 0.0
    %1065 = vmatprep.subr.mxu0 0.0
    %1066 = vmatpush1.msra.mxu0 0.0
    %1067 = vmatprep.subr.mxu0 0.0
    %1068 = vmatpush1.msra.mxu0 0.0
    %1069 = vmatprep.subr.mxu0 0.0
    %1070 = vmatpush1.msra.mxu0 0.0
    %1071 = vmatprep.subr.mxu0 0.0
    %1072 = vmatpush1.msra.mxu0 0.0
    %1073 = vmatprep.mubr.f32.mxu0 0.0
    %1074 = vmatmul.mubr.f32.gmra.mrb[0].mxu0 %v1007
    %v1075 = vpop.f32.mrb[0].mxu0
    %v1076 = vadd.f32 %v1002, %v1075
    %v1077 = vpop.f32.mrb[0].mxu0
    %1078 = vdwg.mxu0
    %s1079 = scalar_lea.vmem [#allocation5], 8
    %1080 = vst [vmem:[%s1079] sm:$0xff] %v1076
    %1081 = vmax.xlane.f32.xlu0 %v1076
    %v1082 = vpop.xlane.xlu0 %1081
    %vm1083 = vcmp.ge.f32.partialorder %v1076, %v1082
    %v1084 = vsel %vm1083, %v58, 128.0
    %1085 = vmin.xlane.f32.xlu0 %v1084
    %v1086 = vpop.xlane.xlu0 %1085
    %vm1087 = vcmp.eq.f32.partialorder %v58, %v1086
    %v1088 = vsel %vm1087, 1, 0
    %v1089 = vcvt.s32.f32 %v1088
    %v1090 = vld [vmem:[%s6] sm:$0xff]
    %v1091 = vld [vmem:[%s6 + $0x8] sm:$0xff]
    %v1092 = vld [vmem:[%s6 + $0x10] sm:$0xff]
    %v1093 = vld [vmem:[%s6 + $0x18] sm:$0xff]
    %v1095 = vsel %vm64, %v1089, 0
    %1097 = vmatprep.subr.mxu0 0.0
    %1098 = vmatpush1.msra.mxu0 %v1090
    %1099 = vmatprep.subr.mxu0 0.0
    %1100 = vmatpush1.msra.mxu0 %v1091
    %1101 = vmatprep.subr.mxu0 0.0
    %1102 = vmatpush1.msra.mxu0 %v1092
    %1103 = vmatprep.subr.mxu0 0.0
    %1104 = vmatpush1.msra.mxu0 %v1093
    %1105 = vmatprep.subr.mxu0 0.0
    %1106 = vmatpush1.msra.mxu0 0.0
    %1107 = vmatprep.subr.mxu0 0.0
    %1108 = vmatpush1.msra.mxu0 0.0
    %1109 = vmatprep.subr.mxu0 0.0
    %1110 = vmatpush1.msra.mxu0 0.0
    %1111 = vmatprep.subr.mxu0 0.0
    %1112 = vmatpush1.msra.mxu0 0.0
    %1113 = vmatprep.subr.mxu0 0.0
    %1114 = vmatpush1.msra.mxu0 0.0
    %1115 = vmatprep.subr.mxu0 0.0
    %1116 = vmatpush1.msra.mxu0 0.0
    %1117 = vmatprep.subr.mxu0 0.0
    %1118 = vmatpush1.msra.mxu0 0.0
    %1119 = vmatprep.subr.mxu0 0.0
    %1120 = vmatpush1.msra.mxu0 0.0
    %1121 = vmatprep.subr.mxu0 0.0
    %1122 = vmatpush1.msra.mxu0 0.0
    %1123 = vmatprep.subr.mxu0 0.0
    %1124 = vmatpush1.msra.mxu0 0.0
    %1125 = vmatprep.subr.mxu0 0.0
    %1126 = vmatpush1.msra.mxu0 0.0
    %1127 = vmatprep.subr.mxu0 0.0
    %1128 = vmatpush1.msra.mxu0 0.0
    %1129 = vmatprep.subr.mxu0 0.0
    %1130 = vmatpush1.msra.mxu0 0.0
    %1131 = vmatprep.subr.mxu0 0.0
    %1132 = vmatpush1.msra.mxu0 0.0
    %1133 = vmatprep.subr.mxu0 0.0
    %1134 = vmatpush1.msra.mxu0 0.0
    %1135 = vmatprep.subr.mxu0 0.0
    %1136 = vmatpush1.msra.mxu0 0.0
    %1137 = vmatprep.subr.mxu0 0.0
    %1138 = vmatpush1.msra.mxu0 0.0
    %1139 = vmatprep.subr.mxu0 0.0
    %1140 = vmatpush1.msra.mxu0 0.0
    %1141 = vmatprep.subr.mxu0 0.0
    %1142 = vmatpush1.msra.mxu0 0.0
    %1143 = vmatprep.subr.mxu0 0.0
    %1144 = vmatpush1.msra.mxu0 0.0
    %1145 = vmatprep.subr.mxu0 0.0
    %1146 = vmatpush1.msra.mxu0 0.0
    %1147 = vmatprep.subr.mxu0 0.0
    %1148 = vmatpush1.msra.mxu0 0.0
    %1149 = vmatprep.subr.mxu0 0.0
    %1150 = vmatpush1.msra.mxu0 0.0
    %1151 = vmatprep.subr.mxu0 0.0
    %1152 = vmatpush1.msra.mxu0 0.0
    %1153 = vmatprep.subr.mxu0 0.0
    %1154 = vmatpush1.msra.mxu0 0.0
    %1155 = vmatprep.subr.mxu0 0.0
    %1156 = vmatpush1.msra.mxu0 0.0
    %1157 = vmatprep.subr.mxu0 0.0
    %1158 = vmatpush1.msra.mxu0 0.0
    %1159 = vmatprep.subr.mxu0 0.0
    %1160 = vmatpush1.msra.mxu0 0.0
    %1161 = vmatprep.mubr.f32.mxu0 0.0
    %1162 = vmatmul.mubr.f32.gmra.mrb[0].mxu0 %v1095
    %v1163 = vpop.f32.mrb[0].mxu0
    %v1164 = vadd.f32 0.0, %v1163
    %v1165 = vpop.f32.mrb[0].mxu0
    %1166 = vdwg.mxu0
    %s1167 = sld [smem:[#allocation2 + $0x1]]
    %s1168 = scvt.s32.f32 %s1167
    %s1169 = scalar_lea.vmem %s2, 8
    %v1170 = vld [vmem:[%s1169] sm:$0xff]
    %v1171 = vstv %s1168
    %v1172 = vmul.f32 %v1171, %v1170
    %s1173 = ssub.f32 1.0, %s1168
    %v1174 = vstv %s1173
    %v1175 = vmul.f32 %v1174, %v1164
    %v1176 = vadd.f32 %v1172, %v1175
    %v1177 = vld [vmem:[%s4] sm:$0xff]
    %v1178 = vld [vmem:[%s4 + $0x8] sm:$0xff]
    %v1179 = vld [vmem:[%s4 + $0x10] sm:$0xff]
    %v1180 = vld [vmem:[%s4 + $0x18] sm:$0xff]
    %1181 = vmatprep.subr.mxu0 0.0
    %1182 = vmatpush1.msra.mxu0 %v1177
    %1183 = vmatprep.subr.mxu0 0.0
    %1184 = vmatpush1.msra.mxu0 %v1178
    %1185 = vmatprep.subr.mxu0 0.0
    %1186 = vmatpush1.msra.mxu0 %v1179
    %1187 = vmatprep.subr.mxu0 0.0
    %1188 = vmatpush1.msra.mxu0 %v1180
    %1189 = vmatprep.subr.mxu0 0.0
    %1190 = vmatpush1.msra.mxu0 0.0
    %1191 = vmatprep.subr.mxu0 0.0
    %1192 = vmatpush1.msra.mxu0 0.0
    %1193 = vmatprep.subr.mxu0 0.0
    %1194 = vmatpush1.msra.mxu0 0.0
    %1195 = vmatprep.subr.mxu0 0.0
    %1196 = vmatpush1.msra.mxu0 0.0
    %1197 = vmatprep.subr.mxu0 0.0
    %1198 = vmatpush1.msra.mxu0 0.0
    %1199 = vmatprep.subr.mxu0 0.0
    %1200 = vmatpush1.msra.mxu0 0.0
    %1201 = vmatprep.subr.mxu0 0.0
    %1202 = vmatpush1.msra.mxu0 0.0
    %1203 = vmatprep.subr.mxu0 0.0
    %1204 = vmatpush1.msra.mxu0 0.0
    %1205 = vmatprep.subr.mxu0 0.0
    %1206 = vmatpush1.msra.mxu0 0.0
    %1207 = vmatprep.subr.mxu0 0.0
    %1208 = vmatpush1.msra.mxu0 0.0
    %1209 = vmatprep.subr.mxu0 0.0
    %1210 = vmatpush1.msra.mxu0 0.0
    %1211 = vmatprep.subr.mxu0 0.0
    %1212 = vmatpush1.msra.mxu0 0.0
    %1213 = vmatprep.subr.mxu0 0.0
    %1214 = vmatpush1.msra.mxu0 0.0
    %1215 = vmatprep.subr.mxu0 0.0
    %1216 = vmatpush1.msra.mxu0 0.0
    %1217 = vmatprep.subr.mxu0 0.0
    %1218 = vmatpush1.msra.mxu0 0.0
    %1219 = vmatprep.subr.mxu0 0.0
    %1220 = vmatpush1.msra.mxu0 0.0
    %1221 = vmatprep.subr.mxu0 0.0
    %1222 = vmatpush1.msra.mxu0 0.0
    %1223 = vmatprep.subr.mxu0 0.0
    %1224 = vmatpush1.msra.mxu0 0.0
    %1225 = vmatprep.subr.mxu0 0.0
    %1226 = vmatpush1.msra.mxu0 0.0
    %1227 = vmatprep.subr.mxu0 0.0
    %1228 = vmatpush1.msra.mxu0 0.0
    %1229 = vmatprep.subr.mxu0 0.0
    %1230 = vmatpush1.msra.mxu0 0.0
    %1231 = vmatprep.subr.mxu0 0.0
    %1232 = vmatpush1.msra.mxu0 0.0
    %1233 = vmatprep.subr.mxu0 0.0
    %1234 = vmatpush1.msra.mxu0 0.0
    %1235 = vmatprep.subr.mxu0 0.0
    %1236 = vmatpush1.msra.mxu0 0.0
    %1237 = vmatprep.subr.mxu0 0.0
    %1238 = vmatpush1.msra.mxu0 0.0
    %1239 = vmatprep.subr.mxu0 0.0
    %1240 = vmatpush1.msra.mxu0 0.0
    %1241 = vmatprep.subr.mxu0 0.0
    %1242 = vmatpush1.msra.mxu0 0.0
    %1243 = vmatprep.subr.mxu0 0.0
    %1244 = vmatpush1.msra.mxu0 0.0
    %1245 = vmatprep.mubr.f32.mxu0 0.0
    %1246 = vmatmul.mubr.f32.gmra.mrb[0].mxu0 %v1007
    %v1247 = vpop.f32.mrb[0].mxu0
    %v1248 = vadd.f32 0.0, %v1247
    %v1249 = vpop.f32.mrb[0].mxu0
    %1250 = vdwg.mxu0
    %v1251 = vadd.f32 %v1176, %v1248
    %v1252 = vadd.f32 %v1251, %v970
    %v1253 = vxor.u32 %v1252, 2147483648
    %v1254 = vmul.f32 %v1253, 1.442695
    %v1255 = vpow.pop %v1254
    %v1256 = vadd.f32 %v1255, 1.0
    %v1257 = vrcp.pop %v1256
    %v1258 = vmul.f32 1.0, %v1257
    %v1259 = vtanh.pop %v1252
    %v1260 = vsel %vm57, %v1259, %v1258
    %v1261 = vmul.f32 %v1260, %v991
    %1263 = vrot.lane.b32.xlu0 %v1260, 64
    %v1264 = vpop.permute.xlu0 %1263
    %v1266 = vmul.f32 %v1260, %v1264
    %1268 = vrot.lane.b32.xlu0 %v1266, 32
    %v1269 = vpop.permute.xlu0 %1268
    %v1271 = vadd.f32 %v1261, %v1269
    %v1272 = vtanh.pop %v1271
    %1274 = vrot.lane.b32.xlu0 %v1272, 64
    %v1275 = vpop.permute.xlu0 %1274
    %v1277 = vmul.f32 %v1260, %v1275
    %1279 = vrot.lane.b32.xlu0 %v1277, 32
    %v1280 = vpop.permute.xlu0 %1279
    %v1281 = vsel %vm64, %v1280, 0
    %1283 = vmatprep.subr.mxu0 0.0
    %1284 = vmatpush1.msra.mxu0 %v48
    %1285 = vmatprep.subr.mxu0 0.0
    %1286 = vmatpush1.msra.mxu0 %v49
    %1287 = vmatprep.subr.mxu0 0.0
    %1288 = vmatpush1.msra.mxu0 %v50
    %1289 = vmatprep.subr.mxu0 0.0
    %1290 = vmatpush1.msra.mxu0 %v51
    %1291 = vmatprep.subr.mxu0 0.0
    %1292 = vmatpush1.msra.mxu0 0.0
    %1293 = vmatprep.subr.mxu0 0.0
    %1294 = vmatpush1.msra.mxu0 0.0
    %1295 = vmatprep.subr.mxu0 0.0
    %1296 = vmatpush1.msra.mxu0 0.0
    %1297 = vmatprep.subr.mxu0 0.0
    %1298 = vmatpush1.msra.mxu0 0.0
    %1299 = vmatprep.subr.mxu0 0.0
    %1300 = vmatpush1.msra.mxu0 0.0
    %1301 = vmatprep.subr.mxu0 0.0
    %1302 = vmatpush1.msra.mxu0 0.0
    %1303 = vmatprep.subr.mxu0 0.0
    %1304 = vmatpush1.msra.mxu0 0.0
    %1305 = vmatprep.subr.mxu0 0.0
    %1306 = vmatpush1.msra.mxu0 0.0
    %1307 = vmatprep.subr.mxu0 0.0
    %1308 = vmatpush1.msra.mxu0 0.0
    %1309 = vmatprep.subr.mxu0 0.0
    %1310 = vmatpush1.msra.mxu0 0.0
    %1311 = vmatprep.subr.mxu0 0.0
    %1312 = vmatpush1.msra.mxu0 0.0
    %1313 = vmatprep.subr.mxu0 0.0
    %1314 = vmatpush1.msra.mxu0 0.0
    %1315 = vmatprep.subr.mxu0 0.0
    %1316 = vmatpush1.msra.mxu0 0.0
    %1317 = vmatprep.subr.mxu0 0.0
    %1318 = vmatpush1.msra.mxu0 0.0
    %1319 = vmatprep.subr.mxu0 0.0
    %1320 = vmatpush1.msra.mxu0 0.0
    %1321 = vmatprep.subr.mxu0 0.0
    %1322 = vmatpush1.msra.mxu0 0.0
    %1323 = vmatprep.subr.mxu0 0.0
    %1324 = vmatpush1.msra.mxu0 0.0
    %1325 = vmatprep.subr.mxu0 0.0
    %1326 = vmatpush1.msra.mxu0 0.0
    %1327 = vmatprep.subr.mxu0 0.0
    %1328 = vmatpush1.msra.mxu0 0.0
    %1329 = vmatprep.subr.mxu0 0.0
    %1330 = vmatpush1.msra.mxu0 0.0
    %1331 = vmatprep.subr.mxu0 0.0
    %1332 = vmatpush1.msra.mxu0 0.0
    %1333 = vmatprep.subr.mxu0 0.0
    %1334 = vmatpush1.msra.mxu0 0.0
    %1335 = vmatprep.subr.mxu0 0.0
    %1336 = vmatpush1.msra.mxu0 0.0
    %1337 = vmatprep.subr.mxu0 0.0
    %1338 = vmatpush1.msra.mxu0 0.0
    %1339 = vmatprep.subr.mxu0 0.0
    %1340 = vmatpush1.msra.mxu0 0.0
    %1341 = vmatprep.subr.mxu0 0.0
    %1342 = vmatpush1.msra.mxu0 0.0
    %1343 = vmatprep.subr.mxu0 0.0
    %1344 = vmatpush1.msra.mxu0 0.0
    %1345 = vmatprep.subr.mxu0 0.0
    %1346 = vmatpush1.msra.mxu0 0.0
    %1347 = vmatprep.mubr.f32.mxu0 0.0
    %1348 = vmatmul.mubr.f32.gmra.mrb[0].mxu0 %v1281
    %v1349 = vpop.f32.mrb[0].mxu0
    %v1350 = vadd.f32 %v1002, %v1349
    %v1351 = vpop.f32.mrb[0].mxu0
    %1352 = vdwg.mxu0
    %s1353 = scalar_lea.vmem [#allocation5], 16
    %1354 = vst [vmem:[%s1353] sm:$0xff] %v1350
    %1355 = vmax.xlane.f32.xlu0 %v1350
    %v1356 = vpop.xlane.xlu0 %1355
    %vm1357 = vcmp.ge.f32.partialorder %v1350, %v1356
    %v1358 = vsel %vm1357, %v58, 128.0
    %1359 = vmin.xlane.f32.xlu0 %v1358
    %v1360 = vpop.xlane.xlu0 %1359
    %vm1361 = vcmp.eq.f32.partialorder %v58, %v1360
    %v1362 = vsel %vm1361, 1, 0
    %v1363 = vcvt.s32.f32 %v1362
    %v1364 = vld [vmem:[%s6] sm:$0xff]
    %v1365 = vld [vmem:[%s6 + $0x8] sm:$0xff]
    %v1366 = vld [vmem:[%s6 + $0x10] sm:$0xff]
    %v1367 = vld [vmem:[%s6 + $0x18] sm:$0xff]
    %v1369 = vsel %vm64, %v1363, 0
    %1371 = vmatprep.subr.mxu0 0.0
    %1372 = vmatpush1.msra.mxu0 %v1364
    %1373 = vmatprep.subr.mxu0 0.0
    %1374 = vmatpush1.msra.mxu0 %v1365
    %1375 = vmatprep.subr.mxu0 0.0
    %1376 = vmatpush1.msra.mxu0 %v1366
    %1377 = vmatprep.subr.mxu0 0.0
    %1378 = vmatpush1.msra.mxu0 %v1367
    %1379 = vmatprep.subr.mxu0 0.0
    %1380 = vmatpush1.msra.mxu0 0.0
    %1381 = vmatprep.subr.mxu0 0.0
    %1382 = vmatpush1.msra.mxu0 0.0
    %1383 = vmatprep.subr.mxu0 0.0
    %1384 = vmatpush1.msra.mxu0 0.0
    %1385 = vmatprep.subr.mxu0 0.0
    %1386 = vmatpush1.msra.mxu0 0.0
    %1387 = vmatprep.subr.mxu0 0.0
    %1388 = vmatpush1.msra.mxu0 0.0
    %1389 = vmatprep.subr.mxu0 0.0
    %1390 = vmatpush1.msra.mxu0 0.0
    %1391 = vmatprep.subr.mxu0 0.0
    %1392 = vmatpush1.msra.mxu0 0.0
    %1393 = vmatprep.subr.mxu0 0.0
    %1394 = vmatpush1.msra.mxu0 0.0
    %1395 = vmatprep.subr.mxu0 0.0
    %1396 = vmatpush1.msra.mxu0 0.0
    %1397 = vmatprep.subr.mxu0 0.0
    %1398 = vmatpush1.msra.mxu0 0.0
    %1399 = vmatprep.subr.mxu0 0.0
    %1400 = vmatpush1.msra.mxu0 0.0
    %1401 = vmatprep.subr.mxu0 0.0
    %1402 = vmatpush1.msra.mxu0 0.0
    %1403 = vmatprep.subr.mxu0 0.0
    %1404 = vmatpush1.msra.mxu0 0.0
    %1405 = vmatprep.subr.mxu0 0.0
    %1406 = vmatpush1.msra.mxu0 0.0
    %1407 = vmatprep.subr.mxu0 0.0
    %1408 = vmatpush1.msra.mxu0 0.0
    %1409 = vmatprep.subr.mxu0 0.0
    %1410 = vmatpush1.msra.mxu0 0.0
    %1411 = vmatprep.subr.mxu0 0.0
    %1412 = vmatpush1.msra.mxu0 0.0
    %1413 = vmatprep.subr.mxu0 0.0
    %1414 = vmatpush1.msra.mxu0 0.0
    %1415 = vmatprep.subr.mxu0 0.0
    %1416 = vmatpush1.msra.mxu0 0.0
    %1417 = vmatprep.subr.mxu0 0.0
    %1418 = vmatpush1.msra.mxu0 0.0
    %1419 = vmatprep.subr.mxu0 0.0
    %1420 = vmatpush1.msra.mxu0 0.0
    %1421 = vmatprep.subr.mxu0 0.0
    %1422 = vmatpush1.msra.mxu0 0.0
    %1423 = vmatprep.subr.mxu0 0.0
    %1424 = vmatpush1.msra.mxu0 0.0
    %1425 = vmatprep.subr.mxu0 0.0
    %1426 = vmatpush1.msra.mxu0 0.0
    %1427 = vmatprep.subr.mxu0 0.0
    %1428 = vmatpush1.msra.mxu0 0.0
    %1429 = vmatprep.subr.mxu0 0.0
    %1430 = vmatpush1.msra.mxu0 0.0
    %1431 = vmatprep.subr.mxu0 0.0
    %1432 = vmatpush1.msra.mxu0 0.0
    %1433 = vmatprep.subr.mxu0 0.0
    %1434 = vmatpush1.msra.mxu0 0.0
    %1435 = vmatprep.mubr.f32.mxu0 0.0
    %1436 = vmatmul.mubr.f32.gmra.mrb[0].mxu0 %v1369
    %v1437 = vpop.f32.mrb[0].mxu0
    %v1438 = vadd.f32 0.0, %v1437
    %v1439 = vpop.f32.mrb[0].mxu0
    %1440 = vdwg.mxu0
    %s1441 = sld [smem:[#allocation2 + $0x2]]
    %s1442 = scvt.s32.f32 %s1441
    %s1443 = scalar_lea.vmem %s2, 16
    %v1444 = vld [vmem:[%s1443] sm:$0xff]
    %v1445 = vstv %s1442
    %v1446 = vmul.f32 %v1445, %v1444
    %s1447 = ssub.f32 1.0, %s1442
    %v1448 = vstv %s1447
    %v1449 = vmul.f32 %v1448, %v1438
    %v1450 = vadd.f32 %v1446, %v1449
    %v1451 = vld [vmem:[%s4] sm:$0xff]
    %v1452 = vld [vmem:[%s4 + $0x8] sm:$0xff]
    %v1453 = vld [vmem:[%s4 + $0x10] sm:$0xff]
    %v1454 = vld [vmem:[%s4 + $0x18] sm:$0xff]
    %1455 = vmatprep.subr.mxu0 0.0
    %1456 = vmatpush1.msra.mxu0 %v1451
    %1457 = vmatprep.subr.mxu0 0.0
    %1458 = vmatpush1.msra.mxu0 %v1452
    %1459 = vmatprep.subr.mxu0 0.0
    %1460 = vmatpush1.msra.mxu0 %v1453
    %1461 = vmatprep.subr.mxu0 0.0
    %1462 = vmatpush1.msra.mxu0 %v1454
    %1463 = vmatprep.subr.mxu0 0.0
    %1464 = vmatpush1.msra.mxu0 0.0
    %1465 = vmatprep.subr.mxu0 0.0
    %1466 = vmatpush1.msra.mxu0 0.0
    %1467 = vmatprep.subr.mxu0 0.0
    %1468 = vmatpush1.msra.mxu0 0.0
    %1469 = vmatprep.subr.mxu0 0.0
    %1470 = vmatpush1.msra.mxu0 0.0
    %1471 = vmatprep.subr.mxu0 0.0
    %1472 = vmatpush1.msra.mxu0 0.0
    %1473 = vmatprep.subr.mxu0 0.0
    %1474 = vmatpush1.msra.mxu0 0.0
    %1475 = vmatprep.subr.mxu0 0.0
    %1476 = vmatpush1.msra.mxu0 0.0
    %1477 = vmatprep.subr.mxu0 0.0
    %1478 = vmatpush1.msra.mxu0 0.0
    %1479 = vmatprep.subr.mxu0 0.0
    %1480 = vmatpush1.msra.mxu0 0.0
    %1481 = vmatprep.subr.mxu0 0.0
    %1482 = vmatpush1.msra.mxu0 0.0
    %1483 = vmatprep.subr.mxu0 0.0
    %1484 = vmatpush1.msra.mxu0 0.0
    %1485 = vmatprep.subr.mxu0 0.0
    %1486 = vmatpush1.msra.mxu0 0.0
    %1487 = vmatprep.subr.mxu0 0.0
    %1488 = vmatpush1.msra.mxu0 0.0
    %1489 = vmatprep.subr.mxu0 0.0
    %1490 = vmatpush1.msra.mxu0 0.0
    %1491 = vmatprep.subr.mxu0 0.0
    %1492 = vmatpush1.msra.mxu0 0.0
    %1493 = vmatprep.subr.mxu0 0.0
    %1494 = vmatpush1.msra.mxu0 0.0
    %1495 = vmatprep.subr.mxu0 0.0
    %1496 = vmatpush1.msra.mxu0 0.0
    %1497 = vmatprep.subr.mxu0 0.0
    %1498 = vmatpush1.msra.mxu0 0.0
    %1499 = vmatprep.subr.mxu0 0.0
    %1500 = vmatpush1.msra.mxu0 0.0
    %1501 = vmatprep.subr.mxu0 0.0
    %1502 = vmatpush1.msra.mxu0 0.0
    %1503 = vmatprep.subr.mxu0 0.0
    %1504 = vmatpush1.msra.mxu0 0.0
    %1505 = vmatprep.subr.mxu0 0.0
    %1506 = vmatpush1.msra.mxu0 0.0
    %1507 = vmatprep.subr.mxu0 0.0
    %1508 = vmatpush1.msra.mxu0 0.0
    %1509 = vmatprep.subr.mxu0 0.0
    %1510 = vmatpush1.msra.mxu0 0.0
    %1511 = vmatprep.subr.mxu0 0.0
    %1512 = vmatpush1.msra.mxu0 0.0
    %1513 = vmatprep.subr.mxu0 0.0
    %1514 = vmatpush1.msra.mxu0 0.0
    %1515 = vmatprep.subr.mxu0 0.0
    %1516 = vmatpush1.msra.mxu0 0.0
    %1517 = vmatprep.subr.mxu0 0.0
    %1518 = vmatpush1.msra.mxu0 0.0
    %1519 = vmatprep.mubr.f32.mxu0 0.0
    %1520 = vmatmul.mubr.f32.gmra.mrb[0].mxu0 %v1281
    %v1521 = vpop.f32.mrb[0].mxu0
    %v1522 = vadd.f32 0.0, %v1521
    %v1523 = vpop.f32.mrb[0].mxu0
    %1524 = vdwg.mxu0
    %v1525 = vadd.f32 %v1450, %v1522
    %v1526 = vadd.f32 %v1525, %v970
    %v1527 = vxor.u32 %v1526, 2147483648
    %v1528 = vmul.f32 %v1527, 1.442695
    %v1529 = vpow.pop %v1528
    %v1530 = vadd.f32 %v1529, 1.0
    %v1531 = vrcp.pop %v1530
    %v1532 = vmul.f32 1.0, %v1531
    %v1533 = vtanh.pop %v1526
    %v1534 = vsel %vm57, %v1533, %v1532
    %v1535 = vmul.f32 %v1534, %v1271
    %1537 = vrot.lane.b32.xlu0 %v1534, 64
    %v1538 = vpop.permute.xlu0 %1537
    %v1540 = vmul.f32 %v1534, %v1538
    %1542 = vrot.lane.b32.xlu0 %v1540, 32
    %v1543 = vpop.permute.xlu0 %1542
    %v1545 = vadd.f32 %v1535, %v1543
    %v1546 = vtanh.pop %v1545
    %1548 = vrot.lane.b32.xlu0 %v1546, 64
    %v1549 = vpop.permute.xlu0 %1548
    %v1551 = vmul.f32 %v1534, %v1549
    %1553 = vrot.lane.b32.xlu0 %v1551, 32
    %v1554 = vpop.permute.xlu0 %1553
    %v1555 = vsel %vm64, %v1554, 0
    %1557 = vmatprep.subr.mxu0 0.0
    %1558 = vmatpush1.msra.mxu0 %v48
    %1559 = vmatprep.subr.mxu0 0.0
    %1560 = vmatpush1.msra.mxu0 %v49
    %1561 = vmatprep.subr.mxu0 0.0
    %1562 = vmatpush1.msra.mxu0 %v50
    %1563 = vmatprep.subr.mxu0 0.0
    %1564 = vmatpush1.msra.mxu0 %v51
    %1565 = vmatprep.subr.mxu0 0.0
    %1566 = vmatpush1.msra.mxu0 0.0
    %1567 = vmatprep.subr.mxu0 0.0
    %1568 = vmatpush1.msra.mxu0 0.0
    %1569 = vmatprep.subr.mxu0 0.0
    %1570 = vmatpush1.msra.mxu0 0.0
    %1571 = vmatprep.subr.mxu0 0.0
    %1572 = vmatpush1.msra.mxu0 0.0
    %1573 = vmatprep.subr.mxu0 0.0
    %1574 = vmatpush1.msra.mxu0 0.0
    %1575 = vmatprep.subr.mxu0 0.0
    %1576 = vmatpush1.msra.mxu0 0.0
    %1577 = vmatprep.subr.mxu0 0.0
    %1578 = vmatpush1.msra.mxu0 0.0
    %1579 = vmatprep.subr.mxu0 0.0
    %1580 = vmatpush1.msra.mxu0 0.0
    %1581 = vmatprep.subr.mxu0 0.0
    %1582 = vmatpush1.msra.mxu0 0.0
    %1583 = vmatprep.subr.mxu0 0.0
    %1584 = vmatpush1.msra.mxu0 0.0
    %1585 = vmatprep.subr.mxu0 0.0
    %1586 = vmatpush1.msra.mxu0 0.0
    %1587 = vmatprep.subr.mxu0 0.0
    %1588 = vmatpush1.msra.mxu0 0.0
    %1589 = vmatprep.subr.mxu0 0.0
    %1590 = vmatpush1.msra.mxu0 0.0
    %1591 = vmatprep.subr.mxu0 0.0
    %1592 = vmatpush1.msra.mxu0 0.0
    %1593 = vmatprep.subr.mxu0 0.0
    %1594 = vmatpush1.msra.mxu0 0.0
    %1595 = vmatprep.subr.mxu0 0.0
    %1596 = vmatpush1.msra.mxu0 0.0
    %1597 = vmatprep.subr.mxu0 0.0
    %1598 = vmatpush1.msra.mxu0 0.0
    %1599 = vmatprep.subr.mxu0 0.0
    %1600 = vmatpush1.msra.mxu0 0.0
    %1601 = vmatprep.subr.mxu0 0.0
    %1602 = vmatpush1.msra.mxu0 0.0
    %1603 = vmatprep.subr.mxu0 0.0
    %1604 = vmatpush1.msra.mxu0 0.0
    %1605 = vmatprep.subr.mxu0 0.0
    %1606 = vmatpush1.msra.mxu0 0.0
    %1607 = vmatprep.subr.mxu0 0.0
    %1608 = vmatpush1.msra.mxu0 0.0
    %1609 = vmatprep.subr.mxu0 0.0
    %1610 = vmatpush1.msra.mxu0 0.0
    %1611 = vmatprep.subr.mxu0 0.0
    %1612 = vmatpush1.msra.mxu0 0.0
    %1613 = vmatprep.subr.mxu0 0.0
    %1614 = vmatpush1.msra.mxu0 0.0
    %1615 = vmatprep.subr.mxu0 0.0
    %1616 = vmatpush1.msra.mxu0 0.0
    %1617 = vmatprep.subr.mxu0 0.0
    %1618 = vmatpush1.msra.mxu0 0.0
    %1619 = vmatprep.subr.mxu0 0.0
    %1620 = vmatpush1.msra.mxu0 0.0
    %1621 = vmatprep.mubr.f32.mxu0 0.0
    %1622 = vmatmul.mubr.f32.gmra.mrb[0].mxu0 %v1555
    %v1623 = vpop.f32.mrb[0].mxu0
    %v1624 = vadd.f32 %v1002, %v1623
    %v1625 = vpop.f32.mrb[0].mxu0
    %1626 = vdwg.mxu0
    %s1627 = scalar_lea.vmem [#allocation5], 24
    %1628 = vst [vmem:[%s1627] sm:$0xff] %v1624
    %1629 = vmax.xlane.f32.xlu0 %v1624
    %v1630 = vpop.xlane.xlu0 %1629
    %vm1631 = vcmp.ge.f32.partialorder %v1624, %v1630
    %v1632 = vsel %vm1631, %v58, 128.0
    %1633 = vmin.xlane.f32.xlu0 %v1632
    %v1634 = vpop.xlane.xlu0 %1633
    %vm1635 = vcmp.eq.f32.partialorder %v58, %v1634
    %v1636 = vsel %vm1635, 1, 0
    %v1637 = vcvt.s32.f32 %v1636
    %v1638 = vld [vmem:[%s6] sm:$0xff]
    %v1639 = vld [vmem:[%s6 + $0x8] sm:$0xff]
    %v1640 = vld [vmem:[%s6 + $0x10] sm:$0xff]
    %v1641 = vld [vmem:[%s6 + $0x18] sm:$0xff]
    %v1643 = vsel %vm64, %v1637, 0
    %1645 = vmatprep.subr.mxu0 0.0
    %1646 = vmatpush1.msra.mxu0 %v1638
    %1647 = vmatprep.subr.mxu0 0.0
    %1648 = vmatpush1.msra.mxu0 %v1639
    %1649 = vmatprep.subr.mxu0 0.0
    %1650 = vmatpush1.msra.mxu0 %v1640
    %1651 = vmatprep.subr.mxu0 0.0
    %1652 = vmatpush1.msra.mxu0 %v1641
    %1653 = vmatprep.subr.mxu0 0.0
    %1654 = vmatpush1.msra.mxu0 0.0
    %1655 = vmatprep.subr.mxu0 0.0
    %1656 = vmatpush1.msra.mxu0 0.0
    %1657 = vmatprep.subr.mxu0 0.0
    %1658 = vmatpush1.msra.mxu0 0.0
    %1659 = vmatprep.subr.mxu0 0.0
    %1660 = vmatpush1.msra.mxu0 0.0
    %1661 = vmatprep.subr.mxu0 0.0
    %1662 = vmatpush1.msra.mxu0 0.0
    %1663 = vmatprep.subr.mxu0 0.0
    %1664 = vmatpush1.msra.mxu0 0.0
    %1665 = vmatprep.subr.mxu0 0.0
    %1666 = vmatpush1.msra.mxu0 0.0
    %1667 = vmatprep.subr.mxu0 0.0
    %1668 = vmatpush1.msra.mxu0 0.0
    %1669 = vmatprep.subr.mxu0 0.0
    %1670 = vmatpush1.msra.mxu0 0.0
    %1671 = vmatprep.subr.mxu0 0.0
    %1672 = vmatpush1.msra.mxu0 0.0
    %1673 = vmatprep.subr.mxu0 0.0
    %1674 = vmatpush1.msra.mxu0 0.0
    %1675 = vmatprep.subr.mxu0 0.0
    %1676 = vmatpush1.msra.mxu0 0.0
    %1677 = vmatprep.subr.mxu0 0.0
    %1678 = vmatpush1.msra.mxu0 0.0
    %1679 = vmatprep.subr.mxu0 0.0
    %1680 = vmatpush1.msra.mxu0 0.0
    %1681 = vmatprep.subr.mxu0 0.0
    %1682 = vmatpush1.msra.mxu0 0.0
    %1683 = vmatprep.subr.mxu0 0.0
    %1684 = vmatpush1.msra.mxu0 0.0
    %1685 = vmatprep.subr.mxu0 0.0
    %1686 = vmatpush1.msra.mxu0 0.0
    %1687 = vmatprep.subr.mxu0 0.0
    %1688 = vmatpush1.msra.mxu0 0.0
    %1689 = vmatprep.subr.mxu0 0.0
    %1690 = vmatpush1.msra.mxu0 0.0
    %1691 = vmatprep.subr.mxu0 0.0
    %1692 = vmatpush1.msra.mxu0 0.0
    %1693 = vmatprep.subr.mxu0 0.0
    %1694 = vmatpush1.msra.mxu0 0.0
    %1695 = vmatprep.subr.mxu0 0.0
    %1696 = vmatpush1.msra.mxu0 0.0
    %1697 = vmatprep.subr.mxu0 0.0
    %1698 = vmatpush1.msra.mxu0 0.0
    %1699 = vmatprep.subr.mxu0 0.0
    %1700 = vmatpush1.msra.mxu0 0.0
    %1701 = vmatprep.subr.mxu0 0.0
    %1702 = vmatpush1.msra.mxu0 0.0
    %1703 = vmatprep.subr.mxu0 0.0
    %1704 = vmatpush1.msra.mxu0 0.0
    %1705 = vmatprep.subr.mxu0 0.0
    %1706 = vmatpush1.msra.mxu0 0.0
    %1707 = vmatprep.subr.mxu0 0.0
    %1708 = vmatpush1.msra.mxu0 0.0
    %1709 = vmatprep.mubr.f32.mxu0 0.0
    %1710 = vmatmul.mubr.f32.gmra.mrb[0].mxu0 %v1643
    %v1711 = vpop.f32.mrb[0].mxu0
    %v1712 = vadd.f32 0.0, %v1711
    %v1713 = vpop.f32.mrb[0].mxu0
    %1714 = vdwg.mxu0
    %s1715 = sld [smem:[#allocation2 + $0x3]]
    %s1716 = scvt.s32.f32 %s1715
    %s1717 = scalar_lea.vmem %s2, 24
    %v1718 = vld [vmem:[%s1717] sm:$0xff]
    %v1719 = vstv %s1716
    %v1720 = vmul.f32 %v1719, %v1718
    %s1721 = ssub.f32 1.0, %s1716
    %v1722 = vstv %s1721
    %v1723 = vmul.f32 %v1722, %v1712
    %v1724 = vadd.f32 %v1720, %v1723
    %v1725 = vld [vmem:[%s4] sm:$0xff]
    %v1726 = vld [vmem:[%s4 + $0x8] sm:$0xff]
    %v1727 = vld [vmem:[%s4 + $0x10] sm:$0xff]
    %v1728 = vld [vmem:[%s4 + $0x18] sm:$0xff]
    %1729 = vmatprep.subr.mxu0 0.0
    %1730 = vmatpush1.msra.mxu0 %v1725
    %1731 = vmatprep.subr.mxu0 0.0
    %1732 = vmatpush1.msra.mxu0 %v1726
    %1733 = vmatprep.subr.mxu0 0.0
    %1734 = vmatpush1.msra.mxu0 %v1727
    %1735 = vmatprep.subr.mxu0 0.0
    %1736 = vmatpush1.msra.mxu0 %v1728
    %1737 = vmatprep.subr.mxu0 0.0
    %1738 = vmatpush1.msra.mxu0 0.0
    %1739 = vmatprep.subr.mxu0 0.0
    %1740 = vmatpush1.msra.mxu0 0.0
    %1741 = vmatprep.subr.mxu0 0.0
    %1742 = vmatpush1.msra.mxu0 0.0
    %1743 = vmatprep.subr.mxu0 0.0
    %1744 = vmatpush1.msra.mxu0 0.0
    %1745 = vmatprep.subr.mxu0 0.0
    %1746 = vmatpush1.msra.mxu0 0.0
    %1747 = vmatprep.subr.mxu0 0.0
    %1748 = vmatpush1.msra.mxu0 0.0
    %1749 = vmatprep.subr.mxu0 0.0
    %1750 = vmatpush1.msra.mxu0 0.0
    %1751 = vmatprep.subr.mxu0 0.0
    %1752 = vmatpush1.msra.mxu0 0.0
    %1753 = vmatprep.subr.mxu0 0.0
    %1754 = vmatpush1.msra.mxu0 0.0
    %1755 = vmatprep.subr.mxu0 0.0
    %1756 = vmatpush1.msra.mxu0 0.0
    %1757 = vmatprep.subr.mxu0 0.0
    %1758 = vmatpush1.msra.mxu0 0.0
    %1759 = vmatprep.subr.mxu0 0.0
    %1760 = vmatpush1.msra.mxu0 0.0
    %1761 = vmatprep.subr.mxu0 0.0
    %1762 = vmatpush1.msra.mxu0 0.0
    %1763 = vmatprep.subr.mxu0 0.0
    %1764 = vmatpush1.msra.mxu0 0.0
    %1765 = vmatprep.subr.mxu0 0.0
    %1766 = vmatpush1.msra.mxu0 0.0
    %1767 = vmatprep.subr.mxu0 0.0
    %1768 = vmatpush1.msra.mxu0 0.0
    %1769 = vmatprep.subr.mxu0 0.0
    %1770 = vmatpush1.msra.mxu0 0.0
    %1771 = vmatprep.subr.mxu0 0.0
    %1772 = vmatpush1.msra.mxu0 0.0
    %1773 = vmatprep.subr.mxu0 0.0
    %1774 = vmatpush1.msra.mxu0 0.0
    %1775 = vmatprep.subr.mxu0 0.0
    %1776 = vmatpush1.msra.mxu0 0.0
    %1777 = vmatprep.subr.mxu0 0.0
    %1778 = vmatpush1.msra.mxu0 0.0
    %1779 = vmatprep.subr.mxu0 0.0
    %1780 = vmatpush1.msra.mxu0 0.0
    %1781 = vmatprep.subr.mxu0 0.0
    %1782 = vmatpush1.msra.mxu0 0.0
    %1783 = vmatprep.subr.mxu0 0.0
    %1784 = vmatpush1.msra.mxu0 0.0
    %1785 = vmatprep.subr.mxu0 0.0
    %1786 = vmatpush1.msra.mxu0 0.0
    %1787 = vmatprep.subr.mxu0 0.0
    %1788 = vmatpush1.msra.mxu0 0.0
    %1789 = vmatprep.subr.mxu0 0.0
    %1790 = vmatpush1.msra.mxu0 0.0
    %1791 = vmatprep.subr.mxu0 0.0
    %1792 = vmatpush1.msra.mxu0 0.0
    %1793 = vmatprep.mubr.f32.mxu0 0.0
    %1794 = vmatmul.mubr.f32.gmra.mrb[0].mxu0 %v1555
    %v1795 = vpop.f32.mrb[0].mxu0
    %v1796 = vadd.f32 0.0, %v1795
    %v1797 = vpop.f32.mrb[0].mxu0
    %1798 = vdwg.mxu0
    %v1799 = vadd.f32 %v1724, %v1796
    %v1800 = vadd.f32 %v1799, %v970
    %v1801 = vxor.u32 %v1800, 2147483648
    %v1802 = vmul.f32 %v1801, 1.442695
    %v1803 = vpow.pop %v1802
    %v1804 = vadd.f32 %v1803, 1.0
    %v1805 = vrcp.pop %v1804
    %v1806 = vmul.f32 1.0, %v1805
    %v1807 = vtanh.pop %v1800
    %v1808 = vsel %vm57, %v1807, %v1806
    %v1809 = vmul.f32 %v1808, %v1545
    %1811 = vrot.lane.b32.xlu0 %v1808, 64
    %v1812 = vpop.permute.xlu0 %1811
    %v1814 = vmul.f32 %v1808, %v1812
    %1816 = vrot.lane.b32.xlu0 %v1814, 32
    %v1817 = vpop.permute.xlu0 %1816
    %v1819 = vadd.f32 %v1809, %v1817
    %v1820 = vtanh.pop %v1819
    %1822 = vrot.lane.b32.xlu0 %v1820, 64
    %v1823 = vpop.permute.xlu0 %1822
    %v1825 = vmul.f32 %v1808, %v1823
    %1827 = vrot.lane.b32.xlu0 %v1825, 32
    %v1828 = vpop.permute.xlu0 %1827
    %v1829 = vsel %vm64, %v1828, 0
    %1831 = vmatprep.subr.mxu0 0.0
    %1832 = vmatpush1.msra.mxu0 %v48
    %1833 = vmatprep.subr.mxu0 0.0
    %1834 = vmatpush1.msra.mxu0 %v49
    %1835 = vmatprep.subr.mxu0 0.0
    %1836 = vmatpush1.msra.mxu0 %v50
    %1837 = vmatprep.subr.mxu0 0.0
    %1838 = vmatpush1.msra.mxu0 %v51
    %1839 = vmatprep.subr.mxu0 0.0
    %1840 = vmatpush1.msra.mxu0 0.0
    %1841 = vmatprep.subr.mxu0 0.0
    %1842 = vmatpush1.msra.mxu0 0.0
    %1843 = vmatprep.subr.mxu0 0.0
    %1844 = vmatpush1.msra.mxu0 0.0
    %1845 = vmatprep.subr.mxu0 0.0
    %1846 = vmatpush1.msra.mxu0 0.0
    %1847 = vmatprep.subr.mxu0 0.0
    %1848 = vmatpush1.msra.mxu0 0.0
    %1849 = vmatprep.subr.mxu0 0.0
    %1850 = vmatpush1.msra.mxu0 0.0
    %1851 = vmatprep.subr.mxu0 0.0
    %1852 = vmatpush1.msra.mxu0 0.0
    %1853 = vmatprep.subr.mxu0 0.0
    %1854 = vmatpush1.msra.mxu0 0.0
    %1855 = vmatprep.subr.mxu0 0.0
    %1856 = vmatpush1.msra.mxu0 0.0
    %1857 = vmatprep.subr.mxu0 0.0
    %1858 = vmatpush1.msra.mxu0 0.0
    %1859 = vmatprep.subr.mxu0 0.0
    %1860 = vmatpush1.msra.mxu0 0.0
    %1861 = vmatprep.subr.mxu0 0.0
    %1862 = vmatpush1.msra.mxu0 0.0
    %1863 = vmatprep.subr.mxu0 0.0
    %1864 = vmatpush1.msra.mxu0 0.0
    %1865 = vmatprep.subr.mxu0 0.0
    %1866 = vmatpush1.msra.mxu0 0.0
    %1867 = vmatprep.subr.mxu0 0.0
    %1868 = vmatpush1.msra.mxu0 0.0
    %1869 = vmatprep.subr.mxu0 0.0
    %1870 = vmatpush1.msra.mxu0 0.0
    %1871 = vmatprep.subr.mxu0 0.0
    %1872 = vmatpush1.msra.mxu0 0.0
    %1873 = vmatprep.subr.mxu0 0.0
    %1874 = vmatpush1.msra.mxu0 0.0
    %1875 = vmatprep.subr.mxu0 0.0
    %1876 = vmatpush1.msra.mxu0 0.0
    %1877 = vmatprep.subr.mxu0 0.0
    %1878 = vmatpush1.msra.mxu0 0.0
    %1879 = vmatprep.subr.mxu0 0.0
    %1880 = vmatpush1.msra.mxu0 0.0
    %1881 = vmatprep.subr.mxu0 0.0
    %1882 = vmatpush1.msra.mxu0 0.0
    %1883 = vmatprep.subr.mxu0 0.0
    %1884 = vmatpush1.msra.mxu0 0.0
    %1885 = vmatprep.subr.mxu0 0.0
    %1886 = vmatpush1.msra.mxu0 0.0
    %1887 = vmatprep.subr.mxu0 0.0
    %1888 = vmatpush1.msra.mxu0 0.0
    %1889 = vmatprep.subr.mxu0 0.0
    %1890 = vmatpush1.msra.mxu0 0.0
    %1891 = vmatprep.subr.mxu0 0.0
    %1892 = vmatpush1.msra.mxu0 0.0
    %1893 = vmatprep.subr.mxu0 0.0
    %1894 = vmatpush1.msra.mxu0 0.0
    %1895 = vmatprep.mubr.f32.mxu0 0.0
    %1896 = vmatmul.mubr.f32.gmra.mrb[0].mxu0 %v1829
    %v1897 = vpop.f32.mrb[0].mxu0
    %v1898 = vadd.f32 %v1002, %v1897
    %v1899 = vpop.f32.mrb[0].mxu0
    %1900 = vdwg.mxu0
    %s1901 = scalar_lea.vmem [#allocation5], 32
    %1902 = vst [vmem:[%s1901] sm:$0xff] %v1898
    %1903 = vmax.xlane.f32.xlu0 %v1898
    %v1904 = vpop.xlane.xlu0 %1903
    %vm1905 = vcmp.ge.f32.partialorder %v1898, %v1904
    %v1906 = vsel %vm1905, %v58, 128.0
    %1907 = vmin.xlane.f32.xlu0 %v1906
    %v1908 = vpop.xlane.xlu0 %1907
    %vm1909 = vcmp.eq.f32.partialorder %v58, %v1908
    %v1910 = vsel %vm1909, 1, 0
    %v1911 = vcvt.s32.f32 %v1910
    %v1912 = vld [vmem:[%s6] sm:$0xff]
    %v1913 = vld [vmem:[%s6 + $0x8] sm:$0xff]
    %v1914 = vld [vmem:[%s6 + $0x10] sm:$0xff]
    %v1915 = vld [vmem:[%s6 + $0x18] sm:$0xff]
    %v1917 = vsel %vm64, %v1911, 0
    %1919 = vmatprep.subr.mxu0 0.0
    %1920 = vmatpush1.msra.mxu0 %v1912
    %1921 = vmatprep.subr.mxu0 0.0
    %1922 = vmatpush1.msra.mxu0 %v1913
    %1923 = vmatprep.subr.mxu0 0.0
    %1924 = vmatpush1.msra.mxu0 %v1914
    %1925 = vmatprep.subr.mxu0 0.0
    %1926 = vmatpush1.msra.mxu0 %v1915
    %1927 = vmatprep.subr.mxu0 0.0
    %1928 = vmatpush1.msra.mxu0 0.0
    %1929 = vmatprep.subr.mxu0 0.0
    %1930 = vmatpush1.msra.mxu0 0.0
    %1931 = vmatprep.subr.mxu0 0.0
    %1932 = vmatpush1.msra.mxu0 0.0
    %1933 = vmatprep.subr.mxu0 0.0
    %1934 = vmatpush1.msra.mxu0 0.0
    %1935 = vmatprep.subr.mxu0 0.0
    %1936 = vmatpush1.msra.mxu0 0.0
    %1937 = vmatprep.subr.mxu0 0.0
    %1938 = vmatpush1.msra.mxu0 0.0
    %1939 = vmatprep.subr.mxu0 0.0
    %1940 = vmatpush1.msra.mxu0 0.0
    %1941 = vmatprep.subr.mxu0 0.0
    %1942 = vmatpush1.msra.mxu0 0.0
    %1943 = vmatprep.subr.mxu0 0.0
    %1944 = vmatpush1.msra.mxu0 0.0
    %1945 = vmatprep.subr.mxu0 0.0
    %1946 = vmatpush1.msra.mxu0 0.0
    %1947 = vmatprep.subr.mxu0 0.0
    %1948 = vmatpush1.msra.mxu0 0.0
    %1949 = vmatprep.subr.mxu0 0.0
    %1950 = vmatpush1.msra.mxu0 0.0
    %1951 = vmatprep.subr.mxu0 0.0
    %1952 = vmatpush1.msra.mxu0 0.0
    %1953 = vmatprep.subr.mxu0 0.0
    %1954 = vmatpush1.msra.mxu0 0.0
    %1955 = vmatprep.subr.mxu0 0.0
    %1956 = vmatpush1.msra.mxu0 0.0
    %1957 = vmatprep.subr.mxu0 0.0
    %1958 = vmatpush1.msra.mxu0 0.0
    %1959 = vmatprep.subr.mxu0 0.0
    %1960 = vmatpush1.msra.mxu0 0.0
    %1961 = vmatprep.subr.mxu0 0.0
    %1962 = vmatpush1.msra.mxu0 0.0
    %1963 = vmatprep.subr.mxu0 0.0
    %1964 = vmatpush1.msra.mxu0 0.0
    %1965 = vmatprep.subr.mxu0 0.0
    %1966 = vmatpush1.msra.mxu0 0.0
    %1967 = vmatprep.subr.mxu0 0.0
    %1968 = vmatpush1.msra.mxu0 0.0
    %1969 = vmatprep.subr.mxu0 0.0
    %1970 = vmatpush1.msra.mxu0 0.0
    %1971 = vmatprep.subr.mxu0 0.0
    %1972 = vmatpush1.msra.mxu0 0.0
    %1973 = vmatprep.subr.mxu0 0.0
    %1974 = vmatpush1.msra.mxu0 0.0
    %1975 = vmatprep.subr.mxu0 0.0
    %1976 = vmatpush1.msra.mxu0 0.0
    %1977 = vmatprep.subr.mxu0 0.0
    %1978 = vmatpush1.msra.mxu0 0.0
    %1979 = vmatprep.subr.mxu0 0.0
    %1980 = vmatpush1.msra.mxu0 0.0
    %1981 = vmatprep.subr.mxu0 0.0
    %1982 = vmatpush1.msra.mxu0 0.0
    %1983 = vmatprep.mubr.f32.mxu0 0.0
    %1984 = vmatmul.mubr.f32.gmra.mrb[0].mxu0 %v1917
    %v1985 = vpop.f32.mrb[0].mxu0
    %v1986 = vadd.f32 0.0, %v1985
    %v1987 = vpop.f32.mrb[0].mxu0
    %1988 = vdwg.mxu0
    %s1989 = sld [smem:[#allocation2 + $0x4]]
    %s1990 = scvt.s32.f32 %s1989
    %s1991 = scalar_lea.vmem %s2, 32
    %v1992 = vld [vmem:[%s1991] sm:$0xff]
    %v1993 = vstv %s1990
    %v1994 = vmul.f32 %v1993, %v1992
    %s1995 = ssub.f32 1.0, %s1990
    %v1996 = vstv %s1995
    %v1997 = vmul.f32 %v1996, %v1986
    %v1998 = vadd.f32 %v1994, %v1997
    %v1999 = vld [vmem:[%s4] sm:$0xff]
    %v2000 = vld [vmem:[%s4 + $0x8] sm:$0xff]
    %v2001 = vld [vmem:[%s4 + $0x10] sm:$0xff]
    %v2002 = vld [vmem:[%s4 + $0x18] sm:$0xff]
    %2003 = vmatprep.subr.mxu0 0.0
    %2004 = vmatpush1.msra.mxu0 %v1999
    %2005 = vmatprep.subr.mxu0 0.0
    %2006 = vmatpush1.msra.mxu0 %v2000
    %2007 = vmatprep.subr.mxu0 0.0
    %2008 = vmatpush1.msra.mxu0 %v2001
    %2009 = vmatprep.subr.mxu0 0.0
    %2010 = vmatpush1.msra.mxu0 %v2002
    %2011 = vmatprep.subr.mxu0 0.0
    %2012 = vmatpush1.msra.mxu0 0.0
    %2013 = vmatprep.subr.mxu0 0.0
    %2014 = vmatpush1.msra.mxu0 0.0
    %2015 = vmatprep.subr.mxu0 0.0
    %2016 = vmatpush1.msra.mxu0 0.0
    %2017 = vmatprep.subr.mxu0 0.0
    %2018 = vmatpush1.msra.mxu0 0.0
    %2019 = vmatprep.subr.mxu0 0.0
    %2020 = vmatpush1.msra.mxu0 0.0
    %2021 = vmatprep.subr.mxu0 0.0
    %2022 = vmatpush1.msra.mxu0 0.0
    %2023 = vmatprep.subr.mxu0 0.0
    %2024 = vmatpush1.msra.mxu0 0.0
    %2025 = vmatprep.subr.mxu0 0.0
    %2026 = vmatpush1.msra.mxu0 0.0
    %2027 = vmatprep.subr.mxu0 0.0
    %2028 = vmatpush1.msra.mxu0 0.0
    %2029 = vmatprep.subr.mxu0 0.0
    %2030 = vmatpush1.msra.mxu0 0.0
    %2031 = vmatprep.subr.mxu0 0.0
    %2032 = vmatpush1.msra.mxu0 0.0
    %2033 = vmatprep.subr.mxu0 0.0
    %2034 = vmatpush1.msra.mxu0 0.0
    %2035 = vmatprep.subr.mxu0 0.0
    %2036 = vmatpush1.msra.mxu0 0.0
    %2037 = vmatprep.subr.mxu0 0.0
    %2038 = vmatpush1.msra.mxu0 0.0
    %2039 = vmatprep.subr.mxu0 0.0
    %2040 = vmatpush1.msra.mxu0 0.0
    %2041 = vmatprep.subr.mxu0 0.0
    %2042 = vmatpush1.msra.mxu0 0.0
    %2043 = vmatprep.subr.mxu0 0.0
    %2044 = vmatpush1.msra.mxu0 0.0
    %2045 = vmatprep.subr.mxu0 0.0
    %2046 = vmatpush1.msra.mxu0 0.0
    %2047 = vmatprep.subr.mxu0 0.0
    %2048 = vmatpush1.msra.mxu0 0.0
    %2049 = vmatprep.subr.mxu0 0.0
    %2050 = vmatpush1.msra.mxu0 0.0
    %2051 = vmatprep.subr.mxu0 0.0
    %2052 = vmatpush1.msra.mxu0 0.0
    %2053 = vmatprep.subr.mxu0 0.0
    %2054 = vmatpush1.msra.mxu0 0.0
    %2055 = vmatprep.subr.mxu0 0.0
    %2056 = vmatpush1.msra.mxu0 0.0
    %2057 = vmatprep.subr.mxu0 0.0
    %2058 = vmatpush1.msra.mxu0 0.0
    %2059 = vmatprep.subr.mxu0 0.0
    %2060 = vmatpush1.msra.mxu0 0.0
    %2061 = vmatprep.subr.mxu0 0.0
    %2062 = vmatpush1.msra.mxu0 0.0
    %2063 = vmatprep.subr.mxu0 0.0
    %2064 = vmatpush1.msra.mxu0 0.0
    %2065 = vmatprep.subr.mxu0 0.0
    %2066 = vmatpush1.msra.mxu0 0.0
    %2067 = vmatprep.mubr.f32.mxu0 0.0
    %2068 = vmatmul.mubr.f32.gmra.mrb[0].mxu0 %v1829
    %v2069 = vpop.f32.mrb[0].mxu0
    %v2070 = vadd.f32 0.0, %v2069
    %v2071 = vpop.f32.mrb[0].mxu0
    %2072 = vdwg.mxu0
    %v2073 = vadd.f32 %v1998, %v2070
    %v2074 = vadd.f32 %v2073, %v970
    %v2075 = vxor.u32 %v2074, 2147483648
    %v2076 = vmul.f32 %v2075, 1.442695
    %v2077 = vpow.pop %v2076
    %v2078 = vadd.f32 %v2077, 1.0
    %v2079 = vrcp.pop %v2078
    %v2080 = vmul.f32 1.0, %v2079
    %v2081 = vtanh.pop %v2074
    %v2082 = vsel %vm57, %v2081, %v2080
    %v2083 = vmul.f32 %v2082, %v1819
    %2085 = vrot.lane.b32.xlu0 %v2082, 64
    %v2086 = vpop.permute.xlu0 %2085
    %v2088 = vmul.f32 %v2082, %v2086
    %2090 = vrot.lane.b32.xlu0 %v2088, 32
    %v2091 = vpop.permute.xlu0 %2090
    %v2093 = vadd.f32 %v2083, %v2091
    %v2094 = vtanh.pop %v2093
    %2096 = vrot.lane.b32.xlu0 %v2094, 64
    %v2097 = vpop.permute.xlu0 %2096
    %v2099 = vmul.f32 %v2082, %v2097
    %2101 = vrot.lane.b32.xlu0 %v2099, 32
    %v2102 = vpop.permute.xlu0 %2101
    %v2103 = vsel %vm64, %v2102, 0
    %2105 = vmatprep.subr.mxu0 0.0
    %2106 = vmatpush1.msra.mxu0 %v48
    %2107 = vmatprep.subr.mxu0 0.0
    %2108 = vmatpush1.msra.mxu0 %v49
    %2109 = vmatprep.subr.mxu0 0.0
    %2110 = vmatpush1.msra.mxu0 %v50
    %2111 = vmatprep.subr.mxu0 0.0
    %2112 = vmatpush1.msra.mxu0 %v51
    %2113 = vmatprep.subr.mxu0 0.0
    %2114 = vmatpush1.msra.mxu0 0.0
    %2115 = vmatprep.subr.mxu0 0.0
    %2116 = vmatpush1.msra.mxu0 0.0
    %2117 = vmatprep.subr.mxu0 0.0
    %2118 = vmatpush1.msra.mxu0 0.0
    %2119 = vmatprep.subr.mxu0 0.0
    %2120 = vmatpush1.msra.mxu0 0.0
    %2121 = vmatprep.subr.mxu0 0.0
    %2122 = vmatpush1.msra.mxu0 0.0
    %2123 = vmatprep.subr.mxu0 0.0
    %2124 = vmatpush1.msra.mxu0 0.0
    %2125 = vmatprep.subr.mxu0 0.0
    %2126 = vmatpush1.msra.mxu0 0.0
    %2127 = vmatprep.subr.mxu0 0.0
    %2128 = vmatpush1.msra.mxu0 0.0
    %2129 = vmatprep.subr.mxu0 0.0
    %2130 = vmatpush1.msra.mxu0 0.0
    %2131 = vmatprep.subr.mxu0 0.0
    %2132 = vmatpush1.msra.mxu0 0.0
    %2133 = vmatprep.subr.mxu0 0.0
    %2134 = vmatpush1.msra.mxu0 0.0
    %2135 = vmatprep.subr.mxu0 0.0
    %2136 = vmatpush1.msra.mxu0 0.0
    %2137 = vmatprep.subr.mxu0 0.0
    %2138 = vmatpush1.msra.mxu0 0.0
    %2139 = vmatprep.subr.mxu0 0.0
    %2140 = vmatpush1.msra.mxu0 0.0
    %2141 = vmatprep.subr.mxu0 0.0
    %2142 = vmatpush1.msra.mxu0 0.0
    %2143 = vmatprep.subr.mxu0 0.0
    %2144 = vmatpush1.msra.mxu0 0.0
    %2145 = vmatprep.subr.mxu0 0.0
    %2146 = vmatpush1.msra.mxu0 0.0
    %2147 = vmatprep.subr.mxu0 0.0
    %2148 = vmatpush1.msra.mxu0 0.0
    %2149 = vmatprep.subr.mxu0 0.0
    %2150 = vmatpush1.msra.mxu0 0.0
    %2151 = vmatprep.subr.mxu0 0.0
    %2152 = vmatpush1.msra.mxu0 0.0
    %2153 = vmatprep.subr.mxu0 0.0
    %2154 = vmatpush1.msra.mxu0 0.0
    %2155 = vmatprep.subr.mxu0 0.0
    %2156 = vmatpush1.msra.mxu0 0.0
    %2157 = vmatprep.subr.mxu0 0.0
    %2158 = vmatpush1.msra.mxu0 0.0
    %2159 = vmatprep.subr.mxu0 0.0
    %2160 = vmatpush1.msra.mxu0 0.0
    %2161 = vmatprep.subr.mxu0 0.0
    %2162 = vmatpush1.msra.mxu0 0.0
    %2163 = vmatprep.subr.mxu0 0.0
    %2164 = vmatpush1.msra.mxu0 0.0
    %2165 = vmatprep.subr.mxu0 0.0
    %2166 = vmatpush1.msra.mxu0 0.0
    %2167 = vmatprep.subr.mxu0 0.0
    %2168 = vmatpush1.msra.mxu0 0.0
    %2169 = vmatprep.mubr.f32.mxu0 0.0
    %2170 = vmatmul.mubr.f32.gmra.mrb[0].mxu0 %v2103
    %v2171 = vpop.f32.mrb[0].mxu0
    %v2172 = vadd.f32 %v1002, %v2171
    %v2173 = vpop.f32.mrb[0].mxu0
    %2174 = vdwg.mxu0
    %s2175 = scalar_lea.vmem [#allocation5], 40
    %2176 = vst [vmem:[%s2175] sm:$0xff] %v2172
    %2177 = vmax.xlane.f32.xlu0 %v2172
    %v2178 = vpop.xlane.xlu0 %2177
    %vm2179 = vcmp.ge.f32.partialorder %v2172, %v2178
    %v2180 = vsel %vm2179, %v58, 128.0
    %2181 = vmin.xlane.f32.xlu0 %v2180
    %v2182 = vpop.xlane.xlu0 %2181
    %vm2183 = vcmp.eq.f32.partialorder %v58, %v2182
    %v2184 = vsel %vm2183, 1, 0
    %v2185 = vcvt.s32.f32 %v2184
    %v2186 = vld [vmem:[%s6] sm:$0xff]
    %v2187 = vld [vmem:[%s6 + $0x8] sm:$0xff]
    %v2188 = vld [vmem:[%s6 + $0x10] sm:$0xff]
    %v2189 = vld [vmem:[%s6 + $0x18] sm:$0xff]
    %v2191 = vsel %vm64, %v2185, 0
    %2193 = vmatprep.subr.mxu0 0.0
    %2194 = vmatpush1.msra.mxu0 %v2186
    %2195 = vmatprep.subr.mxu0 0.0
    %2196 = vmatpush1.msra.mxu0 %v2187
    %2197 = vmatprep.subr.mxu0 0.0
    %2198 = vmatpush1.msra.mxu0 %v2188
    %2199 = vmatprep.subr.mxu0 0.0
    %2200 = vmatpush1.msra.mxu0 %v2189
    %2201 = vmatprep.subr.mxu0 0.0
    %2202 = vmatpush1.msra.mxu0 0.0
    %2203 = vmatprep.subr.mxu0 0.0
    %2204 = vmatpush1.msra.mxu0 0.0
    %2205 = vmatprep.subr.mxu0 0.0
    %2206 = vmatpush1.msra.mxu0 0.0
    %2207 = vmatprep.subr.mxu0 0.0
    %2208 = vmatpush1.msra.mxu0 0.0
    %2209 = vmatprep.subr.mxu0 0.0
    %2210 = vmatpush1.msra.mxu0 0.0
    %2211 = vmatprep.subr.mxu0 0.0
    %2212 = vmatpush1.msra.mxu0 0.0
    %2213 = vmatprep.subr.mxu0 0.0
    %2214 = vmatpush1.msra.mxu0 0.0
    %2215 = vmatprep.subr.mxu0 0.0
    %2216 = vmatpush1.msra.mxu0 0.0
    %2217 = vmatprep.subr.mxu0 0.0
    %2218 = vmatpush1.msra.mxu0 0.0
    %2219 = vmatprep.subr.mxu0 0.0
    %2220 = vmatpush1.msra.mxu0 0.0
    %2221 = vmatprep.subr.mxu0 0.0
    %2222 = vmatpush1.msra.mxu0 0.0
    %2223 = vmatprep.subr.mxu0 0.0
    %2224 = vmatpush1.msra.mxu0 0.0
    %2225 = vmatprep.subr.mxu0 0.0
    %2226 = vmatpush1.msra.mxu0 0.0
    %2227 = vmatprep.subr.mxu0 0.0
    %2228 = vmatpush1.msra.mxu0 0.0
    %2229 = vmatprep.subr.mxu0 0.0
    %2230 = vmatpush1.msra.mxu0 0.0
    %2231 = vmatprep.subr.mxu0 0.0
    %2232 = vmatpush1.msra.mxu0 0.0
    %2233 = vmatprep.subr.mxu0 0.0
    %2234 = vmatpush1.msra.mxu0 0.0
    %2235 = vmatprep.subr.mxu0 0.0
    %2236 = vmatpush1.msra.mxu0 0.0
    %2237 = vmatprep.subr.mxu0 0.0
    %2238 = vmatpush1.msra.mxu0 0.0
    %2239 = vmatprep.subr.mxu0 0.0
    %2240 = vmatpush1.msra.mxu0 0.0
    %2241 = vmatprep.subr.mxu0 0.0
    %2242 = vmatpush1.msra.mxu0 0.0
    %2243 = vmatprep.subr.mxu0 0.0
    %2244 = vmatpush1.msra.mxu0 0.0
    %2245 = vmatprep.subr.mxu0 0.0
    %2246 = vmatpush1.msra.mxu0 0.0
    %2247 = vmatprep.subr.mxu0 0.0
    %2248 = vmatpush1.msra.mxu0 0.0
    %2249 = vmatprep.subr.mxu0 0.0
    %2250 = vmatpush1.msra.mxu0 0.0
    %2251 = vmatprep.subr.mxu0 0.0
    %2252 = vmatpush1.msra.mxu0 0.0
    %2253 = vmatprep.subr.mxu0 0.0
    %2254 = vmatpush1.msra.mxu0 0.0
    %2255 = vmatprep.subr.mxu0 0.0
    %2256 = vmatpush1.msra.mxu0 0.0
    %2257 = vmatprep.mubr.f32.mxu0 0.0
    %2258 = vmatmul.mubr.f32.gmra.mrb[0].mxu0 %v2191
    %v2259 = vpop.f32.mrb[0].mxu0
    %v2260 = vadd.f32 0.0, %v2259
    %v2261 = vpop.f32.mrb[0].mxu0
    %2262 = vdwg.mxu0
    %s2263 = sld [smem:[#allocation2 + $0x5]]
    %s2264 = scvt.s32.f32 %s2263
    %s2265 = scalar_lea.vmem %s2, 40
    %v2266 = vld [vmem:[%s2265] sm:$0xff]
    %v2267 = vstv %s2264
    %v2268 = vmul.f32 %v2267, %v2266
    %s2269 = ssub.f32 1.0, %s2264
    %v2270 = vstv %s2269
    %v2271 = vmul.f32 %v2270, %v2260
    %v2272 = vadd.f32 %v2268, %v2271
    %v2273 = vld [vmem:[%s4] sm:$0xff]
    %v2274 = vld [vmem:[%s4 + $0x8] sm:$0xff]
    %v2275 = vld [vmem:[%s4 + $0x10] sm:$0xff]
    %v2276 = vld [vmem:[%s4 + $0x18] sm:$0xff]
    %2277 = vmatprep.subr.mxu0 0.0
    %2278 = vmatpush1.msra.mxu0 %v2273
    %2279 = vmatprep.subr.mxu0 0.0
    %2280 = vmatpush1.msra.mxu0 %v2274
    %2281 = vmatprep.subr.mxu0 0.0
    %2282 = vmatpush1.msra.mxu0 %v2275
    %2283 = vmatprep.subr.mxu0 0.0
    %2284 = vmatpush1.msra.mxu0 %v2276
    %2285 = vmatprep.subr.mxu0 0.0
    %2286 = vmatpush1.msra.mxu0 0.0
    %2287 = vmatprep.subr.mxu0 0.0
    %2288 = vmatpush1.msra.mxu0 0.0
    %2289 = vmatprep.subr.mxu0 0.0
    %2290 = vmatpush1.msra.mxu0 0.0
    %2291 = vmatprep.subr.mxu0 0.0
    %2292 = vmatpush1.msra.mxu0 0.0
    %2293 = vmatprep.subr.mxu0 0.0
    %2294 = vmatpush1.msra.mxu0 0.0
    %2295 = vmatprep.subr.mxu0 0.0
    %2296 = vmatpush1.msra.mxu0 0.0
    %2297 = vmatprep.subr.mxu0 0.0
    %2298 = vmatpush1.msra.mxu0 0.0
    %2299 = vmatprep.subr.mxu0 0.0
    %2300 = vmatpush1.msra.mxu0 0.0
    %2301 = vmatprep.subr.mxu0 0.0
    %2302 = vmatpush1.msra.mxu0 0.0
    %2303 = vmatprep.subr.mxu0 0.0
    %2304 = vmatpush1.msra.mxu0 0.0
    %2305 = vmatprep.subr.mxu0 0.0
    %2306 = vmatpush1.msra.mxu0 0.0
    %2307 = vmatprep.subr.mxu0 0.0
    %2308 = vmatpush1.msra.mxu0 0.0
    %2309 = vmatprep.subr.mxu0 0.0
    %2310 = vmatpush1.msra.mxu0 0.0
    %2311 = vmatprep.subr.mxu0 0.0
    %2312 = vmatpush1.msra.mxu0 0.0
    %2313 = vmatprep.subr.mxu0 0.0
    %2314 = vmatpush1.msra.mxu0 0.0
    %2315 = vmatprep.subr.mxu0 0.0
    %2316 = vmatpush1.msra.mxu0 0.0
    %2317 = vmatprep.subr.mxu0 0.0
    %2318 = vmatpush1.msra.mxu0 0.0
    %2319 = vmatprep.subr.mxu0 0.0
    %2320 = vmatpush1.msra.mxu0 0.0
    %2321 = vmatprep.subr.mxu0 0.0
    %2322 = vmatpush1.msra.mxu0 0.0
    %2323 = vmatprep.subr.mxu0 0.0
    %2324 = vmatpush1.msra.mxu0 0.0
    %2325 = vmatprep.subr.mxu0 0.0
    %2326 = vmatpush1.msra.mxu0 0.0
    %2327 = vmatprep.subr.mxu0 0.0
    %2328 = vmatpush1.msra.mxu0 0.0
    %2329 = vmatprep.subr.mxu0 0.0
    %2330 = vmatpush1.msra.mxu0 0.0
    %2331 = vmatprep.subr.mxu0 0.0
    %2332 = vmatpush1.msra.mxu0 0.0
    %2333 = vmatprep.subr.mxu0 0.0
    %2334 = vmatpush1.msra.mxu0 0.0
    %2335 = vmatprep.subr.mxu0 0.0
    %2336 = vmatpush1.msra.mxu0 0.0
    %2337 = vmatprep.subr.mxu0 0.0
    %2338 = vmatpush1.msra.mxu0 0.0
    %2339 = vmatprep.subr.mxu0 0.0
    %2340 = vmatpush1.msra.mxu0 0.0
    %2341 = vmatprep.mubr.f32.mxu0 0.0
    %2342 = vmatmul.mubr.f32.gmra.mrb[0].mxu0 %v2103
    %v2343 = vpop.f32.mrb[0].mxu0
    %v2344 = vadd.f32 0.0, %v2343
    %v2345 = vpop.f32.mrb[0].mxu0
    %2346 = vdwg.mxu0
    %v2347 = vadd.f32 %v2272, %v2344
    %v2348 = vadd.f32 %v2347, %v970
    %v2349 = vxor.u32 %v2348, 2147483648
    %v2350 = vmul.f32 %v2349, 1.442695
    %v2351 = vpow.pop %v2350
    %v2352 = vadd.f32 %v2351, 1.0
    %v2353 = vrcp.pop %v2352
    %v2354 = vmul.f32 1.0, %v2353
    %v2355 = vtanh.pop %v2348
    %v2356 = vsel %vm57, %v2355, %v2354
    %v2357 = vmul.f32 %v2356, %v2093
    %2359 = vrot.lane.b32.xlu0 %v2356, 64
    %v2360 = vpop.permute.xlu0 %2359
    %v2362 = vmul.f32 %v2356, %v2360
    %2364 = vrot.lane.b32.xlu0 %v2362, 32
    %v2365 = vpop.permute.xlu0 %2364
    %v2367 = vadd.f32 %v2357, %v2365
    %v2368 = vtanh.pop %v2367
    %2370 = vrot.lane.b32.xlu0 %v2368, 64
    %v2371 = vpop.permute.xlu0 %2370
    %v2373 = vmul.f32 %v2356, %v2371
    %2375 = vrot.lane.b32.xlu0 %v2373, 32
    %v2376 = vpop.permute.xlu0 %2375
    %v2377 = vsel %vm64, %v2376, 0
    %2379 = vmatprep.subr.mxu0 0.0
    %2380 = vmatpush1.msra.mxu0 %v48
    %2381 = vmatprep.subr.mxu0 0.0
    %2382 = vmatpush1.msra.mxu0 %v49
    %2383 = vmatprep.subr.mxu0 0.0
    %2384 = vmatpush1.msra.mxu0 %v50
    %2385 = vmatprep.subr.mxu0 0.0
    %2386 = vmatpush1.msra.mxu0 %v51
    %2387 = vmatprep.subr.mxu0 0.0
    %2388 = vmatpush1.msra.mxu0 0.0
    %2389 = vmatprep.subr.mxu0 0.0
    %2390 = vmatpush1.msra.mxu0 0.0
    %2391 = vmatprep.subr.mxu0 0.0
    %2392 = vmatpush1.msra.mxu0 0.0
    %2393 = vmatprep.subr.mxu0 0.0
    %2394 = vmatpush1.msra.mxu0 0.0
    %2395 = vmatprep.subr.mxu0 0.0
    %2396 = vmatpush1.msra.mxu0 0.0
    %2397 = vmatprep.subr.mxu0 0.0
    %2398 = vmatpush1.msra.mxu0 0.0
    %2399 = vmatprep.subr.mxu0 0.0
    %2400 = vmatpush1.msra.mxu0 0.0
    %2401 = vmatprep.subr.mxu0 0.0
    %2402 = vmatpush1.msra.mxu0 0.0
    %2403 = vmatprep.subr.mxu0 0.0
    %2404 = vmatpush1.msra.mxu0 0.0
    %2405 = vmatprep.subr.mxu0 0.0
    %2406 = vmatpush1.msra.mxu0 0.0
    %2407 = vmatprep.subr.mxu0 0.0
    %2408 = vmatpush1.msra.mxu0 0.0
    %2409 = vmatprep.subr.mxu0 0.0
    %2410 = vmatpush1.msra.mxu0 0.0
    %2411 = vmatprep.subr.mxu0 0.0
    %2412 = vmatpush1.msra.mxu0 0.0
    %2413 = vmatprep.subr.mxu0 0.0
    %2414 = vmatpush1.msra.mxu0 0.0
    %2415 = vmatprep.subr.mxu0 0.0
    %2416 = vmatpush1.msra.mxu0 0.0
    %2417 = vmatprep.subr.mxu0 0.0
    %2418 = vmatpush1.msra.mxu0 0.0
    %2419 = vmatprep.subr.mxu0 0.0
    %2420 = vmatpush1.msra.mxu0 0.0
    %2421 = vmatprep.subr.mxu0 0.0
    %2422 = vmatpush1.msra.mxu0 0.0
    %2423 = vmatprep.subr.mxu0 0.0
    %2424 = vmatpush1.msra.mxu0 0.0
    %2425 = vmatprep.subr.mxu0 0.0
    %2426 = vmatpush1.msra.mxu0 0.0
    %2427 = vmatprep.subr.mxu0 0.0
    %2428 = vmatpush1.msra.mxu0 0.0
    %2429 = vmatprep.subr.mxu0 0.0
    %2430 = vmatpush1.msra.mxu0 0.0
    %2431 = vmatprep.subr.mxu0 0.0
    %2432 = vmatpush1.msra.mxu0 0.0
    %2433 = vmatprep.subr.mxu0 0.0
    %2434 = vmatpush1.msra.mxu0 0.0
    %2435 = vmatprep.subr.mxu0 0.0
    %2436 = vmatpush1.msra.mxu0 0.0
    %2437 = vmatprep.subr.mxu0 0.0
    %2438 = vmatpush1.msra.mxu0 0.0
    %2439 = vmatprep.subr.mxu0 0.0
    %2440 = vmatpush1.msra.mxu0 0.0
    %2441 = vmatprep.subr.mxu0 0.0
    %2442 = vmatpush1.msra.mxu0 0.0
    %2443 = vmatprep.mubr.f32.mxu0 0.0
    %2444 = vmatmul.mubr.f32.gmra.mrb[0].mxu0 %v2377
    %v2445 = vpop.f32.mrb[0].mxu0
    %v2446 = vadd.f32 %v1002, %v2445
    %v2447 = vpop.f32.mrb[0].mxu0
    %2448 = vdwg.mxu0
    %s2449 = scalar_lea.vmem [#allocation5], 48
    %2450 = vst [vmem:[%s2449] sm:$0xff] %v2446
    %2451 = vmax.xlane.f32.xlu0 %v2446
    %v2452 = vpop.xlane.xlu0 %2451
    %vm2453 = vcmp.ge.f32.partialorder %v2446, %v2452
    %v2454 = vsel %vm2453, %v58, 128.0
    %2455 = vmin.xlane.f32.xlu0 %v2454
    %v2456 = vpop.xlane.xlu0 %2455
    %vm2457 = vcmp.eq.f32.partialorder %v58, %v2456
    %v2458 = vsel %vm2457, 1, 0
    %v2459 = vcvt.s32.f32 %v2458
    %v2460 = vld [vmem:[%s6] sm:$0xff]
    %v2461 = vld [vmem:[%s6 + $0x8] sm:$0xff]
    %v2462 = vld [vmem:[%s6 + $0x10] sm:$0xff]
    %v2463 = vld [vmem:[%s6 + $0x18] sm:$0xff]
    %v2465 = vsel %vm64, %v2459, 0
    %2467 = vmatprep.subr.mxu0 0.0
    %2468 = vmatpush1.msra.mxu0 %v2460
    %2469 = vmatprep.subr.mxu0 0.0
    %2470 = vmatpush1.msra.mxu0 %v2461
    %2471 = vmatprep.subr.mxu0 0.0
    %2472 = vmatpush1.msra.mxu0 %v2462
    %2473 = vmatprep.subr.mxu0 0.0
    %2474 = vmatpush1.msra.mxu0 %v2463
    %2475 = vmatprep.subr.mxu0 0.0
    %2476 = vmatpush1.msra.mxu0 0.0
    %2477 = vmatprep.subr.mxu0 0.0
    %2478 = vmatpush1.msra.mxu0 0.0
    %2479 = vmatprep.subr.mxu0 0.0
    %2480 = vmatpush1.msra.mxu0 0.0
    %2481 = vmatprep.subr.mxu0 0.0
    %2482 = vmatpush1.msra.mxu0 0.0
    %2483 = vmatprep.subr.mxu0 0.0
    %2484 = vmatpush1.msra.mxu0 0.0
    %2485 = vmatprep.subr.mxu0 0.0
    %2486 = vmatpush1.msra.mxu0 0.0
    %2487 = vmatprep.subr.mxu0 0.0
    %2488 = vmatpush1.msra.mxu0 0.0
    %2489 = vmatprep.subr.mxu0 0.0
    %2490 = vmatpush1.msra.mxu0 0.0
    %2491 = vmatprep.subr.mxu0 0.0
    %2492 = vmatpush1.msra.mxu0 0.0
    %2493 = vmatprep.subr.mxu0 0.0
    %2494 = vmatpush1.msra.mxu0 0.0
    %2495 = vmatprep.subr.mxu0 0.0
    %2496 = vmatpush1.msra.mxu0 0.0
    %2497 = vmatprep.subr.mxu0 0.0
    %2498 = vmatpush1.msra.mxu0 0.0
    %2499 = vmatprep.subr.mxu0 0.0
    %2500 = vmatpush1.msra.mxu0 0.0
    %2501 = vmatprep.subr.mxu0 0.0
    %2502 = vmatpush1.msra.mxu0 0.0
    %2503 = vmatprep.subr.mxu0 0.0
    %2504 = vmatpush1.msra.mxu0 0.0
    %2505 = vmatprep.subr.mxu0 0.0
    %2506 = vmatpush1.msra.mxu0 0.0
    %2507 = vmatprep.subr.mxu0 0.0
    %2508 = vmatpush1.msra.mxu0 0.0
    %2509 = vmatprep.subr.mxu0 0.0
    %2510 = vmatpush1.msra.mxu0 0.0
    %2511 = vmatprep.subr.mxu0 0.0
    %2512 = vmatpush1.msra.mxu0 0.0
    %2513 = vmatprep.subr.mxu0 0.0
    %2514 = vmatpush1.msra.mxu0 0.0
    %2515 = vmatprep.subr.mxu0 0.0
    %2516 = vmatpush1.msra.mxu0 0.0
    %2517 = vmatprep.subr.mxu0 0.0
    %2518 = vmatpush1.msra.mxu0 0.0
    %2519 = vmatprep.subr.mxu0 0.0
    %2520 = vmatpush1.msra.mxu0 0.0
    %2521 = vmatprep.subr.mxu0 0.0
    %2522 = vmatpush1.msra.mxu0 0.0
    %2523 = vmatprep.subr.mxu0 0.0
    %2524 = vmatpush1.msra.mxu0 0.0
    %2525 = vmatprep.subr.mxu0 0.0
    %2526 = vmatpush1.msra.mxu0 0.0
    %2527 = vmatprep.subr.mxu0 0.0
    %2528 = vmatpush1.msra.mxu0 0.0
    %2529 = vmatprep.subr.mxu0 0.0
    %2530 = vmatpush1.msra.mxu0 0.0
    %2531 = vmatprep.mubr.f32.mxu0 0.0
    %2532 = vmatmul.mubr.f32.gmra.mrb[0].mxu0 %v2465
    %v2533 = vpop.f32.mrb[0].mxu0
    %v2534 = vadd.f32 0.0, %v2533
    %v2535 = vpop.f32.mrb[0].mxu0
    %2536 = vdwg.mxu0
    %s2537 = sld [smem:[#allocation2 + $0x6]]
    %s2538 = scvt.s32.f32 %s2537
    %s2539 = scalar_lea.vmem %s2, 48
    %v2540 = vld [vmem:[%s2539] sm:$0xff]
    %v2541 = vstv %s2538
    %v2542 = vmul.f32 %v2541, %v2540
    %s2543 = ssub.f32 1.0, %s2538
    %v2544 = vstv %s2543
    %v2545 = vmul.f32 %v2544, %v2534
    %v2546 = vadd.f32 %v2542, %v2545
    %v2547 = vld [vmem:[%s4] sm:$0xff]
    %v2548 = vld [vmem:[%s4 + $0x8] sm:$0xff]
    %v2549 = vld [vmem:[%s4 + $0x10] sm:$0xff]
    %v2550 = vld [vmem:[%s4 + $0x18] sm:$0xff]
    %2551 = vmatprep.subr.mxu0 0.0
    %2552 = vmatpush1.msra.mxu0 %v2547
    %2553 = vmatprep.subr.mxu0 0.0
    %2554 = vmatpush1.msra.mxu0 %v2548
    %2555 = vmatprep.subr.mxu0 0.0
    %2556 = vmatpush1.msra.mxu0 %v2549
    %2557 = vmatprep.subr.mxu0 0.0
    %2558 = vmatpush1.msra.mxu0 %v2550
    %2559 = vmatprep.subr.mxu0 0.0
    %2560 = vmatpush1.msra.mxu0 0.0
    %2561 = vmatprep.subr.mxu0 0.0
    %2562 = vmatpush1.msra.mxu0 0.0
    %2563 = vmatprep.subr.mxu0 0.0
    %2564 = vmatpush1.msra.mxu0 0.0
    %2565 = vmatprep.subr.mxu0 0.0
    %2566 = vmatpush1.msra.mxu0 0.0
    %2567 = vmatprep.subr.mxu0 0.0
    %2568 = vmatpush1.msra.mxu0 0.0
    %2569 = vmatprep.subr.mxu0 0.0
    %2570 = vmatpush1.msra.mxu0 0.0
    %2571 = vmatprep.subr.mxu0 0.0
    %2572 = vmatpush1.msra.mxu0 0.0
    %2573 = vmatprep.subr.mxu0 0.0
    %2574 = vmatpush1.msra.mxu0 0.0
    %2575 = vmatprep.subr.mxu0 0.0
    %2576 = vmatpush1.msra.mxu0 0.0
    %2577 = vmatprep.subr.mxu0 0.0
    %2578 = vmatpush1.msra.mxu0 0.0
    %2579 = vmatprep.subr.mxu0 0.0
    %2580 = vmatpush1.msra.mxu0 0.0
    %2581 = vmatprep.subr.mxu0 0.0
    %2582 = vmatpush1.msra.mxu0 0.0
    %2583 = vmatprep.subr.mxu0 0.0
    %2584 = vmatpush1.msra.mxu0 0.0
    %2585 = vmatprep.subr.mxu0 0.0
    %2586 = vmatpush1.msra.mxu0 0.0
    %2587 = vmatprep.subr.mxu0 0.0
    %2588 = vmatpush1.msra.mxu0 0.0
    %2589 = vmatprep.subr.mxu0 0.0
    %2590 = vmatpush1.msra.mxu0 0.0
    %2591 = vmatprep.subr.mxu0 0.0
    %2592 = vmatpush1.msra.mxu0 0.0
    %2593 = vmatprep.subr.mxu0 0.0
    %2594 = vmatpush1.msra.mxu0 0.0
    %2595 = vmatprep.subr.mxu0 0.0
    %2596 = vmatpush1.msra.mxu0 0.0
    %2597 = vmatprep.subr.mxu0 0.0
    %2598 = vmatpush1.msra.mxu0 0.0
    %2599 = vmatprep.subr.mxu0 0.0
    %2600 = vmatpush1.msra.mxu0 0.0
    %2601 = vmatprep.subr.mxu0 0.0
    %2602 = vmatpush1.msra.mxu0 0.0
    %2603 = vmatprep.subr.mxu0 0.0
    %2604 = vmatpush1.msra.mxu0 0.0
    %2605 = vmatprep.subr.mxu0 0.0
    %2606 = vmatpush1.msra.mxu0 0.0
    %2607 = vmatprep.subr.mxu0 0.0
    %2608 = vmatpush1.msra.mxu0 0.0
    %2609 = vmatprep.subr.mxu0 0.0
    %2610 = vmatpush1.msra.mxu0 0.0
    %2611 = vmatprep.subr.mxu0 0.0
    %2612 = vmatpush1.msra.mxu0 0.0
    %2613 = vmatprep.subr.mxu0 0.0
    %2614 = vmatpush1.msra.mxu0 0.0
    %2615 = vmatprep.mubr.f32.mxu0 0.0
    %2616 = vmatmul.mubr.f32.gmra.mrb[0].mxu0 %v2377
    %v2617 = vpop.f32.mrb[0].mxu0
    %v2618 = vadd.f32 0.0, %v2617
    %v2619 = vpop.f32.mrb[0].mxu0
    %2620 = vdwg.mxu0
    %v2621 = vadd.f32 %v2546, %v2618
    %v2622 = vadd.f32 %v2621, %v970
    %v2623 = vxor.u32 %v2622, 2147483648
    %v2624 = vmul.f32 %v2623, 1.442695
    %v2625 = vpow.pop %v2624
    %v2626 = vadd.f32 %v2625, 1.0
    %v2627 = vrcp.pop %v2626
    %v2628 = vmul.f32 1.0, %v2627
    %v2629 = vtanh.pop %v2622
    %v2630 = vsel %vm57, %v2629, %v2628
    %v2631 = vmul.f32 %v2630, %v2367
    %2633 = vrot.lane.b32.xlu0 %v2630, 64
    %v2634 = vpop.permute.xlu0 %2633
    %v2636 = vmul.f32 %v2630, %v2634
    %2638 = vrot.lane.b32.xlu0 %v2636, 32
    %v2639 = vpop.permute.xlu0 %2638
    %v2641 = vadd.f32 %v2631, %v2639
    %v2642 = vtanh.pop %v2641
    %2644 = vrot.lane.b32.xlu0 %v2642, 64
    %v2645 = vpop.permute.xlu0 %2644
    %v2647 = vmul.f32 %v2630, %v2645
    %2649 = vrot.lane.b32.xlu0 %v2647, 32
    %v2650 = vpop.permute.xlu0 %2649
    %v2651 = vsel %vm64, %v2650, 0
    %2653 = vmatprep.subr.mxu0 0.0
    %2654 = vmatpush1.msra.mxu0 %v48
    %2655 = vmatprep.subr.mxu0 0.0
    %2656 = vmatpush1.msra.mxu0 %v49
    %2657 = vmatprep.subr.mxu0 0.0
    %2658 = vmatpush1.msra.mxu0 %v50
    %2659 = vmatprep.subr.mxu0 0.0
    %2660 = vmatpush1.msra.mxu0 %v51
    %2661 = vmatprep.subr.mxu0 0.0
    %2662 = vmatpush1.msra.mxu0 0.0
    %2663 = vmatprep.subr.mxu0 0.0
    %2664 = vmatpush1.msra.mxu0 0.0
    %2665 = vmatprep.subr.mxu0 0.0
    %2666 = vmatpush1.msra.mxu0 0.0
    %2667 = vmatprep.subr.mxu0 0.0
    %2668 = vmatpush1.msra.mxu0 0.0
    %2669 = vmatprep.subr.mxu0 0.0
    %2670 = vmatpush1.msra.mxu0 0.0
    %2671 = vmatprep.subr.mxu0 0.0
    %2672 = vmatpush1.msra.mxu0 0.0
    %2673 = vmatprep.subr.mxu0 0.0
    %2674 = vmatpush1.msra.mxu0 0.0
    %2675 = vmatprep.subr.mxu0 0.0
    %2676 = vmatpush1.msra.mxu0 0.0
    %2677 = vmatprep.subr.mxu0 0.0
    %2678 = vmatpush1.msra.mxu0 0.0
    %2679 = vmatprep.subr.mxu0 0.0
    %2680 = vmatpush1.msra.mxu0 0.0
    %2681 = vmatprep.subr.mxu0 0.0
    %2682 = vmatpush1.msra.mxu0 0.0
    %2683 = vmatprep.subr.mxu0 0.0
    %2684 = vmatpush1.msra.mxu0 0.0
    %2685 = vmatprep.subr.mxu0 0.0
    %2686 = vmatpush1.msra.mxu0 0.0
    %2687 = vmatprep.subr.mxu0 0.0
    %2688 = vmatpush1.msra.mxu0 0.0
    %2689 = vmatprep.subr.mxu0 0.0
    %2690 = vmatpush1.msra.mxu0 0.0
    %2691 = vmatprep.subr.mxu0 0.0
    %2692 = vmatpush1.msra.mxu0 0.0
    %2693 = vmatprep.subr.mxu0 0.0
    %2694 = vmatpush1.msra.mxu0 0.0
    %2695 = vmatprep.subr.mxu0 0.0
    %2696 = vmatpush1.msra.mxu0 0.0
    %2697 = vmatprep.subr.mxu0 0.0
    %2698 = vmatpush1.msra.mxu0 0.0
    %2699 = vmatprep.subr.mxu0 0.0
    %2700 = vmatpush1.msra.mxu0 0.0
    %2701 = vmatprep.subr.mxu0 0.0
    %2702 = vmatpush1.msra.mxu0 0.0
    %2703 = vmatprep.subr.mxu0 0.0
    %2704 = vmatpush1.msra.mxu0 0.0
    %2705 = vmatprep.subr.mxu0 0.0
    %2706 = vmatpush1.msra.mxu0 0.0
    %2707 = vmatprep.subr.mxu0 0.0
    %2708 = vmatpush1.msra.mxu0 0.0
    %2709 = vmatprep.subr.mxu0 0.0
    %2710 = vmatpush1.msra.mxu0 0.0
    %2711 = vmatprep.subr.mxu0 0.0
    %2712 = vmatpush1.msra.mxu0 0.0
    %2713 = vmatprep.subr.mxu0 0.0
    %2714 = vmatpush1.msra.mxu0 0.0
    %2715 = vmatprep.subr.mxu0 0.0
    %2716 = vmatpush1.msra.mxu0 0.0
    %2717 = vmatprep.mubr.f32.mxu0 0.0
    %2718 = vmatmul.mubr.f32.gmra.mrb[0].mxu0 %v2651
    %v2719 = vpop.f32.mrb[0].mxu0
    %v2720 = vadd.f32 %v1002, %v2719
    %v2721 = vpop.f32.mrb[0].mxu0
    %2722 = vdwg.mxu0
    %s2723 = scalar_lea.vmem [#allocation5], 56
    %2724 = vst [vmem:[%s2723] sm:$0xff] %v2720
    // Predicated region
    $region42: #{_seq2seq_forward.1} parent=1 // pred_check
      _
    $region43: #{_seq2seq_forward.1} parent=1 // pred_check_branch
      %2726 = sbr.rel (0) target = $region45
    $region44: #{_seq2seq_forward.1} parent=1 // pred_region
      %s2728 = ssub.s32 1024, 1024
      %2729 = vsyncadd [#allocation3], %s2728
      %s2730 = sshll.u32 [#allocation5], 4
      %s2731 = int_to_ptr.vmem [resolvable:$true] %s2730
      %2736 = dma.vmem_to_hbm [thread:$0]  %s2731, 1024, %s9, [#allocation3], 128, 128, 8
    $region45: #{_seq2seq_forward.1} parent=1 // pred_fallthru
      _
    // Predicated region
    $region46: #{_seq2seq_forward.1} parent=1 // pred_check
      _
    $region47: #{_seq2seq_forward.1} parent=1 // pred_check_branch
      %2738 = sbr.rel (0) target = $region49
    $region48: #{_seq2seq_forward.1} parent=1 // pred_region
      %2739 = dma.done [#allocation3], 1024
    $region49: #{_seq2seq_forward.1} parent=1 // pred_fallthru
      _
    %2740 = vsyncpa [#allocation3], 1
    %2741 = vsyncpa [#allocation4], 1

</llo_original>
